<compile_context>
chip_gen: v7x
topology: tpu7x:2x2x1
jax: 0.10.0
libtpu: 0.0.40
codegen_flags: <defaults>
</compile_context>

<pallas_src>
import functools

import jax
import jax.numpy as jnp
from jax.experimental import pallas as pl
from jax.experimental.pallas import tpu as pltpu


_PARALLEL = pltpu.CompilerParams(dimension_semantics=("parallel",))
_EPS = 1e-5
_WEIGHT_DTYPE = jnp.bfloat16


def _mxu_dot(a, w):
    """Lane-dense matmul: cast the activation to the (bf16) weight dtype, f32 acc."""
    return jnp.dot(a.astype(w.dtype), w, preferred_element_type=jnp.float32)


# ----------------------------- fused Pallas kernel -----------------------------

def _stgcn_kernel(x_ref, *refs, kt, dilation, num_blocks, ko, n, bb, eps):
    """Full STGCN forward for a chunk of `bb` batch elements, VMEM-resident.

    x_ref : (bb, T, N*c0)  lane-dense activations
    refs  : per block (12 refs): w1v, w1g (kt, N*ci, N*cm) block-diag value/gate,
            b1v, b1g (1, N*cm), a1 (N*ci, N*cm), wg (N*cm, N*cm), bg (1, N*cm),
            w2 (kt, N*cm, N*co), b2 (1, N*co), a2 (N*cm, N*co), ln_g, ln_b (1, N*co)
            then output layer (10 refs): w1v, w1g (ko, N*c, N*c), b1v, b1g,
            ln_g, ln_b, w2 (N*c, N*c), b2, fcw (N*c, N), fcb (1, N)
            and finally the output ref o_ref (bb, 1, N).
    """
    o_ref = refs[-1]
    w = refs[:-1]
    crop = (kt - 1) * dilation

    for bi in range(bb):                      # static unroll over the batch chunk
        x = x_ref[bi].astype(jnp.float32)     # (T, N*c0) lane-dense slab
        idx = 0
        for _ in range(num_blocks):
            (w1v, w1g, b1v, b1g, a1, wg, bg,
             w2, b2, a2, ln_g, ln_b) = w[idx:idx + 12]
            idx += 12
            t_in = x.shape[0]
            t1 = t_in - crop
            t2 = t1 - crop

            # --- temporal conv 1 (GLU): kt time-shifted lane-dense dots; separate
            #     value/gate weights so no lane-offset slicing of the conv output ---
            hv = b1v[...]
            hg = b1g[...]
            for k in range(kt):
                xs = x[k * dilation: k * dilation + t1]
                hv = hv + _mxu_dot(xs, w1v[k])
                hg = hg + _mxu_dot(xs, w1g[k])
            res = _mxu_dot(x[crop:], a1[...])          # residual channel align
            y = (hv + res) * jax.nn.sigmoid(hg)        # (t1, N*c_mid)

            # --- Chebyshev graph conv: orders*theta pre-folded -> one matmul ---
            s = _mxu_dot(y, wg[...])
            y = jnp.maximum(s + bg[...] + y, 0.0)      # relu + residual

            # --- temporal conv 2 (relu) ---
            h2 = b2[...]
            for k in range(kt):
                h2 = h2 + _mxu_dot(y[k * dilation: k * dilation + t2], w2[k])
            res2 = _mxu_dot(y[crop:], a2[...])
            z = jnp.maximum(h2 + res2, 0.0)            # (t2, N*c_out)

            # --- LayerNorm over (N, C) == the lane axis of the dense slab ---
            m = jnp.mean(z, axis=-1, keepdims=True)
            msq = jnp.mean(z * z, axis=-1, keepdims=True)
            x = (z - m) * jax.lax.rsqrt(msq - m * m + eps) * ln_g[...] + ln_b[...]
            # TODO(synk): nn.Dropout(keep_prob) treated as identity (inference mode).

        # ----------------------------- output layer -----------------------------
        (w1v, w1g, b1v, b1g, ln_g, ln_b, w2, b2, fcw, fcb) = w[idx:idx + 10]

        # temporal conv over all ko steps + GLU -> a single output time step
        hv = b1v[...]
        hg = b1g[...]
        for k in range(ko):
            xs = x[k:k + 1]
            hv = hv + _mxu_dot(xs, w1v[k])
            hg = hg + _mxu_dot(xs, w1g[k])
        y = (hv + x[ko - 1:ko]) * jax.nn.sigmoid(hg)   # (1, N*c)

        # LayerNorm over (N, C)
        m = jnp.mean(y, axis=-1, keepdims=True)
        msq = jnp.mean(y * y, axis=-1, keepdims=True)
        y = (y - m) * jax.lax.rsqrt(msq - m * m + eps) * ln_g[...] + ln_b[...]

        # temporal conv, kernel 1, sigmoid (with residual)
        h2 = _mxu_dot(y, w2[...]) + b2[...]
        y = jax.nn.sigmoid(h2 + y)                     # (1, N*c)

        # final 1x1 conv c -> 1, expressed as a lane-dense (N*c, N) matmul
        out = _mxu_dot(y, fcw[...]) + fcb[...]         # (1, N)
        o_ref[bi, :, :] = out.astype(o_ref.dtype)


# ----------------------------- pallas_call wrapper -----------------------------

def _bcast_spec(arr):
    """Full-array block, same block for every grid step (weights/bias)."""
    zeros = (0,) * arr.ndim
    return pl.BlockSpec(arr.shape, lambda i, _z=zeros: _z)


def _flatten_weights(kparams):
    ws = []
    for bp in kparams["blocks"]:
        ws += [bp["w1v"], bp["w1g"], bp["b1v"], bp["b1g"], bp["a1"],
               bp["wg"], bp["bg"], bp["w2"], bp["b2"], bp["a2"],
               bp["ln_g"], bp["ln_b"]]
    op = kparams["out"]
    ws += [op["w1v"], op["w1g"], op["b1v"], op["b1g"], op["ln_g"], op["ln_b"],
           op["w2"], op["b2"], op["fc_w"], op["fc_b"]]
    return ws


def stgcn_forward(x_nchw, kparams, *, kt, dilation):
    b, c0, t, n = x_nchw.shape
    # NCHW [B, C, T, N] -> lane-dense [B, T, N*C] (node-major lanes)
    x = jnp.transpose(x_nchw, (0, 2, 3, 1)).reshape(b, t, n * c0)
    weights = _flatten_weights(kparams)
    num_blocks = len(kparams["blocks"])
    ko = kparams["ko"]

    # Batch chunking: keep >= 2 grid steps when possible (v7x has 2 TensorCores),
    # fold the rest of the batch into one step (fewer serial steps on v5e/v6e).
    bb = b // 2 if (b >= 2 and b % 2 == 0) else 1
    grid = (b // bb,)

    kern = functools.partial(_stgcn_kernel, kt=kt, dilation=dilation,
                             num_blocks=num_blocks, ko=ko, n=n, bb=bb, eps=_EPS)
    y = pl.pallas_call(
        kern,
        out_shape=jax.ShapeDtypeStruct((b, 1, n), x.dtype),
        grid=grid,
        in_specs=[pl.BlockSpec((bb, t, n * c0), lambda i: (i, 0, 0))]
                 + [_bcast_spec(w) for w in weights],
        out_specs=pl.BlockSpec((bb, 1, n), lambda i: (i, 0, 0)),
        compiler_params=_PARALLEL,
    )(x, *weights)
    return y.reshape(b, 1, 1, n)                                   # NCHW [B, 1, 1, N]


# ----------------------------- parameter preparation -----------------------------

def _block_diag(w, n):
    """(ci, co) or (k, ci, co) -> per-node block-diagonal (n*ci, n*co) [per tap]."""
    eye = jnp.eye(n, dtype=jnp.float32)
    if w.ndim == 2:
        return jnp.kron(eye, w.astype(jnp.float32))
    return jnp.stack([jnp.kron(eye, w[k].astype(jnp.float32))
                      for k in range(w.shape[0])], axis=0)


def prepare_kernel_params(params, graph_kernel, *, n, weight_dtype=_WEIGHT_DTYPE):
    """Fold raw STGCN params into fused lane-dense layouts:
    per-tap block-diagonal temporal weights (value/gate split), Chebyshev kernels
    folded with theta into one (N*C, N*C) matrix, biases tiled to N*C lanes,
    align biases folded into conv biases, LN affine flattened node-major."""
    def bd(w):
        return _block_diag(w, n).astype(weight_dtype)

    def tile_b(b):
        return jnp.tile(b.astype(jnp.float32), (1, n))

    kblocks = []
    for bp in params["blocks"]:
        kt, c_in, two_c_mid = bp["tconv1_w"].shape
        c_mid = two_c_mid // 2
        c_out = bp["tconv2_w"].shape[2]

        b1v = bp["tconv1_b"][:, :c_mid]
        if "align1_b" in bp:
            b1v = b1v + bp["align1_b"]
        b1g = bp["tconv1_b"][:, c_mid:]
        b2 = bp["tconv2_b"]
        if "align2_b" in bp:
            b2 = b2 + bp["align2_b"]

        a1 = bp.get("align1_w")
        a1 = jnp.eye(c_in, c_mid, dtype=jnp.float32) if a1 is None else a1
        a2 = bp.get("align2_w")
        a2 = jnp.eye(c_mid, c_out, dtype=jnp.float32) if a2 is None else a2

        # W[(m, ci), (a, o)] = sum_k lk[k, a, m] * theta[k, ci, o]
        # NOTE: (n*c_mid)^2 scaling — for large graphs keep the unfolded ks (n,n)
        # matmuls instead (v7x's 64 MiB VMEM limits this at ~half the v5e/v6e size).
        wg = jnp.einsum("knm,kio->mino", graph_kernel, bp["theta"])

        kblocks.append({
            "w1v": bd(bp["tconv1_w"][:, :, :c_mid]),
            "w1g": bd(bp["tconv1_w"][:, :, c_mid:]),
            "b1v": tile_b(b1v),
            "b1g": tile_b(b1g),
            "a1": bd(a1),
            "wg": wg.reshape(n * c_mid, n * c_mid).astype(weight_dtype),
            "bg": tile_b(bp["sconv_b"]),
            "w2": bd(bp["tconv2_w"]),
            "b2": tile_b(b2),
            "a2": bd(a2),
            "ln_g": bp["ln_g"].reshape(1, n * c_out).astype(jnp.float32),
            "ln_b": bp["ln_b"].reshape(1, n * c_out).astype(jnp.float32),
        })

    op = params["out"]
    ko, c, _ = op["tconv1_w"].shape
    kout = {
        "w1v": bd(op["tconv1_w"][:, :, :c]),
        "w1g": bd(op["tconv1_w"][:, :, c:]),
        "b1v": tile_b(op["tconv1_b"][:, :c]),
        "b1g": tile_b(op["tconv1_b"][:, c:]),
        "ln_g": op["ln_g"].reshape(1, n * c).astype(jnp.float32),
        "ln_b": op["ln_b"].reshape(1, n * c).astype(jnp.float32),
        "w2": bd(op["tconv2_w"][0]),
        "b2": tile_b(op["tconv2_b"]),
        "fc_w": jnp.kron(jnp.eye(n, dtype=jnp.float32),
                         op["fc_w"].astype(jnp.float32)).astype(weight_dtype),  # (n*c, n)
        "fc_b": jnp.tile(op["fc_b"].astype(jnp.float32), (1, n)),               # (1, n)
    }
    return {"blocks": kblocks, "out": kout, "ko": params["ko"]}


# ----------------------------- deterministic init -----------------------------

def init_params(key, *, blocks, ks, kt, n_route, n_his, dilation):
    keys = iter(jax.random.split(key, 128))

    def rnd(shape, scale=0.1):
        return jax.random.normal(next(keys), shape, jnp.float32) * scale

    params = {"blocks": []}
    ko = n_his
    for (c_in, c_mid, c_out) in blocks:
        bp = {
            "tconv1_w": rnd((kt, c_in, 2 * c_mid)),
            "tconv1_b": jnp.zeros((1, 2 * c_mid), jnp.float32),
            "theta":    rnd((ks, c_mid, c_mid)),
            "sconv_b":  jnp.zeros((1, c_mid), jnp.float32),
            "tconv2_w": rnd((kt, c_mid, c_out)),
            "tconv2_b": jnp.zeros((1, c_out), jnp.float32),
            "ln_g":     jnp.ones((n_route, c_out), jnp.float32),
            "ln_b":     jnp.zeros((n_route, c_out), jnp.float32),
        }
        if c_in > c_mid:
            bp["align1_w"] = rnd((c_in, c_mid))
            bp["align1_b"] = jnp.zeros((1, c_mid), jnp.float32)
        if c_mid > c_out:
            bp["align2_w"] = rnd((c_mid, c_out))
            bp["align2_b"] = jnp.zeros((1, c_out), jnp.float32)
        params["blocks"].append(bp)
        ko -= 2 * (kt - 1) * dilation
    if ko <= 1:
        raise ValueError(f"ERROR: kernel size ko must be larger than 1, but received {ko}")
    c = blocks[-1][-1]
    params["out"] = {
        "tconv1_w": rnd((ko, c, 2 * c)),
        "tconv1_b": jnp.zeros((1, 2 * c), jnp.float32),
        "ln_g":     jnp.ones((n_route, c), jnp.float32),
        "ln_b":     jnp.zeros((n_route, c), jnp.float32),
        "tconv2_w": rnd((1, c, c)),
        "tconv2_b": jnp.zeros((1, c), jnp.float32),
        "fc_w":     rnd((c, 1)),
        "fc_b":     jnp.zeros((1, 1), jnp.float32),
    }
    params["ko"] = ko
    return params


def build_graph_kernel(n, ks):
    """Deterministic Chebyshev graph kernel (ks, n, n) from a ring-ish graph."""
    idx = jnp.arange(n)
    a = jnp.zeros((n, n), jnp.float32)
    a = a.at[idx, (idx + 1) % n].set(1.0)
    a = a.at[(idx + 1) % n, idx].set(1.0)
    a = a.at[idx, (idx + 3) % n].set(1.0)
    a = a.at[(idx + 3) % n, idx].set(1.0)
    d_inv_sqrt = 1.0 / jnp.sqrt(jnp.sum(a, axis=1))
    l_sym = jnp.eye(n, dtype=jnp.float32) - d_inv_sqrt[:, None] * a * d_inv_sqrt[None, :]
    l_tilde = l_sym - jnp.eye(n, dtype=jnp.float32)       # spectrum in [-1, 1]
    cheb = [jnp.eye(n, dtype=jnp.float32), l_tilde]
    for _ in range(2, ks):
        cheb.append(2.0 * l_tilde @ cheb[-1] - cheb[-2])
    return jnp.stack(cheb[:ks], axis=0)


# ----------------------------- main -----------------------------

if __name__ == "__main__":
    B, C_IN, N_HIS, N_ROUTE = 2, 1, 12, 16
    KS, KT, DIL = 3, 3, 1
    BLOCKS = [[1, 8, 8], [8, 8, 8]]

    key = jax.random.PRNGKey(0)
    kp, kx = jax.random.split(key)
    raw_params = init_params(kp, blocks=BLOCKS, ks=KS, kt=KT,
                             n_route=N_ROUTE, n_his=N_HIS, dilation=DIL)
    graph_kernel = build_graph_kernel(N_ROUTE, KS)
    kparams = prepare_kernel_params(raw_params, graph_kernel, n=N_ROUTE)

    x = jax.random.normal(kx, (B, C_IN, N_HIS, N_ROUTE), jnp.float32)   # NCHW
    y = stgcn_forward(x, kparams, kt=KT, dilation=DIL)
    y = jax.block_until_ready(y)
    assert y.shape == (B, 1, 1, N_ROUTE), y.shape
    assert bool(jnp.all(jnp.isfinite(y)))
    print("KERNEL_OK")
</pallas_src>

<mosaic_0001>
module attributes {stable_mosaic.version = 11 : i64} {
  func.func @_stgcn_kernel(%arg0: i32, %arg1: memref<1x12x16xf32, #tpu.memory_space<vmem>>, %arg2: memref<3x16x128xbf16, #tpu.memory_space<vmem>>, %arg3: memref<3x16x128xbf16, #tpu.memory_space<vmem>>, %arg4: memref<1x128xf32, #tpu.memory_space<vmem>>, %arg5: memref<1x128xf32, #tpu.memory_space<vmem>>, %arg6: memref<16x128xbf16, #tpu.memory_space<vmem>>, %arg7: memref<128x128xbf16, #tpu.memory_space<vmem>>, %arg8: memref<1x128xf32, #tpu.memory_space<vmem>>, %arg9: memref<3x128x128xbf16, #tpu.memory_space<vmem>>, %arg10: memref<1x128xf32, #tpu.memory_space<vmem>>, %arg11: memref<128x128xbf16, #tpu.memory_space<vmem>>, %arg12: memref<1x128xf32, #tpu.memory_space<vmem>>, %arg13: memref<1x128xf32, #tpu.memory_space<vmem>>, %arg14: memref<3x128x128xbf16, #tpu.memory_space<vmem>>, %arg15: memref<3x128x128xbf16, #tpu.memory_space<vmem>>, %arg16: memref<1x128xf32, #tpu.memory_space<vmem>>, %arg17: memref<1x128xf32, #tpu.memory_space<vmem>>, %arg18: memref<128x128xbf16, #tpu.memory_space<vmem>>, %arg19: memref<128x128xbf16, #tpu.memory_space<vmem>>, %arg20: memref<1x128xf32, #tpu.memory_space<vmem>>, %arg21: memref<3x128x128xbf16, #tpu.memory_space<vmem>>, %arg22: memref<1x128xf32, #tpu.memory_space<vmem>>, %arg23: memref<128x128xbf16, #tpu.memory_space<vmem>>, %arg24: memref<1x128xf32, #tpu.memory_space<vmem>>, %arg25: memref<1x128xf32, #tpu.memory_space<vmem>>, %arg26: memref<4x128x128xbf16, #tpu.memory_space<vmem>>, %arg27: memref<4x128x128xbf16, #tpu.memory_space<vmem>>, %arg28: memref<1x128xf32, #tpu.memory_space<vmem>>, %arg29: memref<1x128xf32, #tpu.memory_space<vmem>>, %arg30: memref<1x128xf32, #tpu.memory_space<vmem>>, %arg31: memref<1x128xf32, #tpu.memory_space<vmem>>, %arg32: memref<128x128xbf16, #tpu.memory_space<vmem>>, %arg33: memref<1x128xf32, #tpu.memory_space<vmem>>, %arg34: memref<128x16xbf16, #tpu.memory_space<vmem>>, %arg35: memref<1x16xf32, #tpu.memory_space<vmem>>, %arg36: memref<1x1x16xf32, #tpu.memory_space<vmem>>) attributes {dimension_semantics = [#tpu.dimension_semantics<parallel>], iteration_bounds = array<i64: 2>, scalar_prefetch = 0 : i64, scratch_operands = 0 : i64, tpu.core_type = #tpu.core_type<tc>, window_params = [{transform_indices = @transform_0, window_bounds = array<i64: 1, 12, 16>}, {pipeline_mode = #tpu.pipeline_mode<synchronous>, transform_indices = @transform_1, window_bounds = array<i64: 3, 16, 128>}, {pipeline_mode = #tpu.pipeline_mode<synchronous>, transform_indices = @transform_2, window_bounds = array<i64: 3, 16, 128>}, {pipeline_mode = #tpu.pipeline_mode<synchronous>, transform_indices = @transform_3, window_bounds = array<i64: 1, 128>}, {pipeline_mode = #tpu.pipeline_mode<synchronous>, transform_indices = @transform_4, window_bounds = array<i64: 1, 128>}, {pipeline_mode = #tpu.pipeline_mode<synchronous>, transform_indices = @transform_5, window_bounds = array<i64: 16, 128>}, {pipeline_mode = #tpu.pipeline_mode<synchronous>, transform_indices = @transform_6, window_bounds = array<i64: 128, 128>}, {pipeline_mode = #tpu.pipeline_mode<synchronous>, transform_indices = @transform_7, window_bounds = array<i64: 1, 128>}, {pipeline_mode = #tpu.pipeline_mode<synchronous>, transform_indices = @transform_8, window_bounds = array<i64: 3, 128, 128>}, {pipeline_mode = #tpu.pipeline_mode<synchronous>, transform_indices = @transform_9, window_bounds = array<i64: 1, 128>}, {pipeline_mode = #tpu.pipeline_mode<synchronous>, transform_indices = @transform_10, window_bounds = array<i64: 128, 128>}, {pipeline_mode = #tpu.pipeline_mode<synchronous>, transform_indices = @transform_11, window_bounds = array<i64: 1, 128>}, {pipeline_mode = #tpu.pipeline_mode<synchronous>, transform_indices = @transform_12, window_bounds = array<i64: 1, 128>}, {pipeline_mode = #tpu.pipeline_mode<synchronous>, transform_indices = @transform_13, window_bounds = array<i64: 3, 128, 128>}, {pipeline_mode = #tpu.pipeline_mode<synchronous>, transform_indices = @transform_14, window_bounds = array<i64: 3, 128, 128>}, {pipeline_mode = #tpu.pipeline_mode<synchronous>, transform_indices = @transform_15, window_bounds = array<i64: 1, 128>}, {pipeline_mode = #tpu.pipeline_mode<synchronous>, transform_indices = @transform_16, window_bounds = array<i64: 1, 128>}, {pipeline_mode = #tpu.pipeline_mode<synchronous>, transform_indices = @transform_17, window_bounds = array<i64: 128, 128>}, {pipeline_mode = #tpu.pipeline_mode<synchronous>, transform_indices = @transform_18, window_bounds = array<i64: 128, 128>}, {pipeline_mode = #tpu.pipeline_mode<synchronous>, transform_indices = @transform_19, window_bounds = array<i64: 1, 128>}, {pipeline_mode = #tpu.pipeline_mode<synchronous>, transform_indices = @transform_20, window_bounds = array<i64: 3, 128, 128>}, {pipeline_mode = #tpu.pipeline_mode<synchronous>, transform_indices = @transform_21, window_bounds = array<i64: 1, 128>}, {pipeline_mode = #tpu.pipeline_mode<synchronous>, transform_indices = @transform_22, window_bounds = array<i64: 128, 128>}, {pipeline_mode = #tpu.pipeline_mode<synchronous>, transform_indices = @transform_23, window_bounds = array<i64: 1, 128>}, {pipeline_mode = #tpu.pipeline_mode<synchronous>, transform_indices = @transform_24, window_bounds = array<i64: 1, 128>}, {pipeline_mode = #tpu.pipeline_mode<synchronous>, transform_indices = @transform_25, window_bounds = array<i64: 4, 128, 128>}, {pipeline_mode = #tpu.pipeline_mode<synchronous>, transform_indices = @transform_26, window_bounds = array<i64: 4, 128, 128>}, {pipeline_mode = #tpu.pipeline_mode<synchronous>, transform_indices = @transform_27, window_bounds = array<i64: 1, 128>}, {pipeline_mode = #tpu.pipeline_mode<synchronous>, transform_indices = @transform_28, window_bounds = array<i64: 1, 128>}, {pipeline_mode = #tpu.pipeline_mode<synchronous>, transform_indices = @transform_29, window_bounds = array<i64: 1, 128>}, {pipeline_mode = #tpu.pipeline_mode<synchronous>, transform_indices = @transform_30, window_bounds = array<i64: 1, 128>}, {pipeline_mode = #tpu.pipeline_mode<synchronous>, transform_indices = @transform_31, window_bounds = array<i64: 128, 128>}, {pipeline_mode = #tpu.pipeline_mode<synchronous>, transform_indices = @transform_32, window_bounds = array<i64: 1, 128>}, {pipeline_mode = #tpu.pipeline_mode<synchronous>, transform_indices = @transform_33, window_bounds = array<i64: 128, 16>}, {pipeline_mode = #tpu.pipeline_mode<synchronous>, transform_indices = @transform_34, window_bounds = array<i64: 1, 16>}, {transform_indices = @transform_35, window_bounds = array<i64: 1, 1, 16>}]} {
    %c0 = arith.constant 0 : index
    %c0_0 = arith.constant 0 : index
    %c0_1 = arith.constant 0 : index
    %0 = vector.load %arg1[%c0, %c0_0, %c0_1] : memref<1x12x16xf32, #tpu.memory_space<vmem>>, vector<1x12x16xf32>
    %1 = vector.shape_cast %0 : vector<1x12x16xf32> to vector<12x16xf32>
    %c0_2 = arith.constant 0 : index
    %c0_3 = arith.constant 0 : index
    %2 = vector.load %arg4[%c0_2, %c0_3] : memref<1x128xf32, #tpu.memory_space<vmem>>, vector<1x128xf32>
    %c0_4 = arith.constant 0 : index
    %c0_5 = arith.constant 0 : index
    %3 = vector.load %arg5[%c0_4, %c0_5] : memref<1x128xf32, #tpu.memory_space<vmem>>, vector<1x128xf32>
    %4 = vector.extract_strided_slice %1 {offsets = [0, 0], sizes = [10, 16], strides = [1, 1]} : vector<12x16xf32> to vector<10x16xf32>
    %c0_6 = arith.constant 0 : index
    %c0_7 = arith.constant 0 : index
    %c0_8 = arith.constant 0 : index
    %5 = vector.load %arg2[%c0_6, %c0_7, %c0_8] : memref<3x16x128xbf16, #tpu.memory_space<vmem>>, vector<1x16x128xbf16>
    %6 = vector.shape_cast %5 : vector<1x16x128xbf16> to vector<16x128xbf16>
    %7 = arith.truncf %4 : vector<10x16xf32> to vector<10x16xbf16>
    %cst = arith.constant dense<0.000000e+00> : vector<10x128xf32>
    %8 = tpu.matmul %7, %6, %cst {dimension_numbers = #tpu.dot_dimension_numbers<[1], [0], [0], [1], [0, 0, 1, 1], [], []>} : vector<10x16xbf16>, vector<16x128xbf16>, vector<10x128xf32> -> vector<10x128xf32>
    %9 = vector.broadcast %2 : vector<1x128xf32> to vector<10x128xf32>
    %10 = arith.addf %9, %8 : vector<10x128xf32>
    %c0_9 = arith.constant 0 : index
    %c0_10 = arith.constant 0 : index
    %c0_11 = arith.constant 0 : index
    %11 = vector.load %arg3[%c0_9, %c0_10, %c0_11] : memref<3x16x128xbf16, #tpu.memory_space<vmem>>, vector<1x16x128xbf16>
    %12 = vector.shape_cast %11 : vector<1x16x128xbf16> to vector<16x128xbf16>
    %13 = arith.truncf %4 : vector<10x16xf32> to vector<10x16xbf16>
    %cst_12 = arith.constant dense<0.000000e+00> : vector<10x128xf32>
    %14 = tpu.matmul %13, %12, %cst_12 {dimension_numbers = #tpu.dot_dimension_numbers<[1], [0], [0], [1], [0, 0, 1, 1], [], []>} : vector<10x16xbf16>, vector<16x128xbf16>, vector<10x128xf32> -> vector<10x128xf32>
    %15 = vector.broadcast %3 : vector<1x128xf32> to vector<10x128xf32>
    %16 = arith.addf %15, %14 : vector<10x128xf32>
    %17 = vector.extract_strided_slice %1 {offsets = [1, 0], sizes = [10, 16], strides = [1, 1]} : vector<12x16xf32> to vector<10x16xf32>
    %c1 = arith.constant 1 : index
    %c0_13 = arith.constant 0 : index
    %c0_14 = arith.constant 0 : index
    %18 = vector.load %arg2[%c1, %c0_13, %c0_14] : memref<3x16x128xbf16, #tpu.memory_space<vmem>>, vector<1x16x128xbf16>
    %19 = vector.shape_cast %18 : vector<1x16x128xbf16> to vector<16x128xbf16>
    %20 = arith.truncf %17 : vector<10x16xf32> to vector<10x16xbf16>
    %cst_15 = arith.constant dense<0.000000e+00> : vector<10x128xf32>
    %21 = tpu.matmul %20, %19, %cst_15 {dimension_numbers = #tpu.dot_dimension_numbers<[1], [0], [0], [1], [0, 0, 1, 1], [], []>} : vector<10x16xbf16>, vector<16x128xbf16>, vector<10x128xf32> -> vector<10x128xf32>
    %22 = arith.addf %10, %21 : vector<10x128xf32>
    %c1_16 = arith.constant 1 : index
    %c0_17 = arith.constant 0 : index
    %c0_18 = arith.constant 0 : index
    %23 = vector.load %arg3[%c1_16, %c0_17, %c0_18] : memref<3x16x128xbf16, #tpu.memory_space<vmem>>, vector<1x16x128xbf16>
    %24 = vector.shape_cast %23 : vector<1x16x128xbf16> to vector<16x128xbf16>
    %25 = arith.truncf %17 : vector<10x16xf32> to vector<10x16xbf16>
    %cst_19 = arith.constant dense<0.000000e+00> : vector<10x128xf32>
    %26 = tpu.matmul %25, %24, %cst_19 {dimension_numbers = #tpu.dot_dimension_numbers<[1], [0], [0], [1], [0, 0, 1, 1], [], []>} : vector<10x16xbf16>, vector<16x128xbf16>, vector<10x128xf32> -> vector<10x128xf32>
    %27 = arith.addf %16, %26 : vector<10x128xf32>
    %28 = vector.extract_strided_slice %1 {offsets = [2, 0], sizes = [10, 16], strides = [1, 1]} : vector<12x16xf32> to vector<10x16xf32>
    %c2 = arith.constant 2 : index
    %c0_20 = arith.constant 0 : index
    %c0_21 = arith.constant 0 : index
    %29 = vector.load %arg2[%c2, %c0_20, %c0_21] : memref<3x16x128xbf16, #tpu.memory_space<vmem>>, vector<1x16x128xbf16>
    %30 = vector.shape_cast %29 : vector<1x16x128xbf16> to vector<16x128xbf16>
    %31 = arith.truncf %28 : vector<10x16xf32> to vector<10x16xbf16>
    %cst_22 = arith.constant dense<0.000000e+00> : vector<10x128xf32>
    %32 = tpu.matmul %31, %30, %cst_22 {dimension_numbers = #tpu.dot_dimension_numbers<[1], [0], [0], [1], [0, 0, 1, 1], [], []>} : vector<10x16xbf16>, vector<16x128xbf16>, vector<10x128xf32> -> vector<10x128xf32>
    %33 = arith.addf %22, %32 : vector<10x128xf32>
    %c2_23 = arith.constant 2 : index
    %c0_24 = arith.constant 0 : index
    %c0_25 = arith.constant 0 : index
    %34 = vector.load %arg3[%c2_23, %c0_24, %c0_25] : memref<3x16x128xbf16, #tpu.memory_space<vmem>>, vector<1x16x128xbf16>
    %35 = vector.shape_cast %34 : vector<1x16x128xbf16> to vector<16x128xbf16>
    %36 = arith.truncf %28 : vector<10x16xf32> to vector<10x16xbf16>
    %cst_26 = arith.constant dense<0.000000e+00> : vector<10x128xf32>
    %37 = tpu.matmul %36, %35, %cst_26 {dimension_numbers = #tpu.dot_dimension_numbers<[1], [0], [0], [1], [0, 0, 1, 1], [], []>} : vector<10x16xbf16>, vector<16x128xbf16>, vector<10x128xf32> -> vector<10x128xf32>
    %38 = arith.addf %27, %37 : vector<10x128xf32>
    %39 = vector.extract_strided_slice %1 {offsets = [2, 0], sizes = [10, 16], strides = [1, 1]} : vector<12x16xf32> to vector<10x16xf32>
    %c0_27 = arith.constant 0 : index
    %c0_28 = arith.constant 0 : index
    %40 = vector.load %arg6[%c0_27, %c0_28] : memref<16x128xbf16, #tpu.memory_space<vmem>>, vector<16x128xbf16>
    %41 = arith.truncf %39 : vector<10x16xf32> to vector<10x16xbf16>
    %cst_29 = arith.constant dense<0.000000e+00> : vector<10x128xf32>
    %42 = tpu.matmul %41, %40, %cst_29 {dimension_numbers = #tpu.dot_dimension_numbers<[1], [0], [0], [1], [0, 0, 1, 1], [], []>} : vector<10x16xbf16>, vector<16x128xbf16>, vector<10x128xf32> -> vector<10x128xf32>
    %43 = arith.addf %33, %42 : vector<10x128xf32>
    %44 = arith.negf %38 : vector<10x128xf32>
    %45 = math.exp %44 : vector<10x128xf32>
    %cst_30 = arith.constant 1.000000e+00 : f32
    %46 = vector.broadcast %cst_30 : f32 to vector<10x128xf32>
    %47 = arith.addf %46, %45 : vector<10x128xf32>
    %48 = arith.divf %46, %47 : vector<10x128xf32>
    %49 = arith.mulf %43, %48 : vector<10x128xf32>
    %c0_31 = arith.constant 0 : index
    %c0_32 = arith.constant 0 : index
    %50 = vector.load %arg7[%c0_31, %c0_32] : memref<128x128xbf16, #tpu.memory_space<vmem>>, vector<128x128xbf16>
    %51 = arith.truncf %49 : vector<10x128xf32> to vector<10x128xbf16>
    %cst_33 = arith.constant dense<0.000000e+00> : vector<10x128xf32>
    %52 = tpu.matmul %51, %50, %cst_33 {dimension_numbers = #tpu.dot_dimension_numbers<[1], [0], [0], [1], [0, 0, 1, 1], [], []>} : vector<10x128xbf16>, vector<128x128xbf16>, vector<10x128xf32> -> vector<10x128xf32>
    %c0_34 = arith.constant 0 : index
    %c0_35 = arith.constant 0 : index
    %53 = vector.load %arg8[%c0_34, %c0_35] : memref<1x128xf32, #tpu.memory_space<vmem>>, vector<1x128xf32>
    %54 = vector.broadcast %53 : vector<1x128xf32> to vector<10x128xf32>
    %55 = arith.addf %52, %54 : vector<10x128xf32>
    %56 = arith.addf %55, %49 : vector<10x128xf32>
    %cst_36 = arith.constant 0.000000e+00 : f32
    %57 = vector.broadcast %cst_36 : f32 to vector<10x128xf32>
    %58 = arith.maximumf %56, %57 : vector<10x128xf32>
    %c0_37 = arith.constant 0 : index
    %c0_38 = arith.constant 0 : index
    %59 = vector.load %arg10[%c0_37, %c0_38] : memref<1x128xf32, #tpu.memory_space<vmem>>, vector<1x128xf32>
    %60 = vector.extract_strided_slice %58 {offsets = [0, 0], sizes = [8, 128], strides = [1, 1]} : vector<10x128xf32> to vector<8x128xf32>
    %c0_39 = arith.constant 0 : index
    %c0_40 = arith.constant 0 : index
    %c0_41 = arith.constant 0 : index
    %61 = vector.load %arg9[%c0_39, %c0_40, %c0_41] : memref<3x128x128xbf16, #tpu.memory_space<vmem>>, vector<1x128x128xbf16>
    %62 = vector.shape_cast %61 : vector<1x128x128xbf16> to vector<128x128xbf16>
    %63 = arith.truncf %60 : vector<8x128xf32> to vector<8x128xbf16>
    %cst_42 = arith.constant dense<0.000000e+00> : vector<8x128xf32>
    %64 = tpu.matmul %63, %62, %cst_42 {dimension_numbers = #tpu.dot_dimension_numbers<[1], [0], [0], [1], [0, 0, 1, 1], [], []>} : vector<8x128xbf16>, vector<128x128xbf16>, vector<8x128xf32> -> vector<8x128xf32>
    %65 = vector.broadcast %59 : vector<1x128xf32> to vector<8x128xf32>
    %66 = arith.addf %65, %64 : vector<8x128xf32>
    %67 = vector.extract_strided_slice %58 {offsets = [1, 0], sizes = [8, 128], strides = [1, 1]} : vector<10x128xf32> to vector<8x128xf32>
    %c1_43 = arith.constant 1 : index
    %c0_44 = arith.constant 0 : index
    %c0_45 = arith.constant 0 : index
    %68 = vector.load %arg9[%c1_43, %c0_44, %c0_45] : memref<3x128x128xbf16, #tpu.memory_space<vmem>>, vector<1x128x128xbf16>
    %69 = vector.shape_cast %68 : vector<1x128x128xbf16> to vector<128x128xbf16>
    %70 = arith.truncf %67 : vector<8x128xf32> to vector<8x128xbf16>
    %cst_46 = arith.constant dense<0.000000e+00> : vector<8x128xf32>
    %71 = tpu.matmul %70, %69, %cst_46 {dimension_numbers = #tpu.dot_dimension_numbers<[1], [0], [0], [1], [0, 0, 1, 1], [], []>} : vector<8x128xbf16>, vector<128x128xbf16>, vector<8x128xf32> -> vector<8x128xf32>
    %72 = arith.addf %66, %71 : vector<8x128xf32>
    %73 = vector.extract_strided_slice %58 {offsets = [2, 0], sizes = [8, 128], strides = [1, 1]} : vector<10x128xf32> to vector<8x128xf32>
    %c2_47 = arith.constant 2 : index
    %c0_48 = arith.constant 0 : index
    %c0_49 = arith.constant 0 : index
    %74 = vector.load %arg9[%c2_47, %c0_48, %c0_49] : memref<3x128x128xbf16, #tpu.memory_space<vmem>>, vector<1x128x128xbf16>
    %75 = vector.shape_cast %74 : vector<1x128x128xbf16> to vector<128x128xbf16>
    %76 = arith.truncf %73 : vector<8x128xf32> to vector<8x128xbf16>
    %cst_50 = arith.constant dense<0.000000e+00> : vector<8x128xf32>
    %77 = tpu.matmul %76, %75, %cst_50 {dimension_numbers = #tpu.dot_dimension_numbers<[1], [0], [0], [1], [0, 0, 1, 1], [], []>} : vector<8x128xbf16>, vector<128x128xbf16>, vector<8x128xf32> -> vector<8x128xf32>
    %78 = arith.addf %72, %77 : vector<8x128xf32>
    %79 = vector.extract_strided_slice %58 {offsets = [2, 0], sizes = [8, 128], strides = [1, 1]} : vector<10x128xf32> to vector<8x128xf32>
    %c0_51 = arith.constant 0 : index
    %c0_52 = arith.constant 0 : index
    %80 = vector.load %arg11[%c0_51, %c0_52] : memref<128x128xbf16, #tpu.memory_space<vmem>>, vector<128x128xbf16>
    %81 = arith.truncf %79 : vector<8x128xf32> to vector<8x128xbf16>
    %cst_53 = arith.constant dense<0.000000e+00> : vector<8x128xf32>
    %82 = tpu.matmul %81, %80, %cst_53 {dimension_numbers = #tpu.dot_dimension_numbers<[1], [0], [0], [1], [0, 0, 1, 1], [], []>} : vector<8x128xbf16>, vector<128x128xbf16>, vector<8x128xf32> -> vector<8x128xf32>
    %83 = arith.addf %78, %82 : vector<8x128xf32>
    %cst_54 = arith.constant 0.000000e+00 : f32
    %84 = vector.broadcast %cst_54 : f32 to vector<8x128xf32>
    %85 = arith.maximumf %83, %84 : vector<8x128xf32>
    %cst_55 = arith.constant dense<0.000000e+00> : vector<8xf32>
    %86 = vector.multi_reduction <add>, %85, %cst_55 [1] : vector<8x128xf32> to vector<8xf32>
    %87 = vector.shape_cast %86 : vector<8xf32> to vector<8x1xf32>
    %cst_56 = arith.constant 1.280000e+02 : f32
    %88 = vector.broadcast %cst_56 : f32 to vector<8x1xf32>
    %89 = arith.divf %87, %88 : vector<8x1xf32>
    %90 = arith.mulf %85, %85 : vector<8x128xf32>
    %cst_57 = arith.constant dense<0.000000e+00> : vector<8xf32>
    %91 = vector.multi_reduction <add>, %90, %cst_57 [1] : vector<8x128xf32> to vector<8xf32>
    %92 = vector.shape_cast %91 : vector<8xf32> to vector<8x1xf32>
    %cst_58 = arith.constant 1.280000e+02 : f32
    %93 = vector.broadcast %cst_58 : f32 to vector<8x1xf32>
    %94 = arith.divf %92, %93 : vector<8x1xf32>
    %95 = vector.broadcast %89 : vector<8x1xf32> to vector<8x128xf32>
    %96 = arith.subf %85, %95 : vector<8x128xf32>
    %97 = arith.mulf %89, %89 : vector<8x1xf32>
    %98 = arith.subf %94, %97 : vector<8x1xf32>
    %cst_59 = arith.constant 9.99999974E-6 : f32
    %99 = vector.broadcast %cst_59 : f32 to vector<8x1xf32>
    %100 = arith.addf %98, %99 : vector<8x1xf32>
    %101 = math.rsqrt %100 : vector<8x1xf32>
    %102 = vector.broadcast %101 : vector<8x1xf32> to vector<8x128xf32>
    %103 = arith.mulf %96, %102 : vector<8x128xf32>
    %c0_60 = arith.constant 0 : index
    %c0_61 = arith.constant 0 : index
    %104 = vector.load %arg12[%c0_60, %c0_61] : memref<1x128xf32, #tpu.memory_space<vmem>>, vector<1x128xf32>
    %105 = vector.broadcast %104 : vector<1x128xf32> to vector<8x128xf32>
    %106 = arith.mulf %103, %105 : vector<8x128xf32>
    %c0_62 = arith.constant 0 : index
    %c0_63 = arith.constant 0 : index
    %107 = vector.load %arg13[%c0_62, %c0_63] : memref<1x128xf32, #tpu.memory_space<vmem>>, vector<1x128xf32>
    %108 = vector.broadcast %107 : vector<1x128xf32> to vector<8x128xf32>
    %109 = arith.addf %106, %108 : vector<8x128xf32>
    %c0_64 = arith.constant 0 : index
    %c0_65 = arith.constant 0 : index
    %110 = vector.load %arg16[%c0_64, %c0_65] : memref<1x128xf32, #tpu.memory_space<vmem>>, vector<1x128xf32>
    %c0_66 = arith.constant 0 : index
    %c0_67 = arith.constant 0 : index
    %111 = vector.load %arg17[%c0_66, %c0_67] : memref<1x128xf32, #tpu.memory_space<vmem>>, vector<1x128xf32>
    %112 = vector.extract_strided_slice %109 {offsets = [0, 0], sizes = [6, 128], strides = [1, 1]} : vector<8x128xf32> to vector<6x128xf32>
    %c0_68 = arith.constant 0 : index
    %c0_69 = arith.constant 0 : index
    %c0_70 = arith.constant 0 : index
    %113 = vector.load %arg14[%c0_68, %c0_69, %c0_70] : memref<3x128x128xbf16, #tpu.memory_space<vmem>>, vector<1x128x128xbf16>
    %114 = vector.shape_cast %113 : vector<1x128x128xbf16> to vector<128x128xbf16>
    %115 = arith.truncf %112 : vector<6x128xf32> to vector<6x128xbf16>
    %cst_71 = arith.constant dense<0.000000e+00> : vector<6x128xf32>
    %116 = tpu.matmul %115, %114, %cst_71 {dimension_numbers = #tpu.dot_dimension_numbers<[1], [0], [0], [1], [0, 0, 1, 1], [], []>} : vector<6x128xbf16>, vector<128x128xbf16>, vector<6x128xf32> -> vector<6x128xf32>
    %117 = vector.broadcast %110 : vector<1x128xf32> to vector<6x128xf32>
    %118 = arith.addf %117, %116 : vector<6x128xf32>
    %c0_72 = arith.constant 0 : index
    %c0_73 = arith.constant 0 : index
    %c0_74 = arith.constant 0 : index
    %119 = vector.load %arg15[%c0_72, %c0_73, %c0_74] : memref<3x128x128xbf16, #tpu.memory_space<vmem>>, vector<1x128x128xbf16>
    %120 = vector.shape_cast %119 : vector<1x128x128xbf16> to vector<128x128xbf16>
    %121 = arith.truncf %112 : vector<6x128xf32> to vector<6x128xbf16>
    %cst_75 = arith.constant dense<0.000000e+00> : vector<6x128xf32>
    %122 = tpu.matmul %121, %120, %cst_75 {dimension_numbers = #tpu.dot_dimension_numbers<[1], [0], [0], [1], [0, 0, 1, 1], [], []>} : vector<6x128xbf16>, vector<128x128xbf16>, vector<6x128xf32> -> vector<6x128xf32>
    %123 = vector.broadcast %111 : vector<1x128xf32> to vector<6x128xf32>
    %124 = arith.addf %123, %122 : vector<6x128xf32>
    %125 = vector.extract_strided_slice %109 {offsets = [1, 0], sizes = [6, 128], strides = [1, 1]} : vector<8x128xf32> to vector<6x128xf32>
    %c1_76 = arith.constant 1 : index
    %c0_77 = arith.constant 0 : index
    %c0_78 = arith.constant 0 : index
    %126 = vector.load %arg14[%c1_76, %c0_77, %c0_78] : memref<3x128x128xbf16, #tpu.memory_space<vmem>>, vector<1x128x128xbf16>
    %127 = vector.shape_cast %126 : vector<1x128x128xbf16> to vector<128x128xbf16>
    %128 = arith.truncf %125 : vector<6x128xf32> to vector<6x128xbf16>
    %cst_79 = arith.constant dense<0.000000e+00> : vector<6x128xf32>
    %129 = tpu.matmul %128, %127, %cst_79 {dimension_numbers = #tpu.dot_dimension_numbers<[1], [0], [0], [1], [0, 0, 1, 1], [], []>} : vector<6x128xbf16>, vector<128x128xbf16>, vector<6x128xf32> -> vector<6x128xf32>
    %130 = arith.addf %118, %129 : vector<6x128xf32>
    %c1_80 = arith.constant 1 : index
    %c0_81 = arith.constant 0 : index
    %c0_82 = arith.constant 0 : index
    %131 = vector.load %arg15[%c1_80, %c0_81, %c0_82] : memref<3x128x128xbf16, #tpu.memory_space<vmem>>, vector<1x128x128xbf16>
    %132 = vector.shape_cast %131 : vector<1x128x128xbf16> to vector<128x128xbf16>
    %133 = arith.truncf %125 : vector<6x128xf32> to vector<6x128xbf16>
    %cst_83 = arith.constant dense<0.000000e+00> : vector<6x128xf32>
    %134 = tpu.matmul %133, %132, %cst_83 {dimension_numbers = #tpu.dot_dimension_numbers<[1], [0], [0], [1], [0, 0, 1, 1], [], []>} : vector<6x128xbf16>, vector<128x128xbf16>, vector<6x128xf32> -> vector<6x128xf32>
    %135 = arith.addf %124, %134 : vector<6x128xf32>
    %136 = vector.extract_strided_slice %109 {offsets = [2, 0], sizes = [6, 128], strides = [1, 1]} : vector<8x128xf32> to vector<6x128xf32>
    %c2_84 = arith.constant 2 : index
    %c0_85 = arith.constant 0 : index
    %c0_86 = arith.constant 0 : index
    %137 = vector.load %arg14[%c2_84, %c0_85, %c0_86] : memref<3x128x128xbf16, #tpu.memory_space<vmem>>, vector<1x128x128xbf16>
    %138 = vector.shape_cast %137 : vector<1x128x128xbf16> to vector<128x128xbf16>
    %139 = arith.truncf %136 : vector<6x128xf32> to vector<6x128xbf16>
    %cst_87 = arith.constant dense<0.000000e+00> : vector<6x128xf32>
    %140 = tpu.matmul %139, %138, %cst_87 {dimension_numbers = #tpu.dot_dimension_numbers<[1], [0], [0], [1], [0, 0, 1, 1], [], []>} : vector<6x128xbf16>, vector<128x128xbf16>, vector<6x128xf32> -> vector<6x128xf32>
    %141 = arith.addf %130, %140 : vector<6x128xf32>
    %c2_88 = arith.constant 2 : index
    %c0_89 = arith.constant 0 : index
    %c0_90 = arith.constant 0 : index
    %142 = vector.load %arg15[%c2_88, %c0_89, %c0_90] : memref<3x128x128xbf16, #tpu.memory_space<vmem>>, vector<1x128x128xbf16>
    %143 = vector.shape_cast %142 : vector<1x128x128xbf16> to vector<128x128xbf16>
    %144 = arith.truncf %136 : vector<6x128xf32> to vector<6x128xbf16>
    %cst_91 = arith.constant dense<0.000000e+00> : vector<6x128xf32>
    %145 = tpu.matmul %144, %143, %cst_91 {dimension_numbers = #tpu.dot_dimension_numbers<[1], [0], [0], [1], [0, 0, 1, 1], [], []>} : vector<6x128xbf16>, vector<128x128xbf16>, vector<6x128xf32> -> vector<6x128xf32>
    %146 = arith.addf %135, %145 : vector<6x128xf32>
    %147 = vector.extract_strided_slice %109 {offsets = [2, 0], sizes = [6, 128], strides = [1, 1]} : vector<8x128xf32> to vector<6x128xf32>
    %c0_92 = arith.constant 0 : index
    %c0_93 = arith.constant 0 : index
    %148 = vector.load %arg18[%c0_92, %c0_93] : memref<128x128xbf16, #tpu.memory_space<vmem>>, vector<128x128xbf16>
    %149 = arith.truncf %147 : vector<6x128xf32> to vector<6x128xbf16>
    %cst_94 = arith.constant dense<0.000000e+00> : vector<6x128xf32>
    %150 = tpu.matmul %149, %148, %cst_94 {dimension_numbers = #tpu.dot_dimension_numbers<[1], [0], [0], [1], [0, 0, 1, 1], [], []>} : vector<6x128xbf16>, vector<128x128xbf16>, vector<6x128xf32> -> vector<6x128xf32>
    %151 = arith.addf %141, %150 : vector<6x128xf32>
    %152 = arith.negf %146 : vector<6x128xf32>
    %153 = math.exp %152 : vector<6x128xf32>
    %cst_95 = arith.constant 1.000000e+00 : f32
    %154 = vector.broadcast %cst_95 : f32 to vector<6x128xf32>
    %155 = arith.addf %154, %153 : vector<6x128xf32>
    %156 = arith.divf %154, %155 : vector<6x128xf32>
    %157 = arith.mulf %151, %156 : vector<6x128xf32>
    %c0_96 = arith.constant 0 : index
    %c0_97 = arith.constant 0 : index
    %158 = vector.load %arg19[%c0_96, %c0_97] : memref<128x128xbf16, #tpu.memory_space<vmem>>, vector<128x128xbf16>
    %159 = arith.truncf %157 : vector<6x128xf32> to vector<6x128xbf16>
    %cst_98 = arith.constant dense<0.000000e+00> : vector<6x128xf32>
    %160 = tpu.matmul %159, %158, %cst_98 {dimension_numbers = #tpu.dot_dimension_numbers<[1], [0], [0], [1], [0, 0, 1, 1], [], []>} : vector<6x128xbf16>, vector<128x128xbf16>, vector<6x128xf32> -> vector<6x128xf32>
    %c0_99 = arith.constant 0 : index
    %c0_100 = arith.constant 0 : index
    %161 = vector.load %arg20[%c0_99, %c0_100] : memref<1x128xf32, #tpu.memory_space<vmem>>, vector<1x128xf32>
    %162 = vector.broadcast %161 : vector<1x128xf32> to vector<6x128xf32>
    %163 = arith.addf %160, %162 : vector<6x128xf32>
    %164 = arith.addf %163, %157 : vector<6x128xf32>
    %cst_101 = arith.constant 0.000000e+00 : f32
    %165 = vector.broadcast %cst_101 : f32 to vector<6x128xf32>
    %166 = arith.maximumf %164, %165 : vector<6x128xf32>
    %c0_102 = arith.constant 0 : index
    %c0_103 = arith.constant 0 : index
    %167 = vector.load %arg22[%c0_102, %c0_103] : memref<1x128xf32, #tpu.memory_space<vmem>>, vector<1x128xf32>
    %168 = vector.extract_strided_slice %166 {offsets = [0, 0], sizes = [4, 128], strides = [1, 1]} : vector<6x128xf32> to vector<4x128xf32>
    %c0_104 = arith.constant 0 : index
    %c0_105 = arith.constant 0 : index
    %c0_106 = arith.constant 0 : index
    %169 = vector.load %arg21[%c0_104, %c0_105, %c0_106] : memref<3x128x128xbf16, #tpu.memory_space<vmem>>, vector<1x128x128xbf16>
    %170 = vector.shape_cast %169 : vector<1x128x128xbf16> to vector<128x128xbf16>
    %171 = arith.truncf %168 : vector<4x128xf32> to vector<4x128xbf16>
    %cst_107 = arith.constant dense<0.000000e+00> : vector<4x128xf32>
    %172 = tpu.matmul %171, %170, %cst_107 {dimension_numbers = #tpu.dot_dimension_numbers<[1], [0], [0], [1], [0, 0, 1, 1], [], []>} : vector<4x128xbf16>, vector<128x128xbf16>, vector<4x128xf32> -> vector<4x128xf32>
    %173 = vector.broadcast %167 : vector<1x128xf32> to vector<4x128xf32>
    %174 = arith.addf %173, %172 : vector<4x128xf32>
    %175 = vector.extract_strided_slice %166 {offsets = [1, 0], sizes = [4, 128], strides = [1, 1]} : vector<6x128xf32> to vector<4x128xf32>
    %c1_108 = arith.constant 1 : index
    %c0_109 = arith.constant 0 : index
    %c0_110 = arith.constant 0 : index
    %176 = vector.load %arg21[%c1_108, %c0_109, %c0_110] : memref<3x128x128xbf16, #tpu.memory_space<vmem>>, vector<1x128x128xbf16>
    %177 = vector.shape_cast %176 : vector<1x128x128xbf16> to vector<128x128xbf16>
    %178 = arith.truncf %175 : vector<4x128xf32> to vector<4x128xbf16>
    %cst_111 = arith.constant dense<0.000000e+00> : vector<4x128xf32>
    %179 = tpu.matmul %178, %177, %cst_111 {dimension_numbers = #tpu.dot_dimension_numbers<[1], [0], [0], [1], [0, 0, 1, 1], [], []>} : vector<4x128xbf16>, vector<128x128xbf16>, vector<4x128xf32> -> vector<4x128xf32>
    %180 = arith.addf %174, %179 : vector<4x128xf32>
    %181 = vector.extract_strided_slice %166 {offsets = [2, 0], sizes = [4, 128], strides = [1, 1]} : vector<6x128xf32> to vector<4x128xf32>
    %c2_112 = arith.constant 2 : index
    %c0_113 = arith.constant 0 : index
    %c0_114 = arith.constant 0 : index
    %182 = vector.load %arg21[%c2_112, %c0_113, %c0_114] : memref<3x128x128xbf16, #tpu.memory_space<vmem>>, vector<1x128x128xbf16>
    %183 = vector.shape_cast %182 : vector<1x128x128xbf16> to vector<128x128xbf16>
    %184 = arith.truncf %181 : vector<4x128xf32> to vector<4x128xbf16>
    %cst_115 = arith.constant dense<0.000000e+00> : vector<4x128xf32>
    %185 = tpu.matmul %184, %183, %cst_115 {dimension_numbers = #tpu.dot_dimension_numbers<[1], [0], [0], [1], [0, 0, 1, 1], [], []>} : vector<4x128xbf16>, vector<128x128xbf16>, vector<4x128xf32> -> vector<4x128xf32>
    %186 = arith.addf %180, %185 : vector<4x128xf32>
    %187 = vector.extract_strided_slice %166 {offsets = [2, 0], sizes = [4, 128], strides = [1, 1]} : vector<6x128xf32> to vector<4x128xf32>
    %c0_116 = arith.constant 0 : index
    %c0_117 = arith.constant 0 : index
    %188 = vector.load %arg23[%c0_116, %c0_117] : memref<128x128xbf16, #tpu.memory_space<vmem>>, vector<128x128xbf16>
    %189 = arith.truncf %187 : vector<4x128xf32> to vector<4x128xbf16>
    %cst_118 = arith.constant dense<0.000000e+00> : vector<4x128xf32>
    %190 = tpu.matmul %189, %188, %cst_118 {dimension_numbers = #tpu.dot_dimension_numbers<[1], [0], [0], [1], [0, 0, 1, 1], [], []>} : vector<4x128xbf16>, vector<128x128xbf16>, vector<4x128xf32> -> vector<4x128xf32>
    %191 = arith.addf %186, %190 : vector<4x128xf32>
    %cst_119 = arith.constant 0.000000e+00 : f32
    %192 = vector.broadcast %cst_119 : f32 to vector<4x128xf32>
    %193 = arith.maximumf %191, %192 : vector<4x128xf32>
    %cst_120 = arith.constant dense<0.000000e+00> : vector<4xf32>
    %194 = vector.multi_reduction <add>, %193, %cst_120 [1] : vector<4x128xf32> to vector<4xf32>
    %195 = vector.shape_cast %194 : vector<4xf32> to vector<4x1xf32>
    %cst_121 = arith.constant 1.280000e+02 : f32
    %196 = vector.broadcast %cst_121 : f32 to vector<4x1xf32>
    %197 = arith.divf %195, %196 : vector<4x1xf32>
    %198 = arith.mulf %193, %193 : vector<4x128xf32>
    %cst_122 = arith.constant dense<0.000000e+00> : vector<4xf32>
    %199 = vector.multi_reduction <add>, %198, %cst_122 [1] : vector<4x128xf32> to vector<4xf32>
    %200 = vector.shape_cast %199 : vector<4xf32> to vector<4x1xf32>
    %cst_123 = arith.constant 1.280000e+02 : f32
    %201 = vector.broadcast %cst_123 : f32 to vector<4x1xf32>
    %202 = arith.divf %200, %201 : vector<4x1xf32>
    %203 = vector.broadcast %197 : vector<4x1xf32> to vector<4x128xf32>
    %204 = arith.subf %193, %203 : vector<4x128xf32>
    %205 = arith.mulf %197, %197 : vector<4x1xf32>
    %206 = arith.subf %202, %205 : vector<4x1xf32>
    %cst_124 = arith.constant 9.99999974E-6 : f32
    %207 = vector.broadcast %cst_124 : f32 to vector<4x1xf32>
    %208 = arith.addf %206, %207 : vector<4x1xf32>
    %209 = math.rsqrt %208 : vector<4x1xf32>
    %210 = vector.broadcast %209 : vector<4x1xf32> to vector<4x128xf32>
    %211 = arith.mulf %204, %210 : vector<4x128xf32>
    %c0_125 = arith.constant 0 : index
    %c0_126 = arith.constant 0 : index
    %212 = vector.load %arg24[%c0_125, %c0_126] : memref<1x128xf32, #tpu.memory_space<vmem>>, vector<1x128xf32>
    %213 = vector.broadcast %212 : vector<1x128xf32> to vector<4x128xf32>
    %214 = arith.mulf %211, %213 : vector<4x128xf32>
    %c0_127 = arith.constant 0 : index
    %c0_128 = arith.constant 0 : index
    %215 = vector.load %arg25[%c0_127, %c0_128] : memref<1x128xf32, #tpu.memory_space<vmem>>, vector<1x128xf32>
    %216 = vector.broadcast %215 : vector<1x128xf32> to vector<4x128xf32>
    %217 = arith.addf %214, %216 : vector<4x128xf32>
    %c0_129 = arith.constant 0 : index
    %c0_130 = arith.constant 0 : index
    %218 = vector.load %arg28[%c0_129, %c0_130] : memref<1x128xf32, #tpu.memory_space<vmem>>, vector<1x128xf32>
    %c0_131 = arith.constant 0 : index
    %c0_132 = arith.constant 0 : index
    %219 = vector.load %arg29[%c0_131, %c0_132] : memref<1x128xf32, #tpu.memory_space<vmem>>, vector<1x128xf32>
    %220 = vector.extract_strided_slice %217 {offsets = [0, 0], sizes = [1, 128], strides = [1, 1]} : vector<4x128xf32> to vector<1x128xf32>
    %c0_133 = arith.constant 0 : index
    %c0_134 = arith.constant 0 : index
    %c0_135 = arith.constant 0 : index
    %221 = vector.load %arg26[%c0_133, %c0_134, %c0_135] : memref<4x128x128xbf16, #tpu.memory_space<vmem>>, vector<1x128x128xbf16>
    %222 = vector.shape_cast %221 : vector<1x128x128xbf16> to vector<128x128xbf16>
    %223 = arith.truncf %220 : vector<1x128xf32> to vector<1x128xbf16>
    %cst_136 = arith.constant dense<0.000000e+00> : vector<1x128xf32>
    %224 = tpu.matmul %223, %222, %cst_136 {dimension_numbers = #tpu.dot_dimension_numbers<[1], [0], [0], [1], [0, 0, 1, 1], [], []>} : vector<1x128xbf16>, vector<128x128xbf16>, vector<1x128xf32> -> vector<1x128xf32>
    %225 = arith.addf %218, %224 : vector<1x128xf32>
    %c0_137 = arith.constant 0 : index
    %c0_138 = arith.constant 0 : index
    %c0_139 = arith.constant 0 : index
    %226 = vector.load %arg27[%c0_137, %c0_138, %c0_139] : memref<4x128x128xbf16, #tpu.memory_space<vmem>>, vector<1x128x128xbf16>
    %227 = vector.shape_cast %226 : vector<1x128x128xbf16> to vector<128x128xbf16>
    %228 = arith.truncf %220 : vector<1x128xf32> to vector<1x128xbf16>
    %cst_140 = arith.constant dense<0.000000e+00> : vector<1x128xf32>
    %229 = tpu.matmul %228, %227, %cst_140 {dimension_numbers = #tpu.dot_dimension_numbers<[1], [0], [0], [1], [0, 0, 1, 1], [], []>} : vector<1x128xbf16>, vector<128x128xbf16>, vector<1x128xf32> -> vector<1x128xf32>
    %230 = arith.addf %219, %229 : vector<1x128xf32>
    %231 = vector.extract_strided_slice %217 {offsets = [1, 0], sizes = [1, 128], strides = [1, 1]} : vector<4x128xf32> to vector<1x128xf32>
    %c1_141 = arith.constant 1 : index
    %c0_142 = arith.constant 0 : index
    %c0_143 = arith.constant 0 : index
    %232 = vector.load %arg26[%c1_141, %c0_142, %c0_143] : memref<4x128x128xbf16, #tpu.memory_space<vmem>>, vector<1x128x128xbf16>
    %233 = vector.shape_cast %232 : vector<1x128x128xbf16> to vector<128x128xbf16>
    %234 = arith.truncf %231 : vector<1x128xf32> to vector<1x128xbf16>
    %cst_144 = arith.constant dense<0.000000e+00> : vector<1x128xf32>
    %235 = tpu.matmul %234, %233, %cst_144 {dimension_numbers = #tpu.dot_dimension_numbers<[1], [0], [0], [1], [0, 0, 1, 1], [], []>} : vector<1x128xbf16>, vector<128x128xbf16>, vector<1x128xf32> -> vector<1x128xf32>
    %236 = arith.addf %225, %235 : vector<1x128xf32>
    %c1_145 = arith.constant 1 : index
    %c0_146 = arith.constant 0 : index
    %c0_147 = arith.constant 0 : index
    %237 = vector.load %arg27[%c1_145, %c0_146, %c0_147] : memref<4x128x128xbf16, #tpu.memory_space<vmem>>, vector<1x128x128xbf16>
    %238 = vector.shape_cast %237 : vector<1x128x128xbf16> to vector<128x128xbf16>
    %239 = arith.truncf %231 : vector<1x128xf32> to vector<1x128xbf16>
    %cst_148 = arith.constant dense<0.000000e+00> : vector<1x128xf32>
    %240 = tpu.matmul %239, %238, %cst_148 {dimension_numbers = #tpu.dot_dimension_numbers<[1], [0], [0], [1], [0, 0, 1, 1], [], []>} : vector<1x128xbf16>, vector<128x128xbf16>, vector<1x128xf32> -> vector<1x128xf32>
    %241 = arith.addf %230, %240 : vector<1x128xf32>
    %242 = vector.extract_strided_slice %217 {offsets = [2, 0], sizes = [1, 128], strides = [1, 1]} : vector<4x128xf32> to vector<1x128xf32>
    %c2_149 = arith.constant 2 : index
    %c0_150 = arith.constant 0 : index
    %c0_151 = arith.constant 0 : index
    %243 = vector.load %arg26[%c2_149, %c0_150, %c0_151] : memref<4x128x128xbf16, #tpu.memory_space<vmem>>, vector<1x128x128xbf16>
    %244 = vector.shape_cast %243 : vector<1x128x128xbf16> to vector<128x128xbf16>
    %245 = arith.truncf %242 : vector<1x128xf32> to vector<1x128xbf16>
    %cst_152 = arith.constant dense<0.000000e+00> : vector<1x128xf32>
    %246 = tpu.matmul %245, %244, %cst_152 {dimension_numbers = #tpu.dot_dimension_numbers<[1], [0], [0], [1], [0, 0, 1, 1], [], []>} : vector<1x128xbf16>, vector<128x128xbf16>, vector<1x128xf32> -> vector<1x128xf32>
    %247 = arith.addf %236, %246 : vector<1x128xf32>
    %c2_153 = arith.constant 2 : index
    %c0_154 = arith.constant 0 : index
    %c0_155 = arith.constant 0 : index
    %248 = vector.load %arg27[%c2_153, %c0_154, %c0_155] : memref<4x128x128xbf16, #tpu.memory_space<vmem>>, vector<1x128x128xbf16>
    %249 = vector.shape_cast %248 : vector<1x128x128xbf16> to vector<128x128xbf16>
    %250 = arith.truncf %242 : vector<1x128xf32> to vector<1x128xbf16>
    %cst_156 = arith.constant dense<0.000000e+00> : vector<1x128xf32>
    %251 = tpu.matmul %250, %249, %cst_156 {dimension_numbers = #tpu.dot_dimension_numbers<[1], [0], [0], [1], [0, 0, 1, 1], [], []>} : vector<1x128xbf16>, vector<128x128xbf16>, vector<1x128xf32> -> vector<1x128xf32>
    %252 = arith.addf %241, %251 : vector<1x128xf32>
    %253 = vector.extract_strided_slice %217 {offsets = [3, 0], sizes = [1, 128], strides = [1, 1]} : vector<4x128xf32> to vector<1x128xf32>
    %c3 = arith.constant 3 : index
    %c0_157 = arith.constant 0 : index
    %c0_158 = arith.constant 0 : index
    %254 = vector.load %arg26[%c3, %c0_157, %c0_158] : memref<4x128x128xbf16, #tpu.memory_space<vmem>>, vector<1x128x128xbf16>
    %255 = vector.shape_cast %254 : vector<1x128x128xbf16> to vector<128x128xbf16>
    %256 = arith.truncf %253 : vector<1x128xf32> to vector<1x128xbf16>
    %cst_159 = arith.constant dense<0.000000e+00> : vector<1x128xf32>
    %257 = tpu.matmul %256, %255, %cst_159 {dimension_numbers = #tpu.dot_dimension_numbers<[1], [0], [0], [1], [0, 0, 1, 1], [], []>} : vector<1x128xbf16>, vector<128x128xbf16>, vector<1x128xf32> -> vector<1x128xf32>
    %258 = arith.addf %247, %257 : vector<1x128xf32>
    %c3_160 = arith.constant 3 : index
    %c0_161 = arith.constant 0 : index
    %c0_162 = arith.constant 0 : index
    %259 = vector.load %arg27[%c3_160, %c0_161, %c0_162] : memref<4x128x128xbf16, #tpu.memory_space<vmem>>, vector<1x128x128xbf16>
    %260 = vector.shape_cast %259 : vector<1x128x128xbf16> to vector<128x128xbf16>
    %261 = arith.truncf %253 : vector<1x128xf32> to vector<1x128xbf16>
    %cst_163 = arith.constant dense<0.000000e+00> : vector<1x128xf32>
    %262 = tpu.matmul %261, %260, %cst_163 {dimension_numbers = #tpu.dot_dimension_numbers<[1], [0], [0], [1], [0, 0, 1, 1], [], []>} : vector<1x128xbf16>, vector<128x128xbf16>, vector<1x128xf32> -> vector<1x128xf32>
    %263 = arith.addf %252, %262 : vector<1x128xf32>
    %264 = vector.extract_strided_slice %217 {offsets = [3, 0], sizes = [1, 128], strides = [1, 1]} : vector<4x128xf32> to vector<1x128xf32>
    %265 = arith.addf %258, %264 : vector<1x128xf32>
    %266 = arith.negf %263 : vector<1x128xf32>
    %267 = math.exp %266 : vector<1x128xf32>
    %cst_164 = arith.constant 1.000000e+00 : f32
    %268 = vector.broadcast %cst_164 : f32 to vector<1x128xf32>
    %269 = arith.addf %268, %267 : vector<1x128xf32>
    %270 = arith.divf %268, %269 : vector<1x128xf32>
    %271 = arith.mulf %265, %270 : vector<1x128xf32>
    %cst_165 = arith.constant dense<0.000000e+00> : vector<1xf32>
    %272 = vector.multi_reduction <add>, %271, %cst_165 [1] : vector<1x128xf32> to vector<1xf32>
    %273 = vector.shape_cast %272 : vector<1xf32> to vector<1x1xf32>
    %cst_166 = arith.constant 1.280000e+02 : f32
    %274 = vector.broadcast %cst_166 : f32 to vector<1x1xf32>
    %275 = arith.divf %273, %274 : vector<1x1xf32>
    %276 = arith.mulf %271, %271 : vector<1x128xf32>
    %cst_167 = arith.constant dense<0.000000e+00> : vector<1xf32>
    %277 = vector.multi_reduction <add>, %276, %cst_167 [1] : vector<1x128xf32> to vector<1xf32>
    %278 = vector.shape_cast %277 : vector<1xf32> to vector<1x1xf32>
    %cst_168 = arith.constant 1.280000e+02 : f32
    %279 = vector.broadcast %cst_168 : f32 to vector<1x1xf32>
    %280 = arith.divf %278, %279 : vector<1x1xf32>
    %281 = vector.broadcast %275 : vector<1x1xf32> to vector<1x128xf32>
    %282 = arith.subf %271, %281 : vector<1x128xf32>
    %283 = arith.mulf %275, %275 : vector<1x1xf32>
    %284 = arith.subf %280, %283 : vector<1x1xf32>
    %cst_169 = arith.constant 9.99999974E-6 : f32
    %285 = vector.broadcast %cst_169 : f32 to vector<1x1xf32>
    %286 = arith.addf %284, %285 : vector<1x1xf32>
    %287 = math.rsqrt %286 : vector<1x1xf32>
    %288 = vector.broadcast %287 : vector<1x1xf32> to vector<1x128xf32>
    %289 = arith.mulf %282, %288 : vector<1x128xf32>
    %c0_170 = arith.constant 0 : index
    %c0_171 = arith.constant 0 : index
    %290 = vector.load %arg30[%c0_170, %c0_171] : memref<1x128xf32, #tpu.memory_space<vmem>>, vector<1x128xf32>
    %291 = arith.mulf %289, %290 : vector<1x128xf32>
    %c0_172 = arith.constant 0 : index
    %c0_173 = arith.constant 0 : index
    %292 = vector.load %arg31[%c0_172, %c0_173] : memref<1x128xf32, #tpu.memory_space<vmem>>, vector<1x128xf32>
    %293 = arith.addf %291, %292 : vector<1x128xf32>
    %c0_174 = arith.constant 0 : index
    %c0_175 = arith.constant 0 : index
    %294 = vector.load %arg32[%c0_174, %c0_175] : memref<128x128xbf16, #tpu.memory_space<vmem>>, vector<128x128xbf16>
    %295 = arith.truncf %293 : vector<1x128xf32> to vector<1x128xbf16>
    %cst_176 = arith.constant dense<0.000000e+00> : vector<1x128xf32>
    %296 = tpu.matmul %295, %294, %cst_176 {dimension_numbers = #tpu.dot_dimension_numbers<[1], [0], [0], [1], [0, 0, 1, 1], [], []>} : vector<1x128xbf16>, vector<128x128xbf16>, vector<1x128xf32> -> vector<1x128xf32>
    %c0_177 = arith.constant 0 : index
    %c0_178 = arith.constant 0 : index
    %297 = vector.load %arg33[%c0_177, %c0_178] : memref<1x128xf32, #tpu.memory_space<vmem>>, vector<1x128xf32>
    %298 = arith.addf %296, %297 : vector<1x128xf32>
    %299 = arith.addf %298, %293 : vector<1x128xf32>
    %300 = arith.negf %299 : vector<1x128xf32>
    %301 = math.exp %300 : vector<1x128xf32>
    %cst_179 = arith.constant 1.000000e+00 : f32
    %302 = vector.broadcast %cst_179 : f32 to vector<1x128xf32>
    %303 = arith.addf %302, %301 : vector<1x128xf32>
    %304 = arith.divf %302, %303 : vector<1x128xf32>
    %c0_180 = arith.constant 0 : index
    %c0_181 = arith.constant 0 : index
    %305 = vector.load %arg34[%c0_180, %c0_181] : memref<128x16xbf16, #tpu.memory_space<vmem>>, vector<128x16xbf16>
    %306 = arith.truncf %304 : vector<1x128xf32> to vector<1x128xbf16>
    %cst_182 = arith.constant dense<0.000000e+00> : vector<1x16xf32>
    %307 = tpu.matmul %306, %305, %cst_182 {dimension_numbers = #tpu.dot_dimension_numbers<[1], [0], [0], [1], [0, 0, 1, 1], [], []>} : vector<1x128xbf16>, vector<128x16xbf16>, vector<1x16xf32> -> vector<1x16xf32>
    %c0_183 = arith.constant 0 : index
    %c0_184 = arith.constant 0 : index
    %308 = vector.load %arg35[%c0_183, %c0_184] : memref<1x16xf32, #tpu.memory_space<vmem>>, vector<1x16xf32>
    %309 = arith.addf %307, %308 : vector<1x16xf32>
    %c0_185 = arith.constant 0 : index
    %c0_186 = arith.constant 0 : index
    %c0_187 = arith.constant 0 : index
    %310 = vector.load %arg36[%c0_185, %c0_186, %c0_187] : memref<1x1x16xf32, #tpu.memory_space<vmem>>, vector<1x1x16xf32>
    %311 = vector.shape_cast %310 : vector<1x1x16xf32> to vector<1x16xf32>
    %312 = vector.shape_cast %309 : vector<1x16xf32> to vector<1x1x16xf32>
    tpu.vector_store %arg36[%c0_185, %c0_186, %c0_187], %312 {strides = array<i32>} : memref<1x1x16xf32, #tpu.memory_space<vmem>>, vector<1x1x16xf32>,
    return
  }
  func.func @transform_0(%arg0: i32) -> (i32, i32, i32) {
    %c0_i32 = arith.constant 0 : i32
    %c0_i32_0 = arith.constant 0 : i32
    %c0_i32_1 = arith.constant 0 : i32
    return %arg0, %c0_i32, %c0_i32_0 : i32, i32, i32
  }
  func.func @transform_1(%arg0: i32) -> (i32, i32, i32) {
    %c0_i32 = arith.constant 0 : i32
    %c0_i32_0 = arith.constant 0 : i32
    %c0_i32_1 = arith.constant 0 : i32
    %c0_i32_2 = arith.constant 0 : i32
    return %c0_i32, %c0_i32_0, %c0_i32_1 : i32, i32, i32
  }
  func.func @transform_2(%arg0: i32) -> (i32, i32, i32) {
    %c0_i32 = arith.constant 0 : i32
    %c0_i32_0 = arith.constant 0 : i32
    %c0_i32_1 = arith.constant 0 : i32
    %c0_i32_2 = arith.constant 0 : i32
    return %c0_i32, %c0_i32_0, %c0_i32_1 : i32, i32, i32
  }
  func.func @transform_3(%arg0: i32) -> (i32, i32) {
    %c0_i32 = arith.constant 0 : i32
    %c0_i32_0 = arith.constant 0 : i32
    %c0_i32_1 = arith.constant 0 : i32
    return %c0_i32, %c0_i32_0 : i32, i32
  }
  func.func @transform_4(%arg0: i32) -> (i32, i32) {
    %c0_i32 = arith.constant 0 : i32
    %c0_i32_0 = arith.constant 0 : i32
    %c0_i32_1 = arith.constant 0 : i32
    return %c0_i32, %c0_i32_0 : i32, i32
  }
  func.func @transform_5(%arg0: i32) -> (i32, i32) {
    %c0_i32 = arith.constant 0 : i32
    %c0_i32_0 = arith.constant 0 : i32
    %c0_i32_1 = arith.constant 0 : i32
    return %c0_i32, %c0_i32_0 : i32, i32
  }
  func.func @transform_6(%arg0: i32) -> (i32, i32) {
    %c0_i32 = arith.constant 0 : i32
    %c0_i32_0 = arith.constant 0 : i32
    %c0_i32_1 = arith.constant 0 : i32
    return %c0_i32, %c0_i32_0 : i32, i32
  }
  func.func @transform_7(%arg0: i32) -> (i32, i32) {
    %c0_i32 = arith.constant 0 : i32
    %c0_i32_0 = arith.constant 0 : i32
    %c0_i32_1 = arith.constant 0 : i32
    return %c0_i32, %c0_i32_0 : i32, i32
  }
  func.func @transform_8(%arg0: i32) -> (i32, i32, i32) {
    %c0_i32 = arith.constant 0 : i32
    %c0_i32_0 = arith.constant 0 : i32
    %c0_i32_1 = arith.constant 0 : i32
    %c0_i32_2 = arith.constant 0 : i32
    return %c0_i32, %c0_i32_0, %c0_i32_1 : i32, i32, i32
  }
  func.func @transform_9(%arg0: i32) -> (i32, i32) {
    %c0_i32 = arith.constant 0 : i32
    %c0_i32_0 = arith.constant 0 : i32
    %c0_i32_1 = arith.constant 0 : i32
    return %c0_i32, %c0_i32_0 : i32, i32
  }
  func.func @transform_10(%arg0: i32) -> (i32, i32) {
    %c0_i32 = arith.constant 0 : i32
    %c0_i32_0 = arith.constant 0 : i32
    %c0_i32_1 = arith.constant 0 : i32
    return %c0_i32, %c0_i32_0 : i32, i32
  }
  func.func @transform_11(%arg0: i32) -> (i32, i32) {
    %c0_i32 = arith.constant 0 : i32
    %c0_i32_0 = arith.constant 0 : i32
    %c0_i32_1 = arith.constant 0 : i32
    return %c0_i32, %c0_i32_0 : i32, i32
  }
  func.func @transform_12(%arg0: i32) -> (i32, i32) {
    %c0_i32 = arith.constant 0 : i32
    %c0_i32_0 = arith.constant 0 : i32
    %c0_i32_1 = arith.constant 0 : i32
    return %c0_i32, %c0_i32_0 : i32, i32
  }
  func.func @transform_13(%arg0: i32) -> (i32, i32, i32) {
    %c0_i32 = arith.constant 0 : i32
    %c0_i32_0 = arith.constant 0 : i32
    %c0_i32_1 = arith.constant 0 : i32
    %c0_i32_2 = arith.constant 0 : i32
    return %c0_i32, %c0_i32_0, %c0_i32_1 : i32, i32, i32
  }
  func.func @transform_14(%arg0: i32) -> (i32, i32, i32) {
    %c0_i32 = arith.constant 0 : i32
    %c0_i32_0 = arith.constant 0 : i32
    %c0_i32_1 = arith.constant 0 : i32
    %c0_i32_2 = arith.constant 0 : i32
    return %c0_i32, %c0_i32_0, %c0_i32_1 : i32, i32, i32
  }
  func.func @transform_15(%arg0: i32) -> (i32, i32) {
    %c0_i32 = arith.constant 0 : i32
    %c0_i32_0 = arith.constant 0 : i32
    %c0_i32_1 = arith.constant 0 : i32
    return %c0_i32, %c0_i32_0 : i32, i32
  }
  func.func @transform_16(%arg0: i32) -> (i32, i32) {
    %c0_i32 = arith.constant 0 : i32
    %c0_i32_0 = arith.constant 0 : i32
    %c0_i32_1 = arith.constant 0 : i32
    return %c0_i32, %c0_i32_0 : i32, i32
  }
  func.func @transform_17(%arg0: i32) -> (i32, i32) {
    %c0_i32 = arith.constant 0 : i32
    %c0_i32_0 = arith.constant 0 : i32
    %c0_i32_1 = arith.constant 0 : i32
    return %c0_i32, %c0_i32_0 : i32, i32
  }
  func.func @transform_18(%arg0: i32) -> (i32, i32) {
    %c0_i32 = arith.constant 0 : i32
    %c0_i32_0 = arith.constant 0 : i32
    %c0_i32_1 = arith.constant 0 : i32
    return %c0_i32, %c0_i32_0 : i32, i32
  }
  func.func @transform_19(%arg0: i32) -> (i32, i32) {
    %c0_i32 = arith.constant 0 : i32
    %c0_i32_0 = arith.constant 0 : i32
    %c0_i32_1 = arith.constant 0 : i32
    return %c0_i32, %c0_i32_0 : i32, i32
  }
  func.func @transform_20(%arg0: i32) -> (i32, i32, i32) {
    %c0_i32 = arith.constant 0 : i32
    %c0_i32_0 = arith.constant 0 : i32
    %c0_i32_1 = arith.constant 0 : i32
    %c0_i32_2 = arith.constant 0 : i32
    return %c0_i32, %c0_i32_0, %c0_i32_1 : i32, i32, i32
  }
  func.func @transform_21(%arg0: i32) -> (i32, i32) {
    %c0_i32 = arith.constant 0 : i32
    %c0_i32_0 = arith.constant 0 : i32
    %c0_i32_1 = arith.constant 0 : i32
    return %c0_i32, %c0_i32_0 : i32, i32
  }
  func.func @transform_22(%arg0: i32) -> (i32, i32) {
    %c0_i32 = arith.constant 0 : i32
    %c0_i32_0 = arith.constant 0 : i32
    %c0_i32_1 = arith.constant 0 : i32
    return %c0_i32, %c0_i32_0 : i32, i32
  }
  func.func @transform_23(%arg0: i32) -> (i32, i32) {
    %c0_i32 = arith.constant 0 : i32
    %c0_i32_0 = arith.constant 0 : i32
    %c0_i32_1 = arith.constant 0 : i32
    return %c0_i32, %c0_i32_0 : i32, i32
  }
  func.func @transform_24(%arg0: i32) -> (i32, i32) {
    %c0_i32 = arith.constant 0 : i32
    %c0_i32_0 = arith.constant 0 : i32
    %c0_i32_1 = arith.constant 0 : i32
    return %c0_i32, %c0_i32_0 : i32, i32
  }
  func.func @transform_25(%arg0: i32) -> (i32, i32, i32) {
    %c0_i32 = arith.constant 0 : i32
    %c0_i32_0 = arith.constant 0 : i32
    %c0_i32_1 = arith.constant 0 : i32
    %c0_i32_2 = arith.constant 0 : i32
    return %c0_i32, %c0_i32_0, %c0_i32_1 : i32, i32, i32
  }
  func.func @transform_26(%arg0: i32) -> (i32, i32, i32) {
    %c0_i32 = arith.constant 0 : i32
    %c0_i32_0 = arith.constant 0 : i32
    %c0_i32_1 = arith.constant 0 : i32
    %c0_i32_2 = arith.constant 0 : i32
    return %c0_i32, %c0_i32_0, %c0_i32_1 : i32, i32, i32
  }
  func.func @transform_27(%arg0: i32) -> (i32, i32) {
    %c0_i32 = arith.constant 0 : i32
    %c0_i32_0 = arith.constant 0 : i32
    %c0_i32_1 = arith.constant 0 : i32
    return %c0_i32, %c0_i32_0 : i32, i32
  }
  func.func @transform_28(%arg0: i32) -> (i32, i32) {
    %c0_i32 = arith.constant 0 : i32
    %c0_i32_0 = arith.constant 0 : i32
    %c0_i32_1 = arith.constant 0 : i32
    return %c0_i32, %c0_i32_0 : i32, i32
  }
  func.func @transform_29(%arg0: i32) -> (i32, i32) {
    %c0_i32 = arith.constant 0 : i32
    %c0_i32_0 = arith.constant 0 : i32
    %c0_i32_1 = arith.constant 0 : i32
    return %c0_i32, %c0_i32_0 : i32, i32
  }
  func.func @transform_30(%arg0: i32) -> (i32, i32) {
    %c0_i32 = arith.constant 0 : i32
    %c0_i32_0 = arith.constant 0 : i32
    %c0_i32_1 = arith.constant 0 : i32
    return %c0_i32, %c0_i32_0 : i32, i32
  }
  func.func @transform_31(%arg0: i32) -> (i32, i32) {
    %c0_i32 = arith.constant 0 : i32
    %c0_i32_0 = arith.constant 0 : i32
    %c0_i32_1 = arith.constant 0 : i32
    return %c0_i32, %c0_i32_0 : i32, i32
  }
  func.func @transform_32(%arg0: i32) -> (i32, i32) {
    %c0_i32 = arith.constant 0 : i32
    %c0_i32_0 = arith.constant 0 : i32
    %c0_i32_1 = arith.constant 0 : i32
    return %c0_i32, %c0_i32_0 : i32, i32
  }
  func.func @transform_33(%arg0: i32) -> (i32, i32) {
    %c0_i32 = arith.constant 0 : i32
    %c0_i32_0 = arith.constant 0 : i32
    %c0_i32_1 = arith.constant 0 : i32
    return %c0_i32, %c0_i32_0 : i32, i32
  }
  func.func @transform_34(%arg0: i32) -> (i32, i32) {
    %c0_i32 = arith.constant 0 : i32
    %c0_i32_0 = arith.constant 0 : i32
    %c0_i32_1 = arith.constant 0 : i32
    return %c0_i32, %c0_i32_0 : i32, i32
  }
  func.func @transform_35(%arg0: i32) -> (i32, i32, i32) {
    %c0_i32 = arith.constant 0 : i32
    %c0_i32_0 = arith.constant 0 : i32
    %c0_i32_1 = arith.constant 0 : i32
    return %arg0, %c0_i32, %c0_i32_0 : i32, i32, i32
  }
}

</mosaic_0001>

<llo_original>
// kernel: tpu_custom_call.1
$region0: #{tpu_custom_call.1}
  #allocation0 [shape = 'u32[]', space=smem, size = 0x4, offset = 0x4, fixed_abs, tag = 'smem constant byte address 0x4 - core index']
  #allocation1 [shape = 'u32[144,128]{1,0:T(1,128)}', space=vmem, size = 0x12000, scoped, tag = 'internal scratch']
  %s0 = inlined_call_operand.smem [shape: u32[36], index: -1, kind: input, shape index: {}]
  %s1 = sld [smem:[%s0]]
  %s2 = scalar_lea.smem %s0, 1
  %s3 = sld [smem:[%s2]]
  %s4 = scalar_lea.smem %s0, 2
  %s5 = sld [smem:[%s4]]
  %s6 = scalar_lea.smem %s0, 3
  %s7 = sld [smem:[%s6]]
  %s8 = scalar_lea.smem %s0, 4
  %s9 = sld [smem:[%s8]]
  %s10 = scalar_lea.smem %s0, 5
  %s11 = sld [smem:[%s10]]
  %s12 = scalar_lea.smem %s0, 6
  %s13 = sld [smem:[%s12]]
  %s14 = scalar_lea.smem %s0, 7
  %s15 = sld [smem:[%s14]]
  %s16 = scalar_lea.smem %s0, 8
  %s17 = sld [smem:[%s16]]
  %s18 = scalar_lea.smem %s0, 9
  %s19 = sld [smem:[%s18]]
  %s20 = scalar_lea.smem %s0, 10
  %s21 = sld [smem:[%s20]]
  %s22 = scalar_lea.smem %s0, 11
  %s23 = sld [smem:[%s22]]
  %s24 = scalar_lea.smem %s0, 12
  %s25 = sld [smem:[%s24]]
  %s26 = scalar_lea.smem %s0, 13
  %s27 = sld [smem:[%s26]]
  %s28 = scalar_lea.smem %s0, 14
  %s29 = sld [smem:[%s28]]
  %s30 = scalar_lea.smem %s0, 15
  %s31 = sld [smem:[%s30]]
  %s32 = scalar_lea.smem %s0, 16
  %s33 = sld [smem:[%s32]]
  %s34 = scalar_lea.smem %s0, 17
  %s35 = sld [smem:[%s34]]
  %s36 = scalar_lea.smem %s0, 18
  %s37 = sld [smem:[%s36]]
  %s38 = scalar_lea.smem %s0, 19
  %s39 = sld [smem:[%s38]]
  %s40 = scalar_lea.smem %s0, 20
  %s41 = sld [smem:[%s40]]
  %s42 = scalar_lea.smem %s0, 21
  %s43 = sld [smem:[%s42]]
  %s44 = scalar_lea.smem %s0, 22
  %s45 = sld [smem:[%s44]]
  %s46 = scalar_lea.smem %s0, 23
  %s47 = sld [smem:[%s46]]
  %s48 = scalar_lea.smem %s0, 24
  %s49 = sld [smem:[%s48]]
  %s50 = scalar_lea.smem %s0, 25
  %s51 = sld [smem:[%s50]]
  %s52 = scalar_lea.smem %s0, 26
  %s53 = sld [smem:[%s52]]
  %s54 = scalar_lea.smem %s0, 27
  %s55 = sld [smem:[%s54]]
  %s56 = scalar_lea.smem %s0, 28
  %s57 = sld [smem:[%s56]]
  %s58 = scalar_lea.smem %s0, 29
  %s59 = sld [smem:[%s58]]
  %s60 = scalar_lea.smem %s0, 30
  %s61 = sld [smem:[%s60]]
  %s62 = scalar_lea.smem %s0, 31
  %s63 = sld [smem:[%s62]]
  %s64 = scalar_lea.smem %s0, 32
  %s65 = sld [smem:[%s64]]
  %s66 = scalar_lea.smem %s0, 33
  %s67 = sld [smem:[%s66]]
  %s68 = scalar_lea.smem %s0, 34
  %s69 = sld [smem:[%s68]]
  %s70 = scalar_lea.smem %s0, 35
  %s71 = sld [smem:[%s70]]
  %s72 = sld [smem:[#allocation0]]
  $region253: #{tpu_custom_call.1} parent=0
    _
  %s74 = ssub.s32 1, %s72
  %s75 = scalar_select 0, %s74, %s72
  $region1: #{tpu_custom_call.1} parent=0
    #allocation2 [shape = 'u8[12288]{0}', space=vmem, size = 0x3000, scoped, tag = 'input window, operand 1, single buffered']
    #allocation3 [shape = 's32[2]{0}', space=sflag, size = 0x8, scoped, tag = 'scoped memory for tpu_custom_call.1']
    #allocation4 [shape = 's32[2]{0}', space=sflag, size = 0x8, scoped, tag = 'scoped memory for tpu_custom_call.1']
    #allocation5 [shape = 'u8[12288]{0}', space=vmem, size = 0x3000, scoped, tag = 'input window, operand 2, single buffered']
    #allocation6 [shape = 's32[1]{0}', space=sflag, size = 0x4, scoped, tag = 'scoped memory for tpu_custom_call.1']
    #allocation7 [shape = 'u8[32768]{0}', space=vmem, size = 0x8000, scoped, tag = 'input window, operand 6, single buffered']
    #allocation8 [shape = 'u8[98304]{0}', space=vmem, size = 0x18000, scoped, tag = 'input window, operand 8, single buffered']
    #allocation9 [shape = 's32[1]{0}', space=sflag, size = 0x4, scoped, tag = 'scoped memory for tpu_custom_call.1']
    #allocation10 [shape = 'u8[512]{0}', space=vmem, size = 0x400, scoped, tag = 'input window, operand 9, single buffered']
    #allocation11 [shape = 'u8[32768]{0}', space=vmem, size = 0x8000, scoped, tag = 'input window, operand 10, single buffered']
    #allocation12 [shape = 's32[1]{0}', space=sflag, size = 0x4, scoped, tag = 'scoped memory for tpu_custom_call.1']
    #allocation13 [shape = 'u8[512]{0}', space=vmem, size = 0x400, scoped, tag = 'input window, operand 11, single buffered']
    #allocation14 [shape = 'u8[512]{0}', space=vmem, size = 0x400, scoped, tag = 'input window, operand 12, single buffered']
    #allocation15 [shape = 's32[1]{0}', space=sflag, size = 0x4, scoped, tag = 'scoped memory for tpu_custom_call.1']
    #allocation16 [shape = 'u8[98304]{0}', space=vmem, size = 0x18000, scoped, tag = 'input window, operand 13, single buffered']
    #allocation17 [shape = 'u8[98304]{0}', space=vmem, size = 0x18000, scoped, tag = 'input window, operand 14, single buffered']
    #allocation18 [shape = 's32[1]{0}', space=sflag, size = 0x4, scoped, tag = 'scoped memory for tpu_custom_call.1']
    #allocation19 [shape = 'u8[512]{0}', space=vmem, size = 0x400, scoped, tag = 'input window, operand 15, single buffered']
    #allocation20 [shape = 'u8[512]{0}', space=vmem, size = 0x400, scoped, tag = 'input window, operand 16, single buffered']
    #allocation21 [shape = 's32[1]{0}', space=sflag, size = 0x4, scoped, tag = 'scoped memory for tpu_custom_call.1']
    #allocation22 [shape = 'u8[32768]{0}', space=vmem, size = 0x8000, scoped, tag = 'input window, operand 17, single buffered']
    #allocation23 [shape = 'u8[32768]{0}', space=vmem, size = 0x8000, scoped, tag = 'input window, operand 18, single buffered']
    #allocation24 [shape = 's32[1]{0}', space=sflag, size = 0x4, scoped, tag = 'scoped memory for tpu_custom_call.1']
    #allocation25 [shape = 'u8[512]{0}', space=vmem, size = 0x400, scoped, tag = 'input window, operand 19, single buffered']
    #allocation26 [shape = 'u8[512]{0}', space=vmem, size = 0x400, scoped, tag = 'input window, operand 21, single buffered']
    #allocation27 [shape = 's32[1]{0}', space=sflag, size = 0x4, scoped, tag = 'scoped memory for tpu_custom_call.1']
    #allocation28 [shape = 'u8[32768]{0}', space=vmem, size = 0x8000, scoped, tag = 'input window, operand 22, single buffered']
    #allocation29 [shape = 'u8[131072]{0}', space=vmem, size = 0x20000, scoped, tag = 'input window, operand 25, single buffered']
    #allocation30 [shape = 's32[1]{0}', space=sflag, size = 0x4, scoped, tag = 'scoped memory for tpu_custom_call.1']
    #allocation31 [shape = 'u8[131072]{0}', space=vmem, size = 0x20000, scoped, tag = 'input window, operand 26, single buffered']
    #allocation32 [shape = 'u8[32768]{0}', space=vmem, size = 0x8000, scoped, tag = 'input window, operand 31, single buffered']
    #allocation33 [shape = 's32[1]{0}', space=sflag, size = 0x4, scoped, tag = 'scoped memory for tpu_custom_call.1']
    #allocation34 [shape = 'u8[1024]{0}', space=vmem, size = 0x400, scoped, tag = 'output window, operand 0']
    %76 = vsyncpa [#allocation3], 0
    %77 = vsyncpa [#allocation6], 0
    %78 = vsyncpa [#allocation9], 0
    %79 = vsyncpa [#allocation12], 0
    %80 = vsyncpa [#allocation15], 0
    %81 = vsyncpa [#allocation18], 0
    %82 = vsyncpa [#allocation21], 0
    %83 = vsyncpa [#allocation24], 0
    %84 = vsyncpa [#allocation27], 0
    %85 = vsyncpa [#allocation30], 0
    %86 = vsyncpa [#allocation33], 0
    %87 = vsyncpa [#allocation4], 0
    %s88 = scalar_lea.sflag [#allocation4], 1
    %89 = vsyncpa %s88, 0
    loop: start=0, step=1, limit=4
    $region2: #{tpu_custom_call.1} parent=1 // loop_pre_header
      _
    $region3: #{tpu_custom_call.1} parent=1 // loop_header
      %s91 = sphi 0, %s95
      %p92 = scmp.ge.s32.totalorder %s91, 4
      %s101 = sphi 0, %s103
      %s104 = sphi 0, %s101
      %s105 = sphi 0, %s104
      %s121 = sphi 0, %s105
      %s125 = sphi 0, %s125
      %s127 = sphi 0, %s125
      %s128 = sphi 0, %s127
      %s142 = sphi 0, %s128
      %s146 = sphi 0, %s146
      %s148 = sphi 0, %s146
      %s149 = sphi 0, %s148
      %s163 = sphi 0, %s149
      %s167 = sphi 0, %s167
      %s169 = sphi 0, %s167
      %s170 = sphi 0, %s169
      %s184 = sphi 0, %s170
      %s188 = sphi 0, %s188
      %s190 = sphi 0, %s188
      %s191 = sphi 0, %s190
      %s205 = sphi 0, %s191
      %s209 = sphi 0, %s209
      %s211 = sphi 0, %s209
      %s212 = sphi 0, %s211
      %s226 = sphi 0, %s212
      %s230 = sphi 0, %s230
      %s232 = sphi 0, %s230
      %s233 = sphi 0, %s232
      %s247 = sphi 0, %s233
      %s251 = sphi 0, %s251
      %s253 = sphi 0, %s251
      %s254 = sphi 0, %s253
      %s268 = sphi 0, %s254
      %s272 = sphi 0, %s272
      %s274 = sphi 0, %s272
      %s275 = sphi 0, %s274
      %s289 = sphi 0, %s275
      %s293 = sphi 0, %s293
      %s295 = sphi 0, %s293
      %s296 = sphi 0, %s295
      %s310 = sphi 0, %s296
      %s314 = sphi 0, %s314
      %s316 = sphi 0, %s314
      %s317 = sphi 0, %s316
      %s331 = sphi 0, %s317
      %s335 = sphi 0, %s335
      %s337 = sphi 0, %s335
      %s338 = sphi 0, %s337
      %s352 = sphi 0, %s338
      %s356 = sphi 0, %s356
      %s358 = sphi 0, %s356
      %s359 = sphi 0, %s358
      %s373 = sphi 0, %s359
      %s377 = sphi 0, %s377
      %s379 = sphi 0, %s377
      %s380 = sphi 0, %s379
      %s394 = sphi 0, %s380
      %s398 = sphi 0, %s398
      %s400 = sphi 0, %s398
      %s401 = sphi 0, %s400
      %s415 = sphi 0, %s401
      %s419 = sphi 0, %s419
      %s421 = sphi 0, %s419
      %s422 = sphi 0, %s421
      %s436 = sphi 0, %s422
      %s440 = sphi 0, %s440
      %s442 = sphi 0, %s440
      %s443 = sphi 0, %s442
      %s457 = sphi 0, %s443
      %s461 = sphi 0, %s461
      %s463 = sphi 0, %s461
      %s464 = sphi 0, %s463
      %s478 = sphi 0, %s464
      %s482 = sphi 0, %s482
      %s484 = sphi 0, %s482
      %s485 = sphi 0, %s484
      %s499 = sphi 0, %s485
      %s503 = sphi 0, %s503
      %s505 = sphi 0, %s503
      %s506 = sphi 0, %s505
      %s520 = sphi 0, %s506
      %s524 = sphi 0, %s524
      %s526 = sphi 0, %s524
      %s527 = sphi 0, %s526
      %s541 = sphi 0, %s527
      %s545 = sphi 0, %s545
      %s547 = sphi 0, %s545
      %s548 = sphi 0, %s547
      %s562 = sphi 0, %s548
      %s566 = sphi 0, %s566
      %s568 = sphi 0, %s566
      %s569 = sphi 0, %s568
      %s583 = sphi 0, %s569
      %s587 = sphi 0, %s587
      %s589 = sphi 0, %s587
      %s590 = sphi 0, %s589
      %s604 = sphi 0, %s590
      %s608 = sphi 0, %s608
      %s610 = sphi 0, %s608
      %s611 = sphi 0, %s610
      %s625 = sphi 0, %s611
      %s629 = sphi 0, %s629
      %s631 = sphi 0, %s629
      %s632 = sphi 0, %s631
      %s646 = sphi 0, %s632
      %s650 = sphi 0, %s650
      %s652 = sphi 0, %s650
      %s653 = sphi 0, %s652
      %s667 = sphi 0, %s653
      %s671 = sphi 0, %s671
      %s673 = sphi 0, %s671
      %s674 = sphi 0, %s673
      %s688 = sphi 0, %s674
      %s692 = sphi 0, %s692
      %s694 = sphi 0, %s692
      %s695 = sphi 0, %s694
      %s709 = sphi 0, %s695
      %s713 = sphi 0, %s713
      %s715 = sphi 0, %s713
      %s716 = sphi 0, %s715
      %s730 = sphi 0, %s716
      %s734 = sphi 0, %s734
      %s736 = sphi 0, %s734
      %s737 = sphi 0, %s736
      %s751 = sphi 0, %s737
      %s755 = sphi 0, %s755
      %s757 = sphi 0, %s755
      %s758 = sphi 0, %s757
      %s772 = sphi 0, %s758
      %s776 = sphi 0, %s776
      %s778 = sphi 0, %s776
      %s779 = sphi 0, %s778
      %s793 = sphi 0, %s779
      %s797 = sphi 0, %s797
      %s799 = sphi 0, %s797
      %s800 = sphi 0, %s799
      %s814 = sphi 0, %s800
      %s818 = sphi 0, %s818
      %s820 = sphi 0, %s818
      %s821 = sphi 0, %s820
      %s835 = sphi 0, %s821
      %s841 = sphi 0, %s843
      %s844 = sphi 0, %s841
      %s845 = sphi 0, %s844
      %s861 = sphi 0, %s845
    $region4: #{tpu_custom_call.1} parent=1 // loop_header_branch
      %94 = sbr.rel (%p92) target = $region8
    $region5: #{tpu_custom_call.1} parent=1 // loop_body
      %s96 = ssub.s32 %s91, 1
      %s97 = ssub.s32 %s91, 2
      %s98 = sadd.s32 %s91, 1
      %s99 = ssub.s32 %s91, %s98
      %p100 = scmp.eq.s32.totalorder %s99, 0
      %s102 = sadd.s32 %s101, 1
      %s103 = scalar_select %p100, %s101, %s102
      %p106 = pneg %p100
      %p107 = scmp.eq.s32.totalorder %s91, 1
      %p108 = por %p106, %p107
      %p109 = scmp.ne.s32.totalorder %s101, %s104
      %p110 = scmp.eq.s32.totalorder %s91, 0
      %p111 = por %p109, %p110
      %p112 = scmp.ne.s32.totalorder %s101, %s104
      %p113 = scmp.eq.s32.totalorder %s96, 1
      %p114 = por %p112, %p113
      %p115 = scmp.ne.s32.totalorder %s104, %s105
      %p116 = scmp.eq.s32.totalorder %s96, 0
      %p117 = por %p115, %p116
      %p118 = scmp.ne.s32.totalorder %s104, %s105
      %p119 = scmp.eq.s32.totalorder %s97, 1
      %p120 = por %p118, %p119
      %p122 = scmp.ne.s32.totalorder %s105, %s121
      %p123 = scmp.eq.s32.totalorder %s97, 0
      %p124 = por %p122, %p123
      %s126 = sadd.s32 %s125, 1
      %p129 = scmp.eq.s32.totalorder %s91, 1
      %p130 = scmp.ne.s32.totalorder %s125, %s127
      %p131 = scmp.eq.s32.totalorder %s91, 0
      %p132 = por %p130, %p131
      %p133 = scmp.ne.s32.totalorder %s125, %s127
      %p134 = scmp.eq.s32.totalorder %s96, 1
      %p135 = por %p133, %p134
      %p136 = scmp.ne.s32.totalorder %s127, %s128
      %p137 = scmp.eq.s32.totalorder %s96, 0
      %p138 = por %p136, %p137
      %p139 = scmp.ne.s32.totalorder %s127, %s128
      %p140 = scmp.eq.s32.totalorder %s97, 1
      %p141 = por %p139, %p140
      %p143 = scmp.ne.s32.totalorder %s128, %s142
      %p144 = scmp.eq.s32.totalorder %s97, 0
      %p145 = por %p143, %p144
      %s147 = sadd.s32 %s146, 1
      %p150 = scmp.eq.s32.totalorder %s91, 1
      %p151 = scmp.ne.s32.totalorder %s146, %s148
      %p152 = scmp.eq.s32.totalorder %s91, 0
      %p153 = por %p151, %p152
      %p154 = scmp.ne.s32.totalorder %s146, %s148
      %p155 = scmp.eq.s32.totalorder %s96, 1
      %p156 = por %p154, %p155
      %p157 = scmp.ne.s32.totalorder %s148, %s149
      %p158 = scmp.eq.s32.totalorder %s96, 0
      %p159 = por %p157, %p158
      %p160 = scmp.ne.s32.totalorder %s148, %s149
      %p161 = scmp.eq.s32.totalorder %s97, 1
      %p162 = por %p160, %p161
      %p164 = scmp.ne.s32.totalorder %s149, %s163
      %p165 = scmp.eq.s32.totalorder %s97, 0
      %p166 = por %p164, %p165
      %s168 = sadd.s32 %s167, 1
      %p171 = scmp.eq.s32.totalorder %s91, 1
      %p172 = scmp.ne.s32.totalorder %s167, %s169
      %p173 = scmp.eq.s32.totalorder %s91, 0
      %p174 = por %p172, %p173
      %p175 = scmp.ne.s32.totalorder %s167, %s169
      %p176 = scmp.eq.s32.totalorder %s96, 1
      %p177 = por %p175, %p176
      %p178 = scmp.ne.s32.totalorder %s169, %s170
      %p179 = scmp.eq.s32.totalorder %s96, 0
      %p180 = por %p178, %p179
      %p181 = scmp.ne.s32.totalorder %s169, %s170
      %p182 = scmp.eq.s32.totalorder %s97, 1
      %p183 = por %p181, %p182
      %p185 = scmp.ne.s32.totalorder %s170, %s184
      %p186 = scmp.eq.s32.totalorder %s97, 0
      %p187 = por %p185, %p186
      %s189 = sadd.s32 %s188, 1
      %p192 = scmp.eq.s32.totalorder %s91, 1
      %p193 = scmp.ne.s32.totalorder %s188, %s190
      %p194 = scmp.eq.s32.totalorder %s91, 0
      %p195 = por %p193, %p194
      %p196 = scmp.ne.s32.totalorder %s188, %s190
      %p197 = scmp.eq.s32.totalorder %s96, 1
      %p198 = por %p196, %p197
      %p199 = scmp.ne.s32.totalorder %s190, %s191
      %p200 = scmp.eq.s32.totalorder %s96, 0
      %p201 = por %p199, %p200
      %p202 = scmp.ne.s32.totalorder %s190, %s191
      %p203 = scmp.eq.s32.totalorder %s97, 1
      %p204 = por %p202, %p203
      %p206 = scmp.ne.s32.totalorder %s191, %s205
      %p207 = scmp.eq.s32.totalorder %s97, 0
      %p208 = por %p206, %p207
      %s210 = sadd.s32 %s209, 1
      %p213 = scmp.eq.s32.totalorder %s91, 1
      %p214 = scmp.ne.s32.totalorder %s209, %s211
      %p215 = scmp.eq.s32.totalorder %s91, 0
      %p216 = por %p214, %p215
      %p217 = scmp.ne.s32.totalorder %s209, %s211
      %p218 = scmp.eq.s32.totalorder %s96, 1
      %p219 = por %p217, %p218
      %p220 = scmp.ne.s32.totalorder %s211, %s212
      %p221 = scmp.eq.s32.totalorder %s96, 0
      %p222 = por %p220, %p221
      %p223 = scmp.ne.s32.totalorder %s211, %s212
      %p224 = scmp.eq.s32.totalorder %s97, 1
      %p225 = por %p223, %p224
      %p227 = scmp.ne.s32.totalorder %s212, %s226
      %p228 = scmp.eq.s32.totalorder %s97, 0
      %p229 = por %p227, %p228
      %s231 = sadd.s32 %s230, 1
      %p234 = scmp.eq.s32.totalorder %s91, 1
      %p235 = scmp.ne.s32.totalorder %s230, %s232
      %p236 = scmp.eq.s32.totalorder %s91, 0
      %p237 = por %p235, %p236
      %p238 = scmp.ne.s32.totalorder %s230, %s232
      %p239 = scmp.eq.s32.totalorder %s96, 1
      %p240 = por %p238, %p239
      %p241 = scmp.ne.s32.totalorder %s232, %s233
      %p242 = scmp.eq.s32.totalorder %s96, 0
      %p243 = por %p241, %p242
      %p244 = scmp.ne.s32.totalorder %s232, %s233
      %p245 = scmp.eq.s32.totalorder %s97, 1
      %p246 = por %p244, %p245
      %p248 = scmp.ne.s32.totalorder %s233, %s247
      %p249 = scmp.eq.s32.totalorder %s97, 0
      %p250 = por %p248, %p249
      %s252 = sadd.s32 %s251, 1
      %p255 = scmp.eq.s32.totalorder %s91, 1
      %p256 = scmp.ne.s32.totalorder %s251, %s253
      %p257 = scmp.eq.s32.totalorder %s91, 0
      %p258 = por %p256, %p257
      %p259 = scmp.ne.s32.totalorder %s251, %s253
      %p260 = scmp.eq.s32.totalorder %s96, 1
      %p261 = por %p259, %p260
      %p262 = scmp.ne.s32.totalorder %s253, %s254
      %p263 = scmp.eq.s32.totalorder %s96, 0
      %p264 = por %p262, %p263
      %p265 = scmp.ne.s32.totalorder %s253, %s254
      %p266 = scmp.eq.s32.totalorder %s97, 1
      %p267 = por %p265, %p266
      %p269 = scmp.ne.s32.totalorder %s254, %s268
      %p270 = scmp.eq.s32.totalorder %s97, 0
      %p271 = por %p269, %p270
      %s273 = sadd.s32 %s272, 1
      %p276 = scmp.eq.s32.totalorder %s91, 1
      %p277 = scmp.ne.s32.totalorder %s272, %s274
      %p278 = scmp.eq.s32.totalorder %s91, 0
      %p279 = por %p277, %p278
      %p280 = scmp.ne.s32.totalorder %s272, %s274
      %p281 = scmp.eq.s32.totalorder %s96, 1
      %p282 = por %p280, %p281
      %p283 = scmp.ne.s32.totalorder %s274, %s275
      %p284 = scmp.eq.s32.totalorder %s96, 0
      %p285 = por %p283, %p284
      %p286 = scmp.ne.s32.totalorder %s274, %s275
      %p287 = scmp.eq.s32.totalorder %s97, 1
      %p288 = por %p286, %p287
      %p290 = scmp.ne.s32.totalorder %s275, %s289
      %p291 = scmp.eq.s32.totalorder %s97, 0
      %p292 = por %p290, %p291
      %s294 = sadd.s32 %s293, 1
      %p297 = scmp.eq.s32.totalorder %s91, 1
      %p298 = scmp.ne.s32.totalorder %s293, %s295
      %p299 = scmp.eq.s32.totalorder %s91, 0
      %p300 = por %p298, %p299
      %p301 = scmp.ne.s32.totalorder %s293, %s295
      %p302 = scmp.eq.s32.totalorder %s96, 1
      %p303 = por %p301, %p302
      %p304 = scmp.ne.s32.totalorder %s295, %s296
      %p305 = scmp.eq.s32.totalorder %s96, 0
      %p306 = por %p304, %p305
      %p307 = scmp.ne.s32.totalorder %s295, %s296
      %p308 = scmp.eq.s32.totalorder %s97, 1
      %p309 = por %p307, %p308
      %p311 = scmp.ne.s32.totalorder %s296, %s310
      %p312 = scmp.eq.s32.totalorder %s97, 0
      %p313 = por %p311, %p312
      %s315 = sadd.s32 %s314, 1
      %p318 = scmp.eq.s32.totalorder %s91, 1
      %p319 = scmp.ne.s32.totalorder %s314, %s316
      %p320 = scmp.eq.s32.totalorder %s91, 0
      %p321 = por %p319, %p320
      %p322 = scmp.ne.s32.totalorder %s314, %s316
      %p323 = scmp.eq.s32.totalorder %s96, 1
      %p324 = por %p322, %p323
      %p325 = scmp.ne.s32.totalorder %s316, %s317
      %p326 = scmp.eq.s32.totalorder %s96, 0
      %p327 = por %p325, %p326
      %p328 = scmp.ne.s32.totalorder %s316, %s317
      %p329 = scmp.eq.s32.totalorder %s97, 1
      %p330 = por %p328, %p329
      %p332 = scmp.ne.s32.totalorder %s317, %s331
      %p333 = scmp.eq.s32.totalorder %s97, 0
      %p334 = por %p332, %p333
      %s336 = sadd.s32 %s335, 1
      %p339 = scmp.eq.s32.totalorder %s91, 1
      %p340 = scmp.ne.s32.totalorder %s335, %s337
      %p341 = scmp.eq.s32.totalorder %s91, 0
      %p342 = por %p340, %p341
      %p343 = scmp.ne.s32.totalorder %s335, %s337
      %p344 = scmp.eq.s32.totalorder %s96, 1
      %p345 = por %p343, %p344
      %p346 = scmp.ne.s32.totalorder %s337, %s338
      %p347 = scmp.eq.s32.totalorder %s96, 0
      %p348 = por %p346, %p347
      %p349 = scmp.ne.s32.totalorder %s337, %s338
      %p350 = scmp.eq.s32.totalorder %s97, 1
      %p351 = por %p349, %p350
      %p353 = scmp.ne.s32.totalorder %s338, %s352
      %p354 = scmp.eq.s32.totalorder %s97, 0
      %p355 = por %p353, %p354
      %s357 = sadd.s32 %s356, 1
      %p360 = scmp.eq.s32.totalorder %s91, 1
      %p361 = scmp.ne.s32.totalorder %s356, %s358
      %p362 = scmp.eq.s32.totalorder %s91, 0
      %p363 = por %p361, %p362
      %p364 = scmp.ne.s32.totalorder %s356, %s358
      %p365 = scmp.eq.s32.totalorder %s96, 1
      %p366 = por %p364, %p365
      %p367 = scmp.ne.s32.totalorder %s358, %s359
      %p368 = scmp.eq.s32.totalorder %s96, 0
      %p369 = por %p367, %p368
      %p370 = scmp.ne.s32.totalorder %s358, %s359
      %p371 = scmp.eq.s32.totalorder %s97, 1
      %p372 = por %p370, %p371
      %p374 = scmp.ne.s32.totalorder %s359, %s373
      %p375 = scmp.eq.s32.totalorder %s97, 0
      %p376 = por %p374, %p375
      %s378 = sadd.s32 %s377, 1
      %p381 = scmp.eq.s32.totalorder %s91, 1
      %p382 = scmp.ne.s32.totalorder %s377, %s379
      %p383 = scmp.eq.s32.totalorder %s91, 0
      %p384 = por %p382, %p383
      %p385 = scmp.ne.s32.totalorder %s377, %s379
      %p386 = scmp.eq.s32.totalorder %s96, 1
      %p387 = por %p385, %p386
      %p388 = scmp.ne.s32.totalorder %s379, %s380
      %p389 = scmp.eq.s32.totalorder %s96, 0
      %p390 = por %p388, %p389
      %p391 = scmp.ne.s32.totalorder %s379, %s380
      %p392 = scmp.eq.s32.totalorder %s97, 1
      %p393 = por %p391, %p392
      %p395 = scmp.ne.s32.totalorder %s380, %s394
      %p396 = scmp.eq.s32.totalorder %s97, 0
      %p397 = por %p395, %p396
      %s399 = sadd.s32 %s398, 1
      %p402 = scmp.eq.s32.totalorder %s91, 1
      %p403 = scmp.ne.s32.totalorder %s398, %s400
      %p404 = scmp.eq.s32.totalorder %s91, 0
      %p405 = por %p403, %p404
      %p406 = scmp.ne.s32.totalorder %s398, %s400
      %p407 = scmp.eq.s32.totalorder %s96, 1
      %p408 = por %p406, %p407
      %p409 = scmp.ne.s32.totalorder %s400, %s401
      %p410 = scmp.eq.s32.totalorder %s96, 0
      %p411 = por %p409, %p410
      %p412 = scmp.ne.s32.totalorder %s400, %s401
      %p413 = scmp.eq.s32.totalorder %s97, 1
      %p414 = por %p412, %p413
      %p416 = scmp.ne.s32.totalorder %s401, %s415
      %p417 = scmp.eq.s32.totalorder %s97, 0
      %p418 = por %p416, %p417
      %s420 = sadd.s32 %s419, 1
      %p423 = scmp.eq.s32.totalorder %s91, 1
      %p424 = scmp.ne.s32.totalorder %s419, %s421
      %p425 = scmp.eq.s32.totalorder %s91, 0
      %p426 = por %p424, %p425
      %p427 = scmp.ne.s32.totalorder %s419, %s421
      %p428 = scmp.eq.s32.totalorder %s96, 1
      %p429 = por %p427, %p428
      %p430 = scmp.ne.s32.totalorder %s421, %s422
      %p431 = scmp.eq.s32.totalorder %s96, 0
      %p432 = por %p430, %p431
      %p433 = scmp.ne.s32.totalorder %s421, %s422
      %p434 = scmp.eq.s32.totalorder %s97, 1
      %p435 = por %p433, %p434
      %p437 = scmp.ne.s32.totalorder %s422, %s436
      %p438 = scmp.eq.s32.totalorder %s97, 0
      %p439 = por %p437, %p438
      %s441 = sadd.s32 %s440, 1
      %p444 = scmp.eq.s32.totalorder %s91, 1
      %p445 = scmp.ne.s32.totalorder %s440, %s442
      %p446 = scmp.eq.s32.totalorder %s91, 0
      %p447 = por %p445, %p446
      %p448 = scmp.ne.s32.totalorder %s440, %s442
      %p449 = scmp.eq.s32.totalorder %s96, 1
      %p450 = por %p448, %p449
      %p451 = scmp.ne.s32.totalorder %s442, %s443
      %p452 = scmp.eq.s32.totalorder %s96, 0
      %p453 = por %p451, %p452
      %p454 = scmp.ne.s32.totalorder %s442, %s443
      %p455 = scmp.eq.s32.totalorder %s97, 1
      %p456 = por %p454, %p455
      %p458 = scmp.ne.s32.totalorder %s443, %s457
      %p459 = scmp.eq.s32.totalorder %s97, 0
      %p460 = por %p458, %p459
      %s462 = sadd.s32 %s461, 1
      %p465 = scmp.eq.s32.totalorder %s91, 1
      %p466 = scmp.ne.s32.totalorder %s461, %s463
      %p467 = scmp.eq.s32.totalorder %s91, 0
      %p468 = por %p466, %p467
      %p469 = scmp.ne.s32.totalorder %s461, %s463
      %p470 = scmp.eq.s32.totalorder %s96, 1
      %p471 = por %p469, %p470
      %p472 = scmp.ne.s32.totalorder %s463, %s464
      %p473 = scmp.eq.s32.totalorder %s96, 0
      %p474 = por %p472, %p473
      %p475 = scmp.ne.s32.totalorder %s463, %s464
      %p476 = scmp.eq.s32.totalorder %s97, 1
      %p477 = por %p475, %p476
      %p479 = scmp.ne.s32.totalorder %s464, %s478
      %p480 = scmp.eq.s32.totalorder %s97, 0
      %p481 = por %p479, %p480
      %s483 = sadd.s32 %s482, 1
      %p486 = scmp.eq.s32.totalorder %s91, 1
      %p487 = scmp.ne.s32.totalorder %s482, %s484
      %p488 = scmp.eq.s32.totalorder %s91, 0
      %p489 = por %p487, %p488
      %p490 = scmp.ne.s32.totalorder %s482, %s484
      %p491 = scmp.eq.s32.totalorder %s96, 1
      %p492 = por %p490, %p491
      %p493 = scmp.ne.s32.totalorder %s484, %s485
      %p494 = scmp.eq.s32.totalorder %s96, 0
      %p495 = por %p493, %p494
      %p496 = scmp.ne.s32.totalorder %s484, %s485
      %p497 = scmp.eq.s32.totalorder %s97, 1
      %p498 = por %p496, %p497
      %p500 = scmp.ne.s32.totalorder %s485, %s499
      %p501 = scmp.eq.s32.totalorder %s97, 0
      %p502 = por %p500, %p501
      %s504 = sadd.s32 %s503, 1
      %p507 = scmp.eq.s32.totalorder %s91, 1
      %p508 = scmp.ne.s32.totalorder %s503, %s505
      %p509 = scmp.eq.s32.totalorder %s91, 0
      %p510 = por %p508, %p509
      %p511 = scmp.ne.s32.totalorder %s503, %s505
      %p512 = scmp.eq.s32.totalorder %s96, 1
      %p513 = por %p511, %p512
      %p514 = scmp.ne.s32.totalorder %s505, %s506
      %p515 = scmp.eq.s32.totalorder %s96, 0
      %p516 = por %p514, %p515
      %p517 = scmp.ne.s32.totalorder %s505, %s506
      %p518 = scmp.eq.s32.totalorder %s97, 1
      %p519 = por %p517, %p518
      %p521 = scmp.ne.s32.totalorder %s506, %s520
      %p522 = scmp.eq.s32.totalorder %s97, 0
      %p523 = por %p521, %p522
      %s525 = sadd.s32 %s524, 1
      %p528 = scmp.eq.s32.totalorder %s91, 1
      %p529 = scmp.ne.s32.totalorder %s524, %s526
      %p530 = scmp.eq.s32.totalorder %s91, 0
      %p531 = por %p529, %p530
      %p532 = scmp.ne.s32.totalorder %s524, %s526
      %p533 = scmp.eq.s32.totalorder %s96, 1
      %p534 = por %p532, %p533
      %p535 = scmp.ne.s32.totalorder %s526, %s527
      %p536 = scmp.eq.s32.totalorder %s96, 0
      %p537 = por %p535, %p536
      %p538 = scmp.ne.s32.totalorder %s526, %s527
      %p539 = scmp.eq.s32.totalorder %s97, 1
      %p540 = por %p538, %p539
      %p542 = scmp.ne.s32.totalorder %s527, %s541
      %p543 = scmp.eq.s32.totalorder %s97, 0
      %p544 = por %p542, %p543
      %s546 = sadd.s32 %s545, 1
      %p549 = scmp.eq.s32.totalorder %s91, 1
      %p550 = scmp.ne.s32.totalorder %s545, %s547
      %p551 = scmp.eq.s32.totalorder %s91, 0
      %p552 = por %p550, %p551
      %p553 = scmp.ne.s32.totalorder %s545, %s547
      %p554 = scmp.eq.s32.totalorder %s96, 1
      %p555 = por %p553, %p554
      %p556 = scmp.ne.s32.totalorder %s547, %s548
      %p557 = scmp.eq.s32.totalorder %s96, 0
      %p558 = por %p556, %p557
      %p559 = scmp.ne.s32.totalorder %s547, %s548
      %p560 = scmp.eq.s32.totalorder %s97, 1
      %p561 = por %p559, %p560
      %p563 = scmp.ne.s32.totalorder %s548, %s562
      %p564 = scmp.eq.s32.totalorder %s97, 0
      %p565 = por %p563, %p564
      %s567 = sadd.s32 %s566, 1
      %p570 = scmp.eq.s32.totalorder %s91, 1
      %p571 = scmp.ne.s32.totalorder %s566, %s568
      %p572 = scmp.eq.s32.totalorder %s91, 0
      %p573 = por %p571, %p572
      %p574 = scmp.ne.s32.totalorder %s566, %s568
      %p575 = scmp.eq.s32.totalorder %s96, 1
      %p576 = por %p574, %p575
      %p577 = scmp.ne.s32.totalorder %s568, %s569
      %p578 = scmp.eq.s32.totalorder %s96, 0
      %p579 = por %p577, %p578
      %p580 = scmp.ne.s32.totalorder %s568, %s569
      %p581 = scmp.eq.s32.totalorder %s97, 1
      %p582 = por %p580, %p581
      %p584 = scmp.ne.s32.totalorder %s569, %s583
      %p585 = scmp.eq.s32.totalorder %s97, 0
      %p586 = por %p584, %p585
      %s588 = sadd.s32 %s587, 1
      %p591 = scmp.eq.s32.totalorder %s91, 1
      %p592 = scmp.ne.s32.totalorder %s587, %s589
      %p593 = scmp.eq.s32.totalorder %s91, 0
      %p594 = por %p592, %p593
      %p595 = scmp.ne.s32.totalorder %s587, %s589
      %p596 = scmp.eq.s32.totalorder %s96, 1
      %p597 = por %p595, %p596
      %p598 = scmp.ne.s32.totalorder %s589, %s590
      %p599 = scmp.eq.s32.totalorder %s96, 0
      %p600 = por %p598, %p599
      %p601 = scmp.ne.s32.totalorder %s589, %s590
      %p602 = scmp.eq.s32.totalorder %s97, 1
      %p603 = por %p601, %p602
      %p605 = scmp.ne.s32.totalorder %s590, %s604
      %p606 = scmp.eq.s32.totalorder %s97, 0
      %p607 = por %p605, %p606
      %s609 = sadd.s32 %s608, 1
      %p612 = scmp.eq.s32.totalorder %s91, 1
      %p613 = scmp.ne.s32.totalorder %s608, %s610
      %p614 = scmp.eq.s32.totalorder %s91, 0
      %p615 = por %p613, %p614
      %p616 = scmp.ne.s32.totalorder %s608, %s610
      %p617 = scmp.eq.s32.totalorder %s96, 1
      %p618 = por %p616, %p617
      %p619 = scmp.ne.s32.totalorder %s610, %s611
      %p620 = scmp.eq.s32.totalorder %s96, 0
      %p621 = por %p619, %p620
      %p622 = scmp.ne.s32.totalorder %s610, %s611
      %p623 = scmp.eq.s32.totalorder %s97, 1
      %p624 = por %p622, %p623
      %p626 = scmp.ne.s32.totalorder %s611, %s625
      %p627 = scmp.eq.s32.totalorder %s97, 0
      %p628 = por %p626, %p627
      %s630 = sadd.s32 %s629, 1
      %p633 = scmp.eq.s32.totalorder %s91, 1
      %p634 = scmp.ne.s32.totalorder %s629, %s631
      %p635 = scmp.eq.s32.totalorder %s91, 0
      %p636 = por %p634, %p635
      %p637 = scmp.ne.s32.totalorder %s629, %s631
      %p638 = scmp.eq.s32.totalorder %s96, 1
      %p639 = por %p637, %p638
      %p640 = scmp.ne.s32.totalorder %s631, %s632
      %p641 = scmp.eq.s32.totalorder %s96, 0
      %p642 = por %p640, %p641
      %p643 = scmp.ne.s32.totalorder %s631, %s632
      %p644 = scmp.eq.s32.totalorder %s97, 1
      %p645 = por %p643, %p644
      %p647 = scmp.ne.s32.totalorder %s632, %s646
      %p648 = scmp.eq.s32.totalorder %s97, 0
      %p649 = por %p647, %p648
      %s651 = sadd.s32 %s650, 1
      %p654 = scmp.eq.s32.totalorder %s91, 1
      %p655 = scmp.ne.s32.totalorder %s650, %s652
      %p656 = scmp.eq.s32.totalorder %s91, 0
      %p657 = por %p655, %p656
      %p658 = scmp.ne.s32.totalorder %s650, %s652
      %p659 = scmp.eq.s32.totalorder %s96, 1
      %p660 = por %p658, %p659
      %p661 = scmp.ne.s32.totalorder %s652, %s653
      %p662 = scmp.eq.s32.totalorder %s96, 0
      %p663 = por %p661, %p662
      %p664 = scmp.ne.s32.totalorder %s652, %s653
      %p665 = scmp.eq.s32.totalorder %s97, 1
      %p666 = por %p664, %p665
      %p668 = scmp.ne.s32.totalorder %s653, %s667
      %p669 = scmp.eq.s32.totalorder %s97, 0
      %p670 = por %p668, %p669
      %s672 = sadd.s32 %s671, 1
      %p675 = scmp.eq.s32.totalorder %s91, 1
      %p676 = scmp.ne.s32.totalorder %s671, %s673
      %p677 = scmp.eq.s32.totalorder %s91, 0
      %p678 = por %p676, %p677
      %p679 = scmp.ne.s32.totalorder %s671, %s673
      %p680 = scmp.eq.s32.totalorder %s96, 1
      %p681 = por %p679, %p680
      %p682 = scmp.ne.s32.totalorder %s673, %s674
      %p683 = scmp.eq.s32.totalorder %s96, 0
      %p684 = por %p682, %p683
      %p685 = scmp.ne.s32.totalorder %s673, %s674
      %p686 = scmp.eq.s32.totalorder %s97, 1
      %p687 = por %p685, %p686
      %p689 = scmp.ne.s32.totalorder %s674, %s688
      %p690 = scmp.eq.s32.totalorder %s97, 0
      %p691 = por %p689, %p690
      %s693 = sadd.s32 %s692, 1
      %p696 = scmp.eq.s32.totalorder %s91, 1
      %p697 = scmp.ne.s32.totalorder %s692, %s694
      %p698 = scmp.eq.s32.totalorder %s91, 0
      %p699 = por %p697, %p698
      %p700 = scmp.ne.s32.totalorder %s692, %s694
      %p701 = scmp.eq.s32.totalorder %s96, 1
      %p702 = por %p700, %p701
      %p703 = scmp.ne.s32.totalorder %s694, %s695
      %p704 = scmp.eq.s32.totalorder %s96, 0
      %p705 = por %p703, %p704
      %p706 = scmp.ne.s32.totalorder %s694, %s695
      %p707 = scmp.eq.s32.totalorder %s97, 1
      %p708 = por %p706, %p707
      %p710 = scmp.ne.s32.totalorder %s695, %s709
      %p711 = scmp.eq.s32.totalorder %s97, 0
      %p712 = por %p710, %p711
      %s714 = sadd.s32 %s713, 1
      %p717 = scmp.eq.s32.totalorder %s91, 1
      %p718 = scmp.ne.s32.totalorder %s713, %s715
      %p719 = scmp.eq.s32.totalorder %s91, 0
      %p720 = por %p718, %p719
      %p721 = scmp.ne.s32.totalorder %s713, %s715
      %p722 = scmp.eq.s32.totalorder %s96, 1
      %p723 = por %p721, %p722
      %p724 = scmp.ne.s32.totalorder %s715, %s716
      %p725 = scmp.eq.s32.totalorder %s96, 0
      %p726 = por %p724, %p725
      %p727 = scmp.ne.s32.totalorder %s715, %s716
      %p728 = scmp.eq.s32.totalorder %s97, 1
      %p729 = por %p727, %p728
      %p731 = scmp.ne.s32.totalorder %s716, %s730
      %p732 = scmp.eq.s32.totalorder %s97, 0
      %p733 = por %p731, %p732
      %s735 = sadd.s32 %s734, 1
      %p738 = scmp.eq.s32.totalorder %s91, 1
      %p739 = scmp.ne.s32.totalorder %s734, %s736
      %p740 = scmp.eq.s32.totalorder %s91, 0
      %p741 = por %p739, %p740
      %p742 = scmp.ne.s32.totalorder %s734, %s736
      %p743 = scmp.eq.s32.totalorder %s96, 1
      %p744 = por %p742, %p743
      %p745 = scmp.ne.s32.totalorder %s736, %s737
      %p746 = scmp.eq.s32.totalorder %s96, 0
      %p747 = por %p745, %p746
      %p748 = scmp.ne.s32.totalorder %s736, %s737
      %p749 = scmp.eq.s32.totalorder %s97, 1
      %p750 = por %p748, %p749
      %p752 = scmp.ne.s32.totalorder %s737, %s751
      %p753 = scmp.eq.s32.totalorder %s97, 0
      %p754 = por %p752, %p753
      %s756 = sadd.s32 %s755, 1
      %p759 = scmp.eq.s32.totalorder %s91, 1
      %p760 = scmp.ne.s32.totalorder %s755, %s757
      %p761 = scmp.eq.s32.totalorder %s91, 0
      %p762 = por %p760, %p761
      %p763 = scmp.ne.s32.totalorder %s755, %s757
      %p764 = scmp.eq.s32.totalorder %s96, 1
      %p765 = por %p763, %p764
      %p766 = scmp.ne.s32.totalorder %s757, %s758
      %p767 = scmp.eq.s32.totalorder %s96, 0
      %p768 = por %p766, %p767
      %p769 = scmp.ne.s32.totalorder %s757, %s758
      %p770 = scmp.eq.s32.totalorder %s97, 1
      %p771 = por %p769, %p770
      %p773 = scmp.ne.s32.totalorder %s758, %s772
      %p774 = scmp.eq.s32.totalorder %s97, 0
      %p775 = por %p773, %p774
      %s777 = sadd.s32 %s776, 1
      %p780 = scmp.eq.s32.totalorder %s91, 1
      %p781 = scmp.ne.s32.totalorder %s776, %s778
      %p782 = scmp.eq.s32.totalorder %s91, 0
      %p783 = por %p781, %p782
      %p784 = scmp.ne.s32.totalorder %s776, %s778
      %p785 = scmp.eq.s32.totalorder %s96, 1
      %p786 = por %p784, %p785
      %p787 = scmp.ne.s32.totalorder %s778, %s779
      %p788 = scmp.eq.s32.totalorder %s96, 0
      %p789 = por %p787, %p788
      %p790 = scmp.ne.s32.totalorder %s778, %s779
      %p791 = scmp.eq.s32.totalorder %s97, 1
      %p792 = por %p790, %p791
      %p794 = scmp.ne.s32.totalorder %s779, %s793
      %p795 = scmp.eq.s32.totalorder %s97, 0
      %p796 = por %p794, %p795
      %s798 = sadd.s32 %s797, 1
      %p801 = scmp.eq.s32.totalorder %s91, 1
      %p802 = scmp.ne.s32.totalorder %s797, %s799
      %p803 = scmp.eq.s32.totalorder %s91, 0
      %p804 = por %p802, %p803
      %p805 = scmp.ne.s32.totalorder %s797, %s799
      %p806 = scmp.eq.s32.totalorder %s96, 1
      %p807 = por %p805, %p806
      %p808 = scmp.ne.s32.totalorder %s799, %s800
      %p809 = scmp.eq.s32.totalorder %s96, 0
      %p810 = por %p808, %p809
      %p811 = scmp.ne.s32.totalorder %s799, %s800
      %p812 = scmp.eq.s32.totalorder %s97, 1
      %p813 = por %p811, %p812
      %p815 = scmp.ne.s32.totalorder %s800, %s814
      %p816 = scmp.eq.s32.totalorder %s97, 0
      %p817 = por %p815, %p816
      %s819 = sadd.s32 %s818, 1
      %p822 = scmp.eq.s32.totalorder %s91, 1
      %p823 = scmp.ne.s32.totalorder %s818, %s820
      %p824 = scmp.eq.s32.totalorder %s91, 0
      %p825 = por %p823, %p824
      %p826 = scmp.ne.s32.totalorder %s818, %s820
      %p827 = scmp.eq.s32.totalorder %s96, 1
      %p828 = por %p826, %p827
      %p829 = scmp.ne.s32.totalorder %s820, %s821
      %p830 = scmp.eq.s32.totalorder %s96, 0
      %p831 = por %p829, %p830
      %p832 = scmp.ne.s32.totalorder %s820, %s821
      %p833 = scmp.eq.s32.totalorder %s97, 1
      %p834 = por %p832, %p833
      %p836 = scmp.ne.s32.totalorder %s821, %s835
      %p837 = scmp.eq.s32.totalorder %s97, 0
      %p838 = por %p836, %p837
      %s839 = ssub.s32 %s91, %s98
      %p840 = scmp.eq.s32.totalorder %s839, 0
      %s842 = sadd.s32 %s841, 1
      %s843 = scalar_select %p840, %s841, %s842
      %p846 = pneg %p840
      %p847 = scmp.eq.s32.totalorder %s91, 1
      %p848 = por %p846, %p847
      %p849 = scmp.ne.s32.totalorder %s841, %s844
      %p850 = scmp.eq.s32.totalorder %s91, 0
      %p851 = por %p849, %p850
      %p852 = scmp.ne.s32.totalorder %s841, %s844
      %p853 = scmp.eq.s32.totalorder %s96, 1
      %p854 = por %p852, %p853
      %p855 = scmp.ne.s32.totalorder %s844, %s845
      %p856 = scmp.eq.s32.totalorder %s96, 0
      %p857 = por %p855, %p856
      %p858 = scmp.ne.s32.totalorder %s844, %s845
      %p859 = scmp.eq.s32.totalorder %s97, 1
      %p860 = por %p858, %p859
      %p862 = scmp.ne.s32.totalorder %s845, %s861
      %p863 = scmp.eq.s32.totalorder %s97, 0
      %p864 = por %p862, %p863
      %p865 = scmp.le.s32.totalorder 1, %s91
      %p866 = scmp.lt.s32.totalorder %s91, 3
      %p867 = pnand %p865, %p866
      %p868 = pneg %p867
      // Predicated region
      $region9: #{tpu_custom_call.1} parent=5 // pred_check
        _
      $region10: #{tpu_custom_call.1} parent=5 // pred_check_branch
        %870 = sbr.rel (%p867) target = $region12
      $region11: #{tpu_custom_call.1} parent=5 // pred_region
        %s871 = ssub.s32 %s91, 1
        // Predicated region
        $region13: #{tpu_custom_call.1} parent=11 // pred_check
          %p872 = pneg %p138
        $region14: #{tpu_custom_call.1} parent=11 // pred_check_branch
          %874 = sbr.rel (%p872) target = $region16
        $region15: #{tpu_custom_call.1} parent=11 // pred_region
          %s876 = ssub.s32 384, 384
          %877 = vsyncadd [#allocation3], %s876
          %s878 = sshll.u32 [#allocation2], 4
          %s879 = int_to_ptr.vmem [resolvable:$true] %s878
          %884 = dma.hbm_to_vmem [thread:$0]  %s3, 384, %s879, [#allocation3], 64, 64, 4
        $region16: #{tpu_custom_call.1} parent=11 // pred_fallthru
          _
        // Predicated region
        $region17: #{tpu_custom_call.1} parent=11 // pred_check
          %p885 = pneg %p159
        $region18: #{tpu_custom_call.1} parent=11 // pred_check_branch
          %887 = sbr.rel (%p885) target = $region20
        $region19: #{tpu_custom_call.1} parent=11 // pred_region
          %s889 = ssub.s32 384, 384
          %890 = vsyncadd [#allocation6], %s889
          %s891 = sshll.u32 [#allocation5], 4
          %s892 = int_to_ptr.vmem [resolvable:$true] %s891
          %897 = dma.hbm_to_vmem [thread:$0]  %s5, 384, %s892, [#allocation6], 64, 64, 4
        $region20: #{tpu_custom_call.1} parent=11 // pred_fallthru
          _
        // Predicated region
        $region21: #{tpu_custom_call.1} parent=11 // pred_check
          %p898 = pneg %p180
        $region22: #{tpu_custom_call.1} parent=11 // pred_check_branch
          %900 = sbr.rel (%p898) target = $region24
        $region23: #{tpu_custom_call.1} parent=11 // pred_region
          _
        $region24: #{tpu_custom_call.1} parent=11 // pred_fallthru
          _
        // Predicated region
        $region25: #{tpu_custom_call.1} parent=11 // pred_check
          %p901 = pneg %p201
        $region26: #{tpu_custom_call.1} parent=11 // pred_check_branch
          %903 = sbr.rel (%p901) target = $region28
        $region27: #{tpu_custom_call.1} parent=11 // pred_region
          _
        $region28: #{tpu_custom_call.1} parent=11 // pred_fallthru
          _
        // Predicated region
        $region29: #{tpu_custom_call.1} parent=11 // pred_check
          %p904 = pneg %p222
        $region30: #{tpu_custom_call.1} parent=11 // pred_check_branch
          %906 = sbr.rel (%p904) target = $region32
        $region31: #{tpu_custom_call.1} parent=11 // pred_region
          _
        $region32: #{tpu_custom_call.1} parent=11 // pred_fallthru
          _
        // Predicated region
        $region33: #{tpu_custom_call.1} parent=11 // pred_check
          %p907 = pneg %p243
        $region34: #{tpu_custom_call.1} parent=11 // pred_check_branch
          %909 = sbr.rel (%p907) target = $region36
        $region35: #{tpu_custom_call.1} parent=11 // pred_region
          %s911 = ssub.s32 1024, 1024
          %912 = vsyncadd [#allocation6], %s911
          %s913 = sshll.u32 [#allocation7], 4
          %s914 = int_to_ptr.vmem [resolvable:$true] %s913
          %919 = dma.hbm_to_vmem [thread:$0]  %s13, 1024, %s914, [#allocation6], 64, 64, 4
        $region36: #{tpu_custom_call.1} parent=11 // pred_fallthru
          _
        // Predicated region
        $region37: #{tpu_custom_call.1} parent=11 // pred_check
          %p920 = pneg %p264
        $region38: #{tpu_custom_call.1} parent=11 // pred_check_branch
          %922 = sbr.rel (%p920) target = $region40
        $region39: #{tpu_custom_call.1} parent=11 // pred_region
          _
        $region40: #{tpu_custom_call.1} parent=11 // pred_fallthru
          _
        // Predicated region
        $region41: #{tpu_custom_call.1} parent=11 // pred_check
          %p923 = pneg %p285
        $region42: #{tpu_custom_call.1} parent=11 // pred_check_branch
          %925 = sbr.rel (%p923) target = $region44
        $region43: #{tpu_custom_call.1} parent=11 // pred_region
          %s927 = ssub.s32 3072, 3072
          %928 = vsyncadd [#allocation9], %s927
          %s929 = sshll.u32 [#allocation8], 4
          %s930 = int_to_ptr.vmem [resolvable:$true] %s929
          %935 = dma.hbm_to_vmem [thread:$0]  %s17, 3072, %s930, [#allocation9], 64, 64, 4
        $region44: #{tpu_custom_call.1} parent=11 // pred_fallthru
          _
        // Predicated region
        $region45: #{tpu_custom_call.1} parent=11 // pred_check
          %p936 = pneg %p306
        $region46: #{tpu_custom_call.1} parent=11 // pred_check_branch
          %938 = sbr.rel (%p936) target = $region48
        $region47: #{tpu_custom_call.1} parent=11 // pred_region
          %s940 = ssub.s32 16, 16
          %941 = vsyncadd [#allocation9], %s940
          %s943 = sshll.u32 [#allocation10], 4
          %s944 = int_to_ptr.vmem [resolvable:$true] %s943
          %946 = dma.hbm_to_vmem [thread:$0]  %s19, 16, %s944, [#allocation9]
        $region48: #{tpu_custom_call.1} parent=11 // pred_fallthru
          _
        // Predicated region
        $region49: #{tpu_custom_call.1} parent=11 // pred_check
          %p947 = pneg %p327
        $region50: #{tpu_custom_call.1} parent=11 // pred_check_branch
          %949 = sbr.rel (%p947) target = $region52
        $region51: #{tpu_custom_call.1} parent=11 // pred_region
          %s951 = ssub.s32 1024, 1024
          %952 = vsyncadd [#allocation12], %s951
          %s953 = sshll.u32 [#allocation11], 4
          %s954 = int_to_ptr.vmem [resolvable:$true] %s953
          %959 = dma.hbm_to_vmem [thread:$0]  %s21, 1024, %s954, [#allocation12], 64, 64, 4
        $region52: #{tpu_custom_call.1} parent=11 // pred_fallthru
          _
        // Predicated region
        $region53: #{tpu_custom_call.1} parent=11 // pred_check
          %p960 = pneg %p348
        $region54: #{tpu_custom_call.1} parent=11 // pred_check_branch
          %962 = sbr.rel (%p960) target = $region56
        $region55: #{tpu_custom_call.1} parent=11 // pred_region
          %s964 = ssub.s32 16, 16
          %965 = vsyncadd [#allocation12], %s964
          %s967 = sshll.u32 [#allocation13], 4
          %s968 = int_to_ptr.vmem [resolvable:$true] %s967
          %970 = dma.hbm_to_vmem [thread:$0]  %s23, 16, %s968, [#allocation12]
        $region56: #{tpu_custom_call.1} parent=11 // pred_fallthru
          _
        // Predicated region
        $region57: #{tpu_custom_call.1} parent=11 // pred_check
          %p971 = pneg %p369
        $region58: #{tpu_custom_call.1} parent=11 // pred_check_branch
          %973 = sbr.rel (%p971) target = $region60
        $region59: #{tpu_custom_call.1} parent=11 // pred_region
          %s975 = ssub.s32 16, 16
          %976 = vsyncadd [#allocation15], %s975
          %s978 = sshll.u32 [#allocation14], 4
          %s979 = int_to_ptr.vmem [resolvable:$true] %s978
          %981 = dma.hbm_to_vmem [thread:$0]  %s25, 16, %s979, [#allocation15]
        $region60: #{tpu_custom_call.1} parent=11 // pred_fallthru
          _
        // Predicated region
        $region61: #{tpu_custom_call.1} parent=11 // pred_check
          %p982 = pneg %p390
        $region62: #{tpu_custom_call.1} parent=11 // pred_check_branch
          %984 = sbr.rel (%p982) target = $region64
        $region63: #{tpu_custom_call.1} parent=11 // pred_region
          %s986 = ssub.s32 3072, 3072
          %987 = vsyncadd [#allocation15], %s986
          %s988 = sshll.u32 [#allocation16], 4
          %s989 = int_to_ptr.vmem [resolvable:$true] %s988
          %994 = dma.hbm_to_vmem [thread:$0]  %s27, 3072, %s989, [#allocation15], 64, 64, 4
        $region64: #{tpu_custom_call.1} parent=11 // pred_fallthru
          _
        // Predicated region
        $region65: #{tpu_custom_call.1} parent=11 // pred_check
          %p995 = pneg %p411
        $region66: #{tpu_custom_call.1} parent=11 // pred_check_branch
          %997 = sbr.rel (%p995) target = $region68
        $region67: #{tpu_custom_call.1} parent=11 // pred_region
          %s999 = ssub.s32 3072, 3072
          %1000 = vsyncadd [#allocation18], %s999
          %s1001 = sshll.u32 [#allocation17], 4
          %s1002 = int_to_ptr.vmem [resolvable:$true] %s1001
          %1007 = dma.hbm_to_vmem [thread:$0]  %s29, 3072, %s1002, [#allocation18], 64, 64, 4
        $region68: #{tpu_custom_call.1} parent=11 // pred_fallthru
          _
        // Predicated region
        $region69: #{tpu_custom_call.1} parent=11 // pred_check
          %p1008 = pneg %p432
        $region70: #{tpu_custom_call.1} parent=11 // pred_check_branch
          %1010 = sbr.rel (%p1008) target = $region72
        $region71: #{tpu_custom_call.1} parent=11 // pred_region
          %s1012 = ssub.s32 16, 16
          %1013 = vsyncadd [#allocation18], %s1012
          %s1015 = sshll.u32 [#allocation19], 4
          %s1016 = int_to_ptr.vmem [resolvable:$true] %s1015
          %1018 = dma.hbm_to_vmem [thread:$0]  %s31, 16, %s1016, [#allocation18]
        $region72: #{tpu_custom_call.1} parent=11 // pred_fallthru
          _
        // Predicated region
        $region73: #{tpu_custom_call.1} parent=11 // pred_check
          %p1019 = pneg %p453
        $region74: #{tpu_custom_call.1} parent=11 // pred_check_branch
          %1021 = sbr.rel (%p1019) target = $region76
        $region75: #{tpu_custom_call.1} parent=11 // pred_region
          %s1023 = ssub.s32 16, 16
          %1024 = vsyncadd [#allocation21], %s1023
          %s1026 = sshll.u32 [#allocation20], 4
          %s1027 = int_to_ptr.vmem [resolvable:$true] %s1026
          %1029 = dma.hbm_to_vmem [thread:$0]  %s33, 16, %s1027, [#allocation21]
        $region76: #{tpu_custom_call.1} parent=11 // pred_fallthru
          _
        // Predicated region
        $region77: #{tpu_custom_call.1} parent=11 // pred_check
          %p1030 = pneg %p474
        $region78: #{tpu_custom_call.1} parent=11 // pred_check_branch
          %1032 = sbr.rel (%p1030) target = $region80
        $region79: #{tpu_custom_call.1} parent=11 // pred_region
          %s1034 = ssub.s32 1024, 1024
          %1035 = vsyncadd [#allocation21], %s1034
          %s1036 = sshll.u32 [#allocation22], 4
          %s1037 = int_to_ptr.vmem [resolvable:$true] %s1036
          %1042 = dma.hbm_to_vmem [thread:$0]  %s35, 1024, %s1037, [#allocation21], 64, 64, 4
        $region80: #{tpu_custom_call.1} parent=11 // pred_fallthru
          _
        // Predicated region
        $region81: #{tpu_custom_call.1} parent=11 // pred_check
          %p1043 = pneg %p495
        $region82: #{tpu_custom_call.1} parent=11 // pred_check_branch
          %1045 = sbr.rel (%p1043) target = $region84
        $region83: #{tpu_custom_call.1} parent=11 // pred_region
          %s1047 = ssub.s32 1024, 1024
          %1048 = vsyncadd [#allocation24], %s1047
          %s1049 = sshll.u32 [#allocation23], 4
          %s1050 = int_to_ptr.vmem [resolvable:$true] %s1049
          %1055 = dma.hbm_to_vmem [thread:$0]  %s37, 1024, %s1050, [#allocation24], 64, 64, 4
        $region84: #{tpu_custom_call.1} parent=11 // pred_fallthru
          _
        // Predicated region
        $region85: #{tpu_custom_call.1} parent=11 // pred_check
          %p1056 = pneg %p516
        $region86: #{tpu_custom_call.1} parent=11 // pred_check_branch
          %1058 = sbr.rel (%p1056) target = $region88
        $region87: #{tpu_custom_call.1} parent=11 // pred_region
          %s1060 = ssub.s32 16, 16
          %1061 = vsyncadd [#allocation24], %s1060
          %s1063 = sshll.u32 [#allocation25], 4
          %s1064 = int_to_ptr.vmem [resolvable:$true] %s1063
          %1066 = dma.hbm_to_vmem [thread:$0]  %s39, 16, %s1064, [#allocation24]
        $region88: #{tpu_custom_call.1} parent=11 // pred_fallthru
          _
        // Predicated region
        $region89: #{tpu_custom_call.1} parent=11 // pred_check
          %p1067 = pneg %p537
        $region90: #{tpu_custom_call.1} parent=11 // pred_check_branch
          %1069 = sbr.rel (%p1067) target = $region92
        $region91: #{tpu_custom_call.1} parent=11 // pred_region
          _
        $region92: #{tpu_custom_call.1} parent=11 // pred_fallthru
          _
        // Predicated region
        $region93: #{tpu_custom_call.1} parent=11 // pred_check
          %p1070 = pneg %p558
        $region94: #{tpu_custom_call.1} parent=11 // pred_check_branch
          %1072 = sbr.rel (%p1070) target = $region96
        $region95: #{tpu_custom_call.1} parent=11 // pred_region
          %s1074 = ssub.s32 16, 16
          %1075 = vsyncadd [#allocation27], %s1074
          %s1077 = sshll.u32 [#allocation26], 4
          %s1078 = int_to_ptr.vmem [resolvable:$true] %s1077
          %1080 = dma.hbm_to_vmem [thread:$0]  %s43, 16, %s1078, [#allocation27]
        $region96: #{tpu_custom_call.1} parent=11 // pred_fallthru
          _
        // Predicated region
        $region97: #{tpu_custom_call.1} parent=11 // pred_check
          %p1081 = pneg %p579
        $region98: #{tpu_custom_call.1} parent=11 // pred_check_branch
          %1083 = sbr.rel (%p1081) target = $region100
        $region99: #{tpu_custom_call.1} parent=11 // pred_region
          %s1085 = ssub.s32 1024, 1024
          %1086 = vsyncadd [#allocation27], %s1085
          %s1087 = sshll.u32 [#allocation28], 4
          %s1088 = int_to_ptr.vmem [resolvable:$true] %s1087
          %1093 = dma.hbm_to_vmem [thread:$0]  %s45, 1024, %s1088, [#allocation27], 64, 64, 4
        $region100: #{tpu_custom_call.1} parent=11 // pred_fallthru
          _
        // Predicated region
        $region101: #{tpu_custom_call.1} parent=11 // pred_check
          %p1094 = pneg %p600
        $region102: #{tpu_custom_call.1} parent=11 // pred_check_branch
          %1096 = sbr.rel (%p1094) target = $region104
        $region103: #{tpu_custom_call.1} parent=11 // pred_region
          _
        $region104: #{tpu_custom_call.1} parent=11 // pred_fallthru
          _
        // Predicated region
        $region105: #{tpu_custom_call.1} parent=11 // pred_check
          %p1097 = pneg %p621
        $region106: #{tpu_custom_call.1} parent=11 // pred_check_branch
          %1099 = sbr.rel (%p1097) target = $region108
        $region107: #{tpu_custom_call.1} parent=11 // pred_region
          _
        $region108: #{tpu_custom_call.1} parent=11 // pred_fallthru
          _
        // Predicated region
        $region109: #{tpu_custom_call.1} parent=11 // pred_check
          %p1100 = pneg %p642
        $region110: #{tpu_custom_call.1} parent=11 // pred_check_branch
          %1102 = sbr.rel (%p1100) target = $region112
        $region111: #{tpu_custom_call.1} parent=11 // pred_region
          %s1104 = ssub.s32 4096, 4096
          %1105 = vsyncadd [#allocation30], %s1104
          %s1106 = sshll.u32 [#allocation29], 4
          %s1107 = int_to_ptr.vmem [resolvable:$true] %s1106
          %1112 = dma.hbm_to_vmem [thread:$0]  %s51, 4096, %s1107, [#allocation30], 64, 64, 4
        $region112: #{tpu_custom_call.1} parent=11 // pred_fallthru
          _
        // Predicated region
        $region113: #{tpu_custom_call.1} parent=11 // pred_check
          %p1113 = pneg %p663
        $region114: #{tpu_custom_call.1} parent=11 // pred_check_branch
          %1115 = sbr.rel (%p1113) target = $region116
        $region115: #{tpu_custom_call.1} parent=11 // pred_region
          %s1117 = ssub.s32 4096, 4096
          %1118 = vsyncadd [#allocation30], %s1117
          %s1119 = sshll.u32 [#allocation31], 4
          %s1120 = int_to_ptr.vmem [resolvable:$true] %s1119
          %1125 = dma.hbm_to_vmem [thread:$0]  %s53, 4096, %s1120, [#allocation30], 64, 64, 4
        $region116: #{tpu_custom_call.1} parent=11 // pred_fallthru
          _
        // Predicated region
        $region117: #{tpu_custom_call.1} parent=11 // pred_check
          %p1126 = pneg %p684
        $region118: #{tpu_custom_call.1} parent=11 // pred_check_branch
          %1128 = sbr.rel (%p1126) target = $region120
        $region119: #{tpu_custom_call.1} parent=11 // pred_region
          _
        $region120: #{tpu_custom_call.1} parent=11 // pred_fallthru
          _
        // Predicated region
        $region121: #{tpu_custom_call.1} parent=11 // pred_check
          %p1129 = pneg %p705
        $region122: #{tpu_custom_call.1} parent=11 // pred_check_branch
          %1131 = sbr.rel (%p1129) target = $region124
        $region123: #{tpu_custom_call.1} parent=11 // pred_region
          _
        $region124: #{tpu_custom_call.1} parent=11 // pred_fallthru
          _
        // Predicated region
        $region125: #{tpu_custom_call.1} parent=11 // pred_check
          %p1132 = pneg %p726
        $region126: #{tpu_custom_call.1} parent=11 // pred_check_branch
          %1134 = sbr.rel (%p1132) target = $region128
        $region127: #{tpu_custom_call.1} parent=11 // pred_region
          _
        $region128: #{tpu_custom_call.1} parent=11 // pred_fallthru
          _
        // Predicated region
        $region129: #{tpu_custom_call.1} parent=11 // pred_check
          %p1135 = pneg %p747
        $region130: #{tpu_custom_call.1} parent=11 // pred_check_branch
          %1137 = sbr.rel (%p1135) target = $region132
        $region131: #{tpu_custom_call.1} parent=11 // pred_region
          _
        $region132: #{tpu_custom_call.1} parent=11 // pred_fallthru
          _
        // Predicated region
        $region133: #{tpu_custom_call.1} parent=11 // pred_check
          %p1138 = pneg %p768
        $region134: #{tpu_custom_call.1} parent=11 // pred_check_branch
          %1140 = sbr.rel (%p1138) target = $region136
        $region135: #{tpu_custom_call.1} parent=11 // pred_region
          %s1142 = ssub.s32 1024, 1024
          %1143 = vsyncadd [#allocation33], %s1142
          %s1144 = sshll.u32 [#allocation32], 4
          %s1145 = int_to_ptr.vmem [resolvable:$true] %s1144
          %1150 = dma.hbm_to_vmem [thread:$0]  %s63, 1024, %s1145, [#allocation33], 64, 64, 4
        $region136: #{tpu_custom_call.1} parent=11 // pred_fallthru
          _
        // Predicated region
        $region137: #{tpu_custom_call.1} parent=11 // pred_check
          %p1151 = pneg %p789
        $region138: #{tpu_custom_call.1} parent=11 // pred_check_branch
          %1153 = sbr.rel (%p1151) target = $region140
        $region139: #{tpu_custom_call.1} parent=11 // pred_region
          _
        $region140: #{tpu_custom_call.1} parent=11 // pred_fallthru
          _
        // Predicated region
        $region141: #{tpu_custom_call.1} parent=11 // pred_check
          %p1154 = pneg %p810
        $region142: #{tpu_custom_call.1} parent=11 // pred_check_branch
          %1156 = sbr.rel (%p1154) target = $region144
        $region143: #{tpu_custom_call.1} parent=11 // pred_region
          _
        $region144: #{tpu_custom_call.1} parent=11 // pred_fallthru
          _
        // Predicated region
        $region145: #{tpu_custom_call.1} parent=11 // pred_check
          %p1157 = pneg %p831
        $region146: #{tpu_custom_call.1} parent=11 // pred_check_branch
          %1159 = sbr.rel (%p1157) target = $region148
        $region147: #{tpu_custom_call.1} parent=11 // pred_region
          _
        $region148: #{tpu_custom_call.1} parent=11 // pred_fallthru
          _
      $region12: #{tpu_custom_call.1} parent=5 // pred_fallthru
        _
      %p1160 = scmp.lt.s32.totalorder %s91, 2
      // Predicated region
      $region149: #{tpu_custom_call.1} parent=5 // pred_check
        %p1161 = pneg %p1160
      $region150: #{tpu_custom_call.1} parent=5 // pred_check_branch
        %1163 = sbr.rel (%p1161) target = $region152
      $region151: #{tpu_custom_call.1} parent=5 // pred_region
        // Predicated region
        $region153: #{tpu_custom_call.1} parent=151 // pred_check
          %p1164 = pneg %p111
        $region154: #{tpu_custom_call.1} parent=151 // pred_check_branch
          %1166 = sbr.rel (%p1164) target = $region156
        $region155: #{tpu_custom_call.1} parent=151 // pred_region
          %p1167 = scmp.lt.s32.totalorder %s91, 1
          %s1168 = scalar_select %p1167, %s91, 1
          %s1169 = smul.addr %s1168, 2
          %s1170 = smul.addr %s1169, 8
          %s1171 = scalar_lea.vmem %s1, %s1170
        $region156: #{tpu_custom_call.1} parent=151 // pred_fallthru
          _
      $region152: #{tpu_custom_call.1} parent=5 // pred_fallthru
        _
      %p1172 = scmp.le.s32.totalorder 1, %s91
      %p1173 = scmp.lt.s32.totalorder %s91, 3
      %p1174 = pnand %p1172, %p1173
      %p1175 = pneg %p1174
      // Predicated region
      $region157: #{tpu_custom_call.1} parent=5 // pred_check
        _
      $region158: #{tpu_custom_call.1} parent=5 // pred_check_branch
        %1177 = sbr.rel (%p1174) target = $region160
      $region159: #{tpu_custom_call.1} parent=5 // pred_region
        %s1178 = ssub.s32 %s91, 1
        // Predicated region
        $region161: #{tpu_custom_call.1} parent=159 // pred_check
          %p1179 = pneg %p138
        $region162: #{tpu_custom_call.1} parent=159 // pred_check_branch
          %1181 = sbr.rel (%p1179) target = $region164
        $region163: #{tpu_custom_call.1} parent=159 // pred_region
          %1182 = dma.done [#allocation3], 384
        $region164: #{tpu_custom_call.1} parent=159 // pred_fallthru
          _
        // Predicated region
        $region165: #{tpu_custom_call.1} parent=159 // pred_check
          %p1183 = pneg %p159
        $region166: #{tpu_custom_call.1} parent=159 // pred_check_branch
          %1185 = sbr.rel (%p1183) target = $region168
        $region167: #{tpu_custom_call.1} parent=159 // pred_region
          %1186 = dma.done [#allocation6], 384
        $region168: #{tpu_custom_call.1} parent=159 // pred_fallthru
          _
        // Predicated region
        $region169: #{tpu_custom_call.1} parent=159 // pred_check
          %p1187 = pneg %p243
        $region170: #{tpu_custom_call.1} parent=159 // pred_check_branch
          %1189 = sbr.rel (%p1187) target = $region172
        $region171: #{tpu_custom_call.1} parent=159 // pred_region
          %1190 = dma.done [#allocation6], 1024
        $region172: #{tpu_custom_call.1} parent=159 // pred_fallthru
          _
        // Predicated region
        $region173: #{tpu_custom_call.1} parent=159 // pred_check
          %p1191 = pneg %p285
        $region174: #{tpu_custom_call.1} parent=159 // pred_check_branch
          %1193 = sbr.rel (%p1191) target = $region176
        $region175: #{tpu_custom_call.1} parent=159 // pred_region
          %1194 = dma.done [#allocation9], 3072
        $region176: #{tpu_custom_call.1} parent=159 // pred_fallthru
          _
        // Predicated region
        $region177: #{tpu_custom_call.1} parent=159 // pred_check
          %p1195 = pneg %p306
        $region178: #{tpu_custom_call.1} parent=159 // pred_check_branch
          %1197 = sbr.rel (%p1195) target = $region180
        $region179: #{tpu_custom_call.1} parent=159 // pred_region
          %1198 = dma.done [#allocation9], 16
        $region180: #{tpu_custom_call.1} parent=159 // pred_fallthru
          _
        // Predicated region
        $region181: #{tpu_custom_call.1} parent=159 // pred_check
          %p1199 = pneg %p327
        $region182: #{tpu_custom_call.1} parent=159 // pred_check_branch
          %1201 = sbr.rel (%p1199) target = $region184
        $region183: #{tpu_custom_call.1} parent=159 // pred_region
          %1202 = dma.done [#allocation12], 1024
        $region184: #{tpu_custom_call.1} parent=159 // pred_fallthru
          _
        // Predicated region
        $region185: #{tpu_custom_call.1} parent=159 // pred_check
          %p1203 = pneg %p348
        $region186: #{tpu_custom_call.1} parent=159 // pred_check_branch
          %1205 = sbr.rel (%p1203) target = $region188
        $region187: #{tpu_custom_call.1} parent=159 // pred_region
          %1206 = dma.done [#allocation12], 16
        $region188: #{tpu_custom_call.1} parent=159 // pred_fallthru
          _
        // Predicated region
        $region189: #{tpu_custom_call.1} parent=159 // pred_check
          %p1207 = pneg %p369
        $region190: #{tpu_custom_call.1} parent=159 // pred_check_branch
          %1209 = sbr.rel (%p1207) target = $region192
        $region191: #{tpu_custom_call.1} parent=159 // pred_region
          %1210 = dma.done [#allocation15], 16
        $region192: #{tpu_custom_call.1} parent=159 // pred_fallthru
          _
        // Predicated region
        $region193: #{tpu_custom_call.1} parent=159 // pred_check
          %p1211 = pneg %p390
        $region194: #{tpu_custom_call.1} parent=159 // pred_check_branch
          %1213 = sbr.rel (%p1211) target = $region196
        $region195: #{tpu_custom_call.1} parent=159 // pred_region
          %1214 = dma.done [#allocation15], 3072
        $region196: #{tpu_custom_call.1} parent=159 // pred_fallthru
          _
        // Predicated region
        $region197: #{tpu_custom_call.1} parent=159 // pred_check
          %p1215 = pneg %p411
        $region198: #{tpu_custom_call.1} parent=159 // pred_check_branch
          %1217 = sbr.rel (%p1215) target = $region200
        $region199: #{tpu_custom_call.1} parent=159 // pred_region
          %1218 = dma.done [#allocation18], 3072
        $region200: #{tpu_custom_call.1} parent=159 // pred_fallthru
          _
        // Predicated region
        $region201: #{tpu_custom_call.1} parent=159 // pred_check
          %p1219 = pneg %p432
        $region202: #{tpu_custom_call.1} parent=159 // pred_check_branch
          %1221 = sbr.rel (%p1219) target = $region204
        $region203: #{tpu_custom_call.1} parent=159 // pred_region
          %1222 = dma.done [#allocation18], 16
        $region204: #{tpu_custom_call.1} parent=159 // pred_fallthru
          _
        // Predicated region
        $region205: #{tpu_custom_call.1} parent=159 // pred_check
          %p1223 = pneg %p453
        $region206: #{tpu_custom_call.1} parent=159 // pred_check_branch
          %1225 = sbr.rel (%p1223) target = $region208
        $region207: #{tpu_custom_call.1} parent=159 // pred_region
          %1226 = dma.done [#allocation21], 16
        $region208: #{tpu_custom_call.1} parent=159 // pred_fallthru
          _
        // Predicated region
        $region209: #{tpu_custom_call.1} parent=159 // pred_check
          %p1227 = pneg %p474
        $region210: #{tpu_custom_call.1} parent=159 // pred_check_branch
          %1229 = sbr.rel (%p1227) target = $region212
        $region211: #{tpu_custom_call.1} parent=159 // pred_region
          %1230 = dma.done [#allocation21], 1024
        $region212: #{tpu_custom_call.1} parent=159 // pred_fallthru
          _
        // Predicated region
        $region213: #{tpu_custom_call.1} parent=159 // pred_check
          %p1231 = pneg %p495
        $region214: #{tpu_custom_call.1} parent=159 // pred_check_branch
          %1233 = sbr.rel (%p1231) target = $region216
        $region215: #{tpu_custom_call.1} parent=159 // pred_region
          %1234 = dma.done [#allocation24], 1024
        $region216: #{tpu_custom_call.1} parent=159 // pred_fallthru
          _
        // Predicated region
        $region217: #{tpu_custom_call.1} parent=159 // pred_check
          %p1235 = pneg %p516
        $region218: #{tpu_custom_call.1} parent=159 // pred_check_branch
          %1237 = sbr.rel (%p1235) target = $region220
        $region219: #{tpu_custom_call.1} parent=159 // pred_region
          %1238 = dma.done [#allocation24], 16
        $region220: #{tpu_custom_call.1} parent=159 // pred_fallthru
          _
        // Predicated region
        $region221: #{tpu_custom_call.1} parent=159 // pred_check
          %p1239 = pneg %p558
        $region222: #{tpu_custom_call.1} parent=159 // pred_check_branch
          %1241 = sbr.rel (%p1239) target = $region224
        $region223: #{tpu_custom_call.1} parent=159 // pred_region
          %1242 = dma.done [#allocation27], 16
        $region224: #{tpu_custom_call.1} parent=159 // pred_fallthru
          _
        // Predicated region
        $region225: #{tpu_custom_call.1} parent=159 // pred_check
          %p1243 = pneg %p579
        $region226: #{tpu_custom_call.1} parent=159 // pred_check_branch
          %1245 = sbr.rel (%p1243) target = $region228
        $region227: #{tpu_custom_call.1} parent=159 // pred_region
          %1246 = dma.done [#allocation27], 1024
        $region228: #{tpu_custom_call.1} parent=159 // pred_fallthru
          _
        // Predicated region
        $region229: #{tpu_custom_call.1} parent=159 // pred_check
          %p1247 = pneg %p642
        $region230: #{tpu_custom_call.1} parent=159 // pred_check_branch
          %1249 = sbr.rel (%p1247) target = $region232
        $region231: #{tpu_custom_call.1} parent=159 // pred_region
          %1250 = dma.done [#allocation30], 4096
        $region232: #{tpu_custom_call.1} parent=159 // pred_fallthru
          _
        // Predicated region
        $region233: #{tpu_custom_call.1} parent=159 // pred_check
          %p1251 = pneg %p663
        $region234: #{tpu_custom_call.1} parent=159 // pred_check_branch
          %1253 = sbr.rel (%p1251) target = $region236
        $region235: #{tpu_custom_call.1} parent=159 // pred_region
          %1254 = dma.done [#allocation30], 4096
        $region236: #{tpu_custom_call.1} parent=159 // pred_fallthru
          _
        // Predicated region
        $region237: #{tpu_custom_call.1} parent=159 // pred_check
          %p1255 = pneg %p768
        $region238: #{tpu_custom_call.1} parent=159 // pred_check_branch
          %1257 = sbr.rel (%p1255) target = $region240
        $region239: #{tpu_custom_call.1} parent=159 // pred_region
          %1258 = dma.done [#allocation33], 1024
        $region240: #{tpu_custom_call.1} parent=159 // pred_fallthru
          _
        %p1259 = scmp.lt.s32.totalorder %s96, 1
        %s1260 = scalar_select %p1259, %s96, 1
        %s1261 = smul.addr %s1260, 2
        %s1262 = smul.addr %s1261, 8
        %s1263 = scalar_lea.vmem %s1, %s1262
        %p1264 = pneg %p117
        %p1265 = pneg %p114
        %p1266 = pneg %p138
        %p1267 = pneg %p135
        %p1268 = pneg %p159
        %p1269 = pneg %p156
        %p1270 = pneg %p180
        %p1271 = pneg %p177
        %p1272 = pneg %p201
        %p1273 = pneg %p198
        %p1274 = pneg %p222
        %p1275 = pneg %p219
        %p1276 = pneg %p243
        %p1277 = pneg %p240
        %p1278 = pneg %p264
        %p1279 = pneg %p261
        %p1280 = pneg %p285
        %p1281 = pneg %p282
        %p1282 = pneg %p306
        %p1283 = pneg %p303
        %p1284 = pneg %p327
        %p1285 = pneg %p324
        %p1286 = pneg %p348
        %p1287 = pneg %p345
        %p1288 = pneg %p369
        %p1289 = pneg %p366
        %p1290 = pneg %p390
        %p1291 = pneg %p387
        %p1292 = pneg %p411
        %p1293 = pneg %p408
        %p1294 = pneg %p432
        %p1295 = pneg %p429
        %p1296 = pneg %p453
        %p1297 = pneg %p450
        %p1298 = pneg %p474
        %p1299 = pneg %p471
        %p1300 = pneg %p495
        %p1301 = pneg %p492
        %p1302 = pneg %p516
        %p1303 = pneg %p513
        %p1304 = pneg %p537
        %p1305 = pneg %p534
        %p1306 = pneg %p558
        %p1307 = pneg %p555
        %p1308 = pneg %p579
        %p1309 = pneg %p576
        %p1310 = pneg %p600
        %p1311 = pneg %p597
        %p1312 = pneg %p621
        %p1313 = pneg %p618
        %p1314 = pneg %p642
        %p1315 = pneg %p639
        %p1316 = pneg %p663
        %p1317 = pneg %p660
        %p1318 = pneg %p684
        %p1319 = pneg %p681
        %p1320 = pneg %p705
        %p1321 = pneg %p702
        %p1322 = pneg %p726
        %p1323 = pneg %p723
        %p1324 = pneg %p747
        %p1325 = pneg %p744
        %p1326 = pneg %p768
        %p1327 = pneg %p765
        %p1328 = pneg %p789
        %p1329 = pneg %p786
        %p1330 = pneg %p810
        %p1331 = pneg %p807
        %p1332 = pneg %p831
        %p1333 = pneg %p828
        %p1334 = pneg %p857
        %p1335 = pneg %p854
        %s1336 = sand.u32 %s844, 1
        %s1337 = scalar_lea.sflag [#allocation4], %s1336
        %s1338 = sand.u32 %s844, 1
        %s1339 = scalar_lea.vmem [#allocation34], %s1338
        %p1340 = scmp.lt.s32.totalorder %s96, 1
        %s1341 = scalar_select %p1340, %s96, 1
        %s1342 = smul.addr %s1341, 2
        %s1343 = smul.addr %s1342, 8
        %s1344 = scalar_lea.vmem %s1, %s1343
        %v1346 = vld [vmem:[%s1344] sm:$0xff]
        %v1347 = vld [vmem:[%s1344 + $0x8] sm:$0xf]
        %v1348 = vld [vmem:[%s7] sm:$0x1]
        %v1349 = vld [vmem:[%s9] sm:$0x1]
        %v1350 = vld [vmem:[#allocation2] sm:$0xf]
        %v1351 = vld [vmem:[#allocation2 + $0x4] sm:$0xf]
        %v1352 = vpack.c.bf16 %v1347, %v1346
        %v1355 = vunpack.c.l.b16 %v1350
        %v1356 = vunpack.c.l.b16 %v1351
        %v1357 = vpack.c.b16 %v1356, %v1355
        %vm1359 = vcmask 130048
        %v1361 = vsel %vm1359, %v1352, 0
        %1363 = vmatprep.subr.bf16.mxu0 0
        %1364 = vmatpush1.bf16.msra.mxu0 %v1357
        %1365 = vmatprep.subr.bf16.mxu0 0
        %1366 = vmatpush1.bf16.msra.mxu0 0
        %1367 = vmatprep.subr.bf16.mxu0 0
        %1368 = vmatpush1.bf16.msra.mxu0 0
        %1369 = vmatprep.subr.bf16.mxu0 0
        %1370 = vmatpush1.bf16.msra.mxu0 0
        %1371 = vmatprep.subr.bf16.mxu0 0
        %1372 = vmatpush1.bf16.msra.mxu0 0
        %1373 = vmatprep.subr.bf16.mxu0 0
        %1374 = vmatpush1.bf16.msra.mxu0 0
        %1375 = vmatprep.subr.bf16.mxu0 0
        %1376 = vmatpush1.bf16.msra.mxu0 0
        %1377 = vmatprep.subr.bf16.mxu0 0
        %1378 = vmatpush1.bf16.msra.mxu0 0
        %1379 = vmatprep.subr.bf16.mxu0 0
        %1380 = vmatpush1.bf16.msra.mxu0 0
        %1381 = vmatprep.subr.bf16.mxu0 0
        %1382 = vmatpush1.bf16.msra.mxu0 0
        %1383 = vmatprep.subr.bf16.mxu0 0
        %1384 = vmatpush1.bf16.msra.mxu0 0
        %1385 = vmatprep.subr.bf16.mxu0 0
        %1386 = vmatpush1.bf16.msra.mxu0 0
        %1387 = vmatprep.subr.bf16.mxu0 0
        %1388 = vmatpush1.bf16.msra.mxu0 0
        %1389 = vmatprep.subr.bf16.mxu0 0
        %1390 = vmatpush1.bf16.msra.mxu0 0
        %1391 = vmatprep.subr.bf16.mxu0 0
        %1392 = vmatpush1.bf16.msra.mxu0 0
        %1393 = vmatprep.subr.bf16.mxu0 0
        %1394 = vmatpush1.bf16.msra.mxu0 0
        %1395 = vmatprep.mubr.bf16.mxu0 0
        %1396 = vmatmul.mubr.bf16.gmra.mrb[0].mxu0 %v1361
        %v1397 = vpop.f32.mrb[0].mxu0
        %v1398 = vadd.f32 0.0, %v1397
        %v1399 = vpop.f32.mrb[0].mxu0
        %v1400 = vpop.f32.mrb[0].mxu0
        %v1401 = vadd.f32 0.0, %v1400
        %v1402 = vpop.f32.mrb[0].mxu0
        %1403 = vdwg.mxu0
        %v1405 = vlaneseq
        %v1406 = vshrl.u32 %v1405, 7
        %v1407 = vsub.s32 0, %v1406
        %v1408 = vrot.slane %v1348, %v1407
        %v1410 = vadd.f32 %v1408, %v1398
        %v1411 = vadd.f32 %v1408, %v1401
        %v1412 = vld [vmem:[#allocation5] sm:$0xf]
        %v1413 = vld [vmem:[#allocation5 + $0x4] sm:$0xf]
        %v1416 = vunpack.c.l.b16 %v1412
        %v1417 = vunpack.c.l.b16 %v1413
        %v1418 = vpack.c.b16 %v1417, %v1416
        %1420 = vmatprep.subr.bf16.mxu0 0
        %1421 = vmatpush1.bf16.msra.mxu0 %v1418
        %1422 = vmatprep.subr.bf16.mxu0 0
        %1423 = vmatpush1.bf16.msra.mxu0 0
        %1424 = vmatprep.subr.bf16.mxu0 0
        %1425 = vmatpush1.bf16.msra.mxu0 0
        %1426 = vmatprep.subr.bf16.mxu0 0
        %1427 = vmatpush1.bf16.msra.mxu0 0
        %1428 = vmatprep.subr.bf16.mxu0 0
        %1429 = vmatpush1.bf16.msra.mxu0 0
        %1430 = vmatprep.subr.bf16.mxu0 0
        %1431 = vmatpush1.bf16.msra.mxu0 0
        %1432 = vmatprep.subr.bf16.mxu0 0
        %1433 = vmatpush1.bf16.msra.mxu0 0
        %1434 = vmatprep.subr.bf16.mxu0 0
        %1435 = vmatpush1.bf16.msra.mxu0 0
        %1436 = vmatprep.subr.bf16.mxu0 0
        %1437 = vmatpush1.bf16.msra.mxu0 0
        %1438 = vmatprep.subr.bf16.mxu0 0
        %1439 = vmatpush1.bf16.msra.mxu0 0
        %1440 = vmatprep.subr.bf16.mxu0 0
        %1441 = vmatpush1.bf16.msra.mxu0 0
        %1442 = vmatprep.subr.bf16.mxu0 0
        %1443 = vmatpush1.bf16.msra.mxu0 0
        %1444 = vmatprep.subr.bf16.mxu0 0
        %1445 = vmatpush1.bf16.msra.mxu0 0
        %1446 = vmatprep.subr.bf16.mxu0 0
        %1447 = vmatpush1.bf16.msra.mxu0 0
        %1448 = vmatprep.subr.bf16.mxu0 0
        %1449 = vmatpush1.bf16.msra.mxu0 0
        %1450 = vmatprep.subr.bf16.mxu0 0
        %1451 = vmatpush1.bf16.msra.mxu0 0
        %1452 = vmatprep.mubr.bf16.mxu0 0
        %1453 = vmatmul.mubr.bf16.gmra.mrb[0].mxu0 %v1361
        %v1454 = vpop.f32.mrb[0].mxu0
        %v1455 = vadd.f32 0.0, %v1454
        %v1456 = vpop.f32.mrb[0].mxu0
        %v1457 = vpop.f32.mrb[0].mxu0
        %v1458 = vadd.f32 0.0, %v1457
        %v1459 = vpop.f32.mrb[0].mxu0
        %1460 = vdwg.mxu0
        %v1462 = vlaneseq
        %v1463 = vshrl.u32 %v1462, 7
        %v1464 = vsub.s32 0, %v1463
        %v1465 = vrot.slane %v1349, %v1464
        %v1467 = vadd.f32 %v1465, %v1455
        %v1468 = vadd.f32 %v1465, %v1458
        %s1469 = scalar_lea.vmem [#allocation2], 8
        %v1470 = vld [vmem:[%s1469] sm:$0xf]
        %v1471 = vld [vmem:[%s1469 + $0x4] sm:$0xf]
        %v1472 = vshrl.u32 %v1352, 16
        %v1474 = vshll.u32 %v1352, 16
        %v1476 = vrot.slane %v1474, 1
        %v1477 = vor.u32 %v1472, %v1476
        %v1480 = vunpack.c.l.b16 %v1470
        %v1481 = vunpack.c.l.b16 %v1471
        %v1482 = vpack.c.b16 %v1481, %v1480
        %v1485 = vsel %vm1359, %v1477, 0
        %1487 = vmatprep.subr.bf16.mxu0 0
        %1488 = vmatpush1.bf16.msra.mxu0 %v1482
        %1489 = vmatprep.subr.bf16.mxu0 0
        %1490 = vmatpush1.bf16.msra.mxu0 0
        %1491 = vmatprep.subr.bf16.mxu0 0
        %1492 = vmatpush1.bf16.msra.mxu0 0
        %1493 = vmatprep.subr.bf16.mxu0 0
        %1494 = vmatpush1.bf16.msra.mxu0 0
        %1495 = vmatprep.subr.bf16.mxu0 0
        %1496 = vmatpush1.bf16.msra.mxu0 0
        %1497 = vmatprep.subr.bf16.mxu0 0
        %1498 = vmatpush1.bf16.msra.mxu0 0
        %1499 = vmatprep.subr.bf16.mxu0 0
        %1500 = vmatpush1.bf16.msra.mxu0 0
        %1501 = vmatprep.subr.bf16.mxu0 0
        %1502 = vmatpush1.bf16.msra.mxu0 0
        %1503 = vmatprep.subr.bf16.mxu0 0
        %1504 = vmatpush1.bf16.msra.mxu0 0
        %1505 = vmatprep.subr.bf16.mxu0 0
        %1506 = vmatpush1.bf16.msra.mxu0 0
        %1507 = vmatprep.subr.bf16.mxu0 0
        %1508 = vmatpush1.bf16.msra.mxu0 0
        %1509 = vmatprep.subr.bf16.mxu0 0
        %1510 = vmatpush1.bf16.msra.mxu0 0
        %1511 = vmatprep.subr.bf16.mxu0 0
        %1512 = vmatpush1.bf16.msra.mxu0 0
        %1513 = vmatprep.subr.bf16.mxu0 0
        %1514 = vmatpush1.bf16.msra.mxu0 0
        %1515 = vmatprep.subr.bf16.mxu0 0
        %1516 = vmatpush1.bf16.msra.mxu0 0
        %1517 = vmatprep.subr.bf16.mxu0 0
        %1518 = vmatpush1.bf16.msra.mxu0 0
        %1519 = vmatprep.mubr.bf16.mxu0 0
        %1520 = vmatmul.mubr.bf16.gmra.mrb[0].mxu0 %v1485
        %v1521 = vpop.f32.mrb[0].mxu0
        %v1522 = vadd.f32 0.0, %v1521
        %v1523 = vpop.f32.mrb[0].mxu0
        %v1524 = vpop.f32.mrb[0].mxu0
        %v1525 = vadd.f32 0.0, %v1524
        %v1526 = vpop.f32.mrb[0].mxu0
        %1527 = vdwg.mxu0
        %v1528 = vadd.f32 %v1410, %v1522
        %v1529 = vadd.f32 %v1411, %v1525
        %s1530 = scalar_lea.vmem [#allocation5], 8
        %v1531 = vld [vmem:[%s1530] sm:$0xf]
        %v1532 = vld [vmem:[%s1530 + $0x4] sm:$0xf]
        %v1535 = vunpack.c.l.b16 %v1531
        %v1536 = vunpack.c.l.b16 %v1532
        %v1537 = vpack.c.b16 %v1536, %v1535
        %1539 = vmatprep.subr.bf16.mxu0 0
        %1540 = vmatpush1.bf16.msra.mxu0 %v1537
        %1541 = vmatprep.subr.bf16.mxu0 0
        %1542 = vmatpush1.bf16.msra.mxu0 0
        %1543 = vmatprep.subr.bf16.mxu0 0
        %1544 = vmatpush1.bf16.msra.mxu0 0
        %1545 = vmatprep.subr.bf16.mxu0 0
        %1546 = vmatpush1.bf16.msra.mxu0 0
        %1547 = vmatprep.subr.bf16.mxu0 0
        %1548 = vmatpush1.bf16.msra.mxu0 0
        %1549 = vmatprep.subr.bf16.mxu0 0
        %1550 = vmatpush1.bf16.msra.mxu0 0
        %1551 = vmatprep.subr.bf16.mxu0 0
        %1552 = vmatpush1.bf16.msra.mxu0 0
        %1553 = vmatprep.subr.bf16.mxu0 0
        %1554 = vmatpush1.bf16.msra.mxu0 0
        %1555 = vmatprep.subr.bf16.mxu0 0
        %1556 = vmatpush1.bf16.msra.mxu0 0
        %1557 = vmatprep.subr.bf16.mxu0 0
        %1558 = vmatpush1.bf16.msra.mxu0 0
        %1559 = vmatprep.subr.bf16.mxu0 0
        %1560 = vmatpush1.bf16.msra.mxu0 0
        %1561 = vmatprep.subr.bf16.mxu0 0
        %1562 = vmatpush1.bf16.msra.mxu0 0
        %1563 = vmatprep.subr.bf16.mxu0 0
        %1564 = vmatpush1.bf16.msra.mxu0 0
        %1565 = vmatprep.subr.bf16.mxu0 0
        %1566 = vmatpush1.bf16.msra.mxu0 0
        %1567 = vmatprep.subr.bf16.mxu0 0
        %1568 = vmatpush1.bf16.msra.mxu0 0
        %1569 = vmatprep.subr.bf16.mxu0 0
        %1570 = vmatpush1.bf16.msra.mxu0 0
        %1571 = vmatprep.mubr.bf16.mxu0 0
        %1572 = vmatmul.mubr.bf16.gmra.mrb[0].mxu0 %v1485
        %v1573 = vpop.f32.mrb[0].mxu0
        %v1574 = vadd.f32 0.0, %v1573
        %v1575 = vpop.f32.mrb[0].mxu0
        %v1576 = vpop.f32.mrb[0].mxu0
        %v1577 = vadd.f32 0.0, %v1576
        %v1578 = vpop.f32.mrb[0].mxu0
        %1579 = vdwg.mxu0
        %v1580 = vadd.f32 %v1467, %v1574
        %v1581 = vadd.f32 %v1468, %v1577
        %s1582 = scalar_lea.vmem [#allocation2], 16
        %v1583 = vld [vmem:[%s1582] sm:$0xf]
        %v1584 = vld [vmem:[%s1582 + $0x4] sm:$0xf]
        %v1586 = vrot.slane %v1352, 1
        %v1589 = vunpack.c.l.b16 %v1583
        %v1590 = vunpack.c.l.b16 %v1584
        %v1591 = vpack.c.b16 %v1590, %v1589
        %v1594 = vsel %vm1359, %v1586, 0
        %1596 = vmatprep.subr.bf16.mxu0 0
        %1597 = vmatpush1.bf16.msra.mxu0 %v1591
        %1598 = vmatprep.subr.bf16.mxu0 0
        %1599 = vmatpush1.bf16.msra.mxu0 0
        %1600 = vmatprep.subr.bf16.mxu0 0
        %1601 = vmatpush1.bf16.msra.mxu0 0
        %1602 = vmatprep.subr.bf16.mxu0 0
        %1603 = vmatpush1.bf16.msra.mxu0 0
        %1604 = vmatprep.subr.bf16.mxu0 0
        %1605 = vmatpush1.bf16.msra.mxu0 0
        %1606 = vmatprep.subr.bf16.mxu0 0
        %1607 = vmatpush1.bf16.msra.mxu0 0
        %1608 = vmatprep.subr.bf16.mxu0 0
        %1609 = vmatpush1.bf16.msra.mxu0 0
        %1610 = vmatprep.subr.bf16.mxu0 0
        %1611 = vmatpush1.bf16.msra.mxu0 0
        %1612 = vmatprep.subr.bf16.mxu0 0
        %1613 = vmatpush1.bf16.msra.mxu0 0
        %1614 = vmatprep.subr.bf16.mxu0 0
        %1615 = vmatpush1.bf16.msra.mxu0 0
        %1616 = vmatprep.subr.bf16.mxu0 0
        %1617 = vmatpush1.bf16.msra.mxu0 0
        %1618 = vmatprep.subr.bf16.mxu0 0
        %1619 = vmatpush1.bf16.msra.mxu0 0
        %1620 = vmatprep.subr.bf16.mxu0 0
        %1621 = vmatpush1.bf16.msra.mxu0 0
        %1622 = vmatprep.subr.bf16.mxu0 0
        %1623 = vmatpush1.bf16.msra.mxu0 0
        %1624 = vmatprep.subr.bf16.mxu0 0
        %1625 = vmatpush1.bf16.msra.mxu0 0
        %1626 = vmatprep.subr.bf16.mxu0 0
        %1627 = vmatpush1.bf16.msra.mxu0 0
        %1628 = vmatprep.mubr.bf16.mxu0 0
        %1629 = vmatmul.mubr.bf16.gmra.mrb[0].mxu0 %v1594
        %v1630 = vpop.f32.mrb[0].mxu0
        %v1631 = vadd.f32 0.0, %v1630
        %v1632 = vpop.f32.mrb[0].mxu0
        %v1633 = vpop.f32.mrb[0].mxu0
        %v1634 = vadd.f32 0.0, %v1633
        %v1635 = vpop.f32.mrb[0].mxu0
        %1636 = vdwg.mxu0
        %v1637 = vadd.f32 %v1528, %v1631
        %v1638 = vadd.f32 %v1529, %v1634
        %s1639 = scalar_lea.vmem [#allocation5], 16
        %v1640 = vld [vmem:[%s1639] sm:$0xf]
        %v1641 = vld [vmem:[%s1639 + $0x4] sm:$0xf]
        %v1644 = vunpack.c.l.b16 %v1640
        %v1645 = vunpack.c.l.b16 %v1641
        %v1646 = vpack.c.b16 %v1645, %v1644
        %1648 = vmatprep.subr.bf16.mxu0 0
        %1649 = vmatpush1.bf16.msra.mxu0 %v1646
        %1650 = vmatprep.subr.bf16.mxu0 0
        %1651 = vmatpush1.bf16.msra.mxu0 0
        %1652 = vmatprep.subr.bf16.mxu0 0
        %1653 = vmatpush1.bf16.msra.mxu0 0
        %1654 = vmatprep.subr.bf16.mxu0 0
        %1655 = vmatpush1.bf16.msra.mxu0 0
        %1656 = vmatprep.subr.bf16.mxu0 0
        %1657 = vmatpush1.bf16.msra.mxu0 0
        %1658 = vmatprep.subr.bf16.mxu0 0
        %1659 = vmatpush1.bf16.msra.mxu0 0
        %1660 = vmatprep.subr.bf16.mxu0 0
        %1661 = vmatpush1.bf16.msra.mxu0 0
        %1662 = vmatprep.subr.bf16.mxu0 0
        %1663 = vmatpush1.bf16.msra.mxu0 0
        %1664 = vmatprep.subr.bf16.mxu0 0
        %1665 = vmatpush1.bf16.msra.mxu0 0
        %1666 = vmatprep.subr.bf16.mxu0 0
        %1667 = vmatpush1.bf16.msra.mxu0 0
        %1668 = vmatprep.subr.bf16.mxu0 0
        %1669 = vmatpush1.bf16.msra.mxu0 0
        %1670 = vmatprep.subr.bf16.mxu0 0
        %1671 = vmatpush1.bf16.msra.mxu0 0
        %1672 = vmatprep.subr.bf16.mxu0 0
        %1673 = vmatpush1.bf16.msra.mxu0 0
        %1674 = vmatprep.subr.bf16.mxu0 0
        %1675 = vmatpush1.bf16.msra.mxu0 0
        %1676 = vmatprep.subr.bf16.mxu0 0
        %1677 = vmatpush1.bf16.msra.mxu0 0
        %1678 = vmatprep.subr.bf16.mxu0 0
        %1679 = vmatpush1.bf16.msra.mxu0 0
        %1680 = vmatprep.mubr.bf16.mxu0 0
        %1681 = vmatmul.mubr.bf16.gmra.mrb[0].mxu0 %v1594
        %v1682 = vpop.f32.mrb[0].mxu0
        %v1683 = vadd.f32 0.0, %v1682
        %v1684 = vpop.f32.mrb[0].mxu0
        %v1685 = vpop.f32.mrb[0].mxu0
        %v1686 = vadd.f32 0.0, %v1685
        %v1687 = vpop.f32.mrb[0].mxu0
        %1688 = vdwg.mxu0
        %v1689 = vadd.f32 %v1580, %v1683
        %v1690 = vadd.f32 %v1581, %v1686
        %v1691 = vld [vmem:[%s11] sm:$0xf]
        %v1692 = vld [vmem:[%s11 + $0x4] sm:$0xf]
        %v1695 = vunpack.c.l.b16 %v1691
        %v1696 = vunpack.c.l.b16 %v1692
        %v1697 = vpack.c.b16 %v1696, %v1695
        %1699 = vmatprep.subr.bf16.mxu0 0
        %1700 = vmatpush1.bf16.msra.mxu0 %v1697
        %1701 = vmatprep.subr.bf16.mxu0 0
        %1702 = vmatpush1.bf16.msra.mxu0 0
        %1703 = vmatprep.subr.bf16.mxu0 0
        %1704 = vmatpush1.bf16.msra.mxu0 0
        %1705 = vmatprep.subr.bf16.mxu0 0
        %1706 = vmatpush1.bf16.msra.mxu0 0
        %1707 = vmatprep.subr.bf16.mxu0 0
        %1708 = vmatpush1.bf16.msra.mxu0 0
        %1709 = vmatprep.subr.bf16.mxu0 0
        %1710 = vmatpush1.bf16.msra.mxu0 0
        %1711 = vmatprep.subr.bf16.mxu0 0
        %1712 = vmatpush1.bf16.msra.mxu0 0
        %1713 = vmatprep.subr.bf16.mxu0 0
        %1714 = vmatpush1.bf16.msra.mxu0 0
        %1715 = vmatprep.subr.bf16.mxu0 0
        %1716 = vmatpush1.bf16.msra.mxu0 0
        %1717 = vmatprep.subr.bf16.mxu0 0
        %1718 = vmatpush1.bf16.msra.mxu0 0
        %1719 = vmatprep.subr.bf16.mxu0 0
        %1720 = vmatpush1.bf16.msra.mxu0 0
        %1721 = vmatprep.subr.bf16.mxu0 0
        %1722 = vmatpush1.bf16.msra.mxu0 0
        %1723 = vmatprep.subr.bf16.mxu0 0
        %1724 = vmatpush1.bf16.msra.mxu0 0
        %1725 = vmatprep.subr.bf16.mxu0 0
        %1726 = vmatpush1.bf16.msra.mxu0 0
        %1727 = vmatprep.subr.bf16.mxu0 0
        %1728 = vmatpush1.bf16.msra.mxu0 0
        %1729 = vmatprep.subr.bf16.mxu0 0
        %1730 = vmatpush1.bf16.msra.mxu0 0
        %1731 = vmatprep.mubr.bf16.mxu0 0
        %1732 = vmatmul.mubr.bf16.gmra.mrb[0].mxu0 %v1594
        %v1733 = vpop.f32.mrb[0].mxu0
        %v1734 = vadd.f32 0.0, %v1733
        %v1735 = vpop.f32.mrb[0].mxu0
        %v1736 = vpop.f32.mrb[0].mxu0
        %v1737 = vadd.f32 0.0, %v1736
        %v1738 = vpop.f32.mrb[0].mxu0
        %1739 = vdwg.mxu0
        %v1740 = vadd.f32 %v1637, %v1734
        %v1741 = vadd.f32 %v1638, %v1737
        %v1742 = vxor.u32 %v1689, 2147483648
        %v1743 = vxor.u32 %v1690, 2147483648
        %v1744 = vmul.f32 %v1742, 1.442695
        %v1745 = vpow.pop %v1744
        %v1746 = vmul.f32 %v1743, 1.442695
        %v1747 = vpow.pop %v1746
        %v1748 = vadd.f32 %v1745, 1.0
        %v1749 = vadd.f32 %v1747, 1.0
        %v1750 = vrcp.pop %v1748
        %v1751 = vmul.f32 1.0, %v1750
        %v1752 = vrcp.pop %v1749
        %v1753 = vmul.f32 1.0, %v1752
        %v1754 = vmul.f32 %v1740, %v1751
        %v1755 = vmul.f32 %v1741, %v1753
        %v1756 = vld [vmem:[#allocation7] sm:$0xf]
        %v1757 = vld [vmem:[#allocation7 + $0x4] sm:$0xf]
        %v1758 = vld [vmem:[#allocation7 + $0x8] sm:$0xf]
        %v1759 = vld [vmem:[#allocation7 + $0xc] sm:$0xf]
        %v1760 = vld [vmem:[#allocation7 + $0x10] sm:$0xf]
        %v1761 = vld [vmem:[#allocation7 + $0x14] sm:$0xf]
        %v1762 = vld [vmem:[#allocation7 + $0x18] sm:$0xf]
        %v1763 = vld [vmem:[#allocation7 + $0x1c] sm:$0xf]
        %v1764 = vld [vmem:[#allocation7 + $0x20] sm:$0xf]
        %v1765 = vld [vmem:[#allocation7 + $0x24] sm:$0xf]
        %v1766 = vld [vmem:[#allocation7 + $0x28] sm:$0xf]
        %v1767 = vld [vmem:[#allocation7 + $0x2c] sm:$0xf]
        %v1768 = vld [vmem:[#allocation7 + $0x30] sm:$0xf]
        %v1769 = vld [vmem:[#allocation7 + $0x34] sm:$0xf]
        %v1770 = vld [vmem:[#allocation7 + $0x38] sm:$0xf]
        %v1771 = vld [vmem:[#allocation7 + $0x3c] sm:$0xf]
        %v1772 = vpack.c.bf16 %v1755, %v1754
        %v1773 = vld [vmem:[%s15] sm:$0x1]
        %v1775 = vlaneseq
        %v1776 = vshrl.u32 %v1775, 7
        %v1777 = vsub.s32 0, %v1776
        %v1778 = vrot.slane %v1773, %v1777
        %v1796 = vunpack.c.l.b16 %v1756
        %v1797 = vunpack.c.l.b16 %v1757
        %v1798 = vunpack.c.l.b16 %v1758
        %v1799 = vunpack.c.l.b16 %v1759
        %v1800 = vunpack.c.l.b16 %v1760
        %v1801 = vunpack.c.l.b16 %v1761
        %v1802 = vunpack.c.l.b16 %v1762
        %v1803 = vunpack.c.l.b16 %v1763
        %v1804 = vunpack.c.l.b16 %v1764
        %v1805 = vunpack.c.l.b16 %v1765
        %v1806 = vunpack.c.l.b16 %v1766
        %v1807 = vunpack.c.l.b16 %v1767
        %v1808 = vunpack.c.l.b16 %v1768
        %v1809 = vunpack.c.l.b16 %v1769
        %v1810 = vunpack.c.l.b16 %v1770
        %v1811 = vunpack.c.l.b16 %v1771
        %v1812 = vpack.c.b16 %v1797, %v1796
        %v1813 = vpack.c.b16 %v1799, %v1798
        %v1814 = vpack.c.b16 %v1801, %v1800
        %v1815 = vpack.c.b16 %v1803, %v1802
        %v1816 = vpack.c.b16 %v1805, %v1804
        %v1817 = vpack.c.b16 %v1807, %v1806
        %v1818 = vpack.c.b16 %v1809, %v1808
        %v1819 = vpack.c.b16 %v1811, %v1810
        %1828 = vmatprep.subr.bf16.mxu0 0
        %1829 = vmatpush1.bf16.msra.mxu0 %v1812
        %1830 = vmatprep.subr.bf16.mxu0 0
        %1831 = vmatpush1.bf16.msra.mxu0 %v1813
        %1832 = vmatprep.subr.bf16.mxu0 0
        %1833 = vmatpush1.bf16.msra.mxu0 %v1814
        %1834 = vmatprep.subr.bf16.mxu0 0
        %1835 = vmatpush1.bf16.msra.mxu0 %v1815
        %1836 = vmatprep.subr.bf16.mxu0 0
        %1837 = vmatpush1.bf16.msra.mxu0 %v1816
        %1838 = vmatprep.subr.bf16.mxu0 0
        %1839 = vmatpush1.bf16.msra.mxu0 %v1817
        %1840 = vmatprep.subr.bf16.mxu0 0
        %1841 = vmatpush1.bf16.msra.mxu0 %v1818
        %1842 = vmatprep.subr.bf16.mxu0 0
        %1843 = vmatpush1.bf16.msra.mxu0 %v1819
        %1844 = vmatprep.subr.bf16.mxu0 0
        %1845 = vmatpush1.bf16.msra.mxu0 0
        %1846 = vmatprep.subr.bf16.mxu0 0
        %1847 = vmatpush1.bf16.msra.mxu0 0
        %1848 = vmatprep.subr.bf16.mxu0 0
        %1849 = vmatpush1.bf16.msra.mxu0 0
        %1850 = vmatprep.subr.bf16.mxu0 0
        %1851 = vmatpush1.bf16.msra.mxu0 0
        %1852 = vmatprep.subr.bf16.mxu0 0
        %1853 = vmatpush1.bf16.msra.mxu0 0
        %1854 = vmatprep.subr.bf16.mxu0 0
        %1855 = vmatpush1.bf16.msra.mxu0 0
        %1856 = vmatprep.subr.bf16.mxu0 0
        %1857 = vmatpush1.bf16.msra.mxu0 0
        %1858 = vmatprep.subr.bf16.mxu0 0
        %1859 = vmatpush1.bf16.msra.mxu0 0
        %1860 = vmatprep.mubr.bf16.mxu0 0
        %1861 = vmatmul.mubr.bf16.gmra.mrb[0].mxu0 %v1772
        %v1862 = vpop.f32.mrb[0].mxu0
        %v1863 = vadd.f32 %v1778, %v1862
        %v1864 = vpop.f32.mrb[0].mxu0
        %v1865 = vpop.f32.mrb[0].mxu0
        %v1866 = vadd.f32 %v1778, %v1865
        %v1867 = vpop.f32.mrb[0].mxu0
        %1868 = vdwg.mxu0
        %v1869 = vadd.f32 %v1863, %v1754
        %v1870 = vadd.f32 %v1866, %v1755
        %v1871 = vmax.f32 %v1869, 0.0
        %v1872 = vmax.f32 %v1870, 0.0
        %v1873 = vld [vmem:[#allocation10] sm:$0x1]
        %v1874 = vld [vmem:[#allocation8] sm:$0xf]
        %v1875 = vld [vmem:[#allocation8 + $0x4] sm:$0xf]
        %v1876 = vld [vmem:[#allocation8 + $0x8] sm:$0xf]
        %v1877 = vld [vmem:[#allocation8 + $0xc] sm:$0xf]
        %v1878 = vld [vmem:[#allocation8 + $0x10] sm:$0xf]
        %v1879 = vld [vmem:[#allocation8 + $0x14] sm:$0xf]
        %v1880 = vld [vmem:[#allocation8 + $0x18] sm:$0xf]
        %v1881 = vld [vmem:[#allocation8 + $0x1c] sm:$0xf]
        %v1882 = vld [vmem:[#allocation8 + $0x20] sm:$0xf]
        %v1883 = vld [vmem:[#allocation8 + $0x24] sm:$0xf]
        %v1884 = vld [vmem:[#allocation8 + $0x28] sm:$0xf]
        %v1885 = vld [vmem:[#allocation8 + $0x2c] sm:$0xf]
        %v1886 = vld [vmem:[#allocation8 + $0x30] sm:$0xf]
        %v1887 = vld [vmem:[#allocation8 + $0x34] sm:$0xf]
        %v1888 = vld [vmem:[#allocation8 + $0x38] sm:$0xf]
        %v1889 = vld [vmem:[#allocation8 + $0x3c] sm:$0xf]
        %v1890 = vpack.c.bf16 %v1871, %v1871
        %v1907 = vunpack.c.l.b16 %v1874
        %v1908 = vunpack.c.l.b16 %v1875
        %v1909 = vunpack.c.l.b16 %v1876
        %v1910 = vunpack.c.l.b16 %v1877
        %v1911 = vunpack.c.l.b16 %v1878
        %v1912 = vunpack.c.l.b16 %v1879
        %v1913 = vunpack.c.l.b16 %v1880
        %v1914 = vunpack.c.l.b16 %v1881
        %v1915 = vunpack.c.l.b16 %v1882
        %v1916 = vunpack.c.l.b16 %v1883
        %v1917 = vunpack.c.l.b16 %v1884
        %v1918 = vunpack.c.l.b16 %v1885
        %v1919 = vunpack.c.l.b16 %v1886
        %v1920 = vunpack.c.l.b16 %v1887
        %v1921 = vunpack.c.l.b16 %v1888
        %v1922 = vunpack.c.l.b16 %v1889
        %v1923 = vpack.c.b16 %v1908, %v1907
        %v1924 = vpack.c.b16 %v1910, %v1909
        %v1925 = vpack.c.b16 %v1912, %v1911
        %v1926 = vpack.c.b16 %v1914, %v1913
        %v1927 = vpack.c.b16 %v1916, %v1915
        %v1928 = vpack.c.b16 %v1918, %v1917
        %v1929 = vpack.c.b16 %v1920, %v1919
        %v1930 = vpack.c.b16 %v1922, %v1921
        %1939 = vmatprep.subr.bf16.mxu0 0
        %1940 = vmatpush1.bf16.msra.mxu0 %v1923
        %1941 = vmatprep.subr.bf16.mxu0 0
        %1942 = vmatpush1.bf16.msra.mxu0 %v1924
        %1943 = vmatprep.subr.bf16.mxu0 0
        %1944 = vmatpush1.bf16.msra.mxu0 %v1925
        %1945 = vmatprep.subr.bf16.mxu0 0
        %1946 = vmatpush1.bf16.msra.mxu0 %v1926
        %1947 = vmatprep.subr.bf16.mxu0 0
        %1948 = vmatpush1.bf16.msra.mxu0 %v1927
        %1949 = vmatprep.subr.bf16.mxu0 0
        %1950 = vmatpush1.bf16.msra.mxu0 %v1928
        %1951 = vmatprep.subr.bf16.mxu0 0
        %1952 = vmatpush1.bf16.msra.mxu0 %v1929
        %1953 = vmatprep.subr.bf16.mxu0 0
        %1954 = vmatpush1.bf16.msra.mxu0 %v1930
        %1955 = vmatprep.subr.bf16.mxu0 0
        %1956 = vmatpush1.bf16.msra.mxu0 0
        %1957 = vmatprep.subr.bf16.mxu0 0
        %1958 = vmatpush1.bf16.msra.mxu0 0
        %1959 = vmatprep.subr.bf16.mxu0 0
        %1960 = vmatpush1.bf16.msra.mxu0 0
        %1961 = vmatprep.subr.bf16.mxu0 0
        %1962 = vmatpush1.bf16.msra.mxu0 0
        %1963 = vmatprep.subr.bf16.mxu0 0
        %1964 = vmatpush1.bf16.msra.mxu0 0
        %1965 = vmatprep.subr.bf16.mxu0 0
        %1966 = vmatpush1.bf16.msra.mxu0 0
        %1967 = vmatprep.subr.bf16.mxu0 0
        %1968 = vmatpush1.bf16.msra.mxu0 0
        %1969 = vmatprep.subr.bf16.mxu0 0
        %1970 = vmatpush1.bf16.msra.mxu0 0
        %1971 = vmatprep.mubr.bf16.mxu0 0
        %1972 = vmatmul.mubr.bf16.gmra.mrb[0].mxu0 %v1890
        %v1973 = vpop.f32.mrb[0].mxu0
        %v1974 = vadd.f32 0.0, %v1973
        %v1975 = vpop.f32.mrb[0].mxu0
        %v1976 = vpop.f32.mrb[0].mxu0
        %v1977 = vpop.f32.mrb[0].mxu0
        %1978 = vdwg.mxu0
        %v1980 = vlaneseq
        %v1981 = vshrl.u32 %v1980, 7
        %v1982 = vsub.s32 0, %v1981
        %v1983 = vrot.slane %v1873, %v1982
        %v1985 = vadd.f32 %v1983, %v1974
        %s1986 = scalar_lea.vmem [#allocation8], 64
        %v1987 = vld [vmem:[%s1986] sm:$0xf]
        %v1988 = vld [vmem:[%s1986 + $0x4] sm:$0xf]
        %v1989 = vld [vmem:[%s1986 + $0x8] sm:$0xf]
        %v1990 = vld [vmem:[%s1986 + $0xc] sm:$0xf]
        %v1991 = vld [vmem:[%s1986 + $0x10] sm:$0xf]
        %v1992 = vld [vmem:[%s1986 + $0x14] sm:$0xf]
        %v1993 = vld [vmem:[%s1986 + $0x18] sm:$0xf]
        %v1994 = vld [vmem:[%s1986 + $0x1c] sm:$0xf]
        %v1995 = vld [vmem:[%s1986 + $0x20] sm:$0xf]
        %v1996 = vld [vmem:[%s1986 + $0x24] sm:$0xf]
        %v1997 = vld [vmem:[%s1986 + $0x28] sm:$0xf]
        %v1998 = vld [vmem:[%s1986 + $0x2c] sm:$0xf]
        %v1999 = vld [vmem:[%s1986 + $0x30] sm:$0xf]
        %v2000 = vld [vmem:[%s1986 + $0x34] sm:$0xf]
        %v2001 = vld [vmem:[%s1986 + $0x38] sm:$0xf]
        %v2002 = vld [vmem:[%s1986 + $0x3c] sm:$0xf]
        %v2003 = vpack.c.bf16 %v1872, %v1871
        %v2005 = vshrl.u32 %v2003, 16
        %v2007 = vshll.u32 %v2003, 16
        %v2009 = vrot.slane %v2007, 1
        %v2010 = vor.u32 %v2005, %v2009
        %v2028 = vunpack.c.l.b16 %v1987
        %v2029 = vunpack.c.l.b16 %v1988
        %v2030 = vunpack.c.l.b16 %v1989
        %v2031 = vunpack.c.l.b16 %v1990
        %v2032 = vunpack.c.l.b16 %v1991
        %v2033 = vunpack.c.l.b16 %v1992
        %v2034 = vunpack.c.l.b16 %v1993
        %v2035 = vunpack.c.l.b16 %v1994
        %v2036 = vunpack.c.l.b16 %v1995
        %v2037 = vunpack.c.l.b16 %v1996
        %v2038 = vunpack.c.l.b16 %v1997
        %v2039 = vunpack.c.l.b16 %v1998
        %v2040 = vunpack.c.l.b16 %v1999
        %v2041 = vunpack.c.l.b16 %v2000
        %v2042 = vunpack.c.l.b16 %v2001
        %v2043 = vunpack.c.l.b16 %v2002
        %v2044 = vpack.c.b16 %v2029, %v2028
        %v2045 = vpack.c.b16 %v2031, %v2030
        %v2046 = vpack.c.b16 %v2033, %v2032
        %v2047 = vpack.c.b16 %v2035, %v2034
        %v2048 = vpack.c.b16 %v2037, %v2036
        %v2049 = vpack.c.b16 %v2039, %v2038
        %v2050 = vpack.c.b16 %v2041, %v2040
        %v2051 = vpack.c.b16 %v2043, %v2042
        %2060 = vmatprep.subr.bf16.mxu0 0
        %2061 = vmatpush1.bf16.msra.mxu0 %v2044
        %2062 = vmatprep.subr.bf16.mxu0 0
        %2063 = vmatpush1.bf16.msra.mxu0 %v2045
        %2064 = vmatprep.subr.bf16.mxu0 0
        %2065 = vmatpush1.bf16.msra.mxu0 %v2046
        %2066 = vmatprep.subr.bf16.mxu0 0
        %2067 = vmatpush1.bf16.msra.mxu0 %v2047
        %2068 = vmatprep.subr.bf16.mxu0 0
        %2069 = vmatpush1.bf16.msra.mxu0 %v2048
        %2070 = vmatprep.subr.bf16.mxu0 0
        %2071 = vmatpush1.bf16.msra.mxu0 %v2049
        %2072 = vmatprep.subr.bf16.mxu0 0
        %2073 = vmatpush1.bf16.msra.mxu0 %v2050
        %2074 = vmatprep.subr.bf16.mxu0 0
        %2075 = vmatpush1.bf16.msra.mxu0 %v2051
        %2076 = vmatprep.subr.bf16.mxu0 0
        %2077 = vmatpush1.bf16.msra.mxu0 0
        %2078 = vmatprep.subr.bf16.mxu0 0
        %2079 = vmatpush1.bf16.msra.mxu0 0
        %2080 = vmatprep.subr.bf16.mxu0 0
        %2081 = vmatpush1.bf16.msra.mxu0 0
        %2082 = vmatprep.subr.bf16.mxu0 0
        %2083 = vmatpush1.bf16.msra.mxu0 0
        %2084 = vmatprep.subr.bf16.mxu0 0
        %2085 = vmatpush1.bf16.msra.mxu0 0
        %2086 = vmatprep.subr.bf16.mxu0 0
        %2087 = vmatpush1.bf16.msra.mxu0 0
        %2088 = vmatprep.subr.bf16.mxu0 0
        %2089 = vmatpush1.bf16.msra.mxu0 0
        %2090 = vmatprep.subr.bf16.mxu0 0
        %2091 = vmatpush1.bf16.msra.mxu0 0
        %2092 = vmatprep.mubr.bf16.mxu0 0
        %2093 = vmatmul.mubr.bf16.gmra.mrb[0].mxu0 %v2010
        %v2094 = vpop.f32.mrb[0].mxu0
        %v2095 = vadd.f32 0.0, %v2094
        %v2096 = vpop.f32.mrb[0].mxu0
        %v2097 = vpop.f32.mrb[0].mxu0
        %v2098 = vpop.f32.mrb[0].mxu0
        %2099 = vdwg.mxu0
        %v2100 = vadd.f32 %v1985, %v2095
        %s2101 = scalar_lea.vmem [#allocation8], 128
        %v2102 = vld [vmem:[%s2101] sm:$0xf]
        %v2103 = vld [vmem:[%s2101 + $0x4] sm:$0xf]
        %v2104 = vld [vmem:[%s2101 + $0x8] sm:$0xf]
        %v2105 = vld [vmem:[%s2101 + $0xc] sm:$0xf]
        %v2106 = vld [vmem:[%s2101 + $0x10] sm:$0xf]
        %v2107 = vld [vmem:[%s2101 + $0x14] sm:$0xf]
        %v2108 = vld [vmem:[%s2101 + $0x18] sm:$0xf]
        %v2109 = vld [vmem:[%s2101 + $0x1c] sm:$0xf]
        %v2110 = vld [vmem:[%s2101 + $0x20] sm:$0xf]
        %v2111 = vld [vmem:[%s2101 + $0x24] sm:$0xf]
        %v2112 = vld [vmem:[%s2101 + $0x28] sm:$0xf]
        %v2113 = vld [vmem:[%s2101 + $0x2c] sm:$0xf]
        %v2114 = vld [vmem:[%s2101 + $0x30] sm:$0xf]
        %v2115 = vld [vmem:[%s2101 + $0x34] sm:$0xf]
        %v2116 = vld [vmem:[%s2101 + $0x38] sm:$0xf]
        %v2117 = vld [vmem:[%s2101 + $0x3c] sm:$0xf]
        %v2119 = vrot.slane %v2003, 1
        %v2137 = vunpack.c.l.b16 %v2102
        %v2138 = vunpack.c.l.b16 %v2103
        %v2139 = vunpack.c.l.b16 %v2104
        %v2140 = vunpack.c.l.b16 %v2105
        %v2141 = vunpack.c.l.b16 %v2106
        %v2142 = vunpack.c.l.b16 %v2107
        %v2143 = vunpack.c.l.b16 %v2108
        %v2144 = vunpack.c.l.b16 %v2109
        %v2145 = vunpack.c.l.b16 %v2110
        %v2146 = vunpack.c.l.b16 %v2111
        %v2147 = vunpack.c.l.b16 %v2112
        %v2148 = vunpack.c.l.b16 %v2113
        %v2149 = vunpack.c.l.b16 %v2114
        %v2150 = vunpack.c.l.b16 %v2115
        %v2151 = vunpack.c.l.b16 %v2116
        %v2152 = vunpack.c.l.b16 %v2117
        %v2153 = vpack.c.b16 %v2138, %v2137
        %v2154 = vpack.c.b16 %v2140, %v2139
        %v2155 = vpack.c.b16 %v2142, %v2141
        %v2156 = vpack.c.b16 %v2144, %v2143
        %v2157 = vpack.c.b16 %v2146, %v2145
        %v2158 = vpack.c.b16 %v2148, %v2147
        %v2159 = vpack.c.b16 %v2150, %v2149
        %v2160 = vpack.c.b16 %v2152, %v2151
        %2169 = vmatprep.subr.bf16.mxu0 0
        %2170 = vmatpush1.bf16.msra.mxu0 %v2153
        %2171 = vmatprep.subr.bf16.mxu0 0
        %2172 = vmatpush1.bf16.msra.mxu0 %v2154
        %2173 = vmatprep.subr.bf16.mxu0 0
        %2174 = vmatpush1.bf16.msra.mxu0 %v2155
        %2175 = vmatprep.subr.bf16.mxu0 0
        %2176 = vmatpush1.bf16.msra.mxu0 %v2156
        %2177 = vmatprep.subr.bf16.mxu0 0
        %2178 = vmatpush1.bf16.msra.mxu0 %v2157
        %2179 = vmatprep.subr.bf16.mxu0 0
        %2180 = vmatpush1.bf16.msra.mxu0 %v2158
        %2181 = vmatprep.subr.bf16.mxu0 0
        %2182 = vmatpush1.bf16.msra.mxu0 %v2159
        %2183 = vmatprep.subr.bf16.mxu0 0
        %2184 = vmatpush1.bf16.msra.mxu0 %v2160
        %2185 = vmatprep.subr.bf16.mxu0 0
        %2186 = vmatpush1.bf16.msra.mxu0 0
        %2187 = vmatprep.subr.bf16.mxu0 0
        %2188 = vmatpush1.bf16.msra.mxu0 0
        %2189 = vmatprep.subr.bf16.mxu0 0
        %2190 = vmatpush1.bf16.msra.mxu0 0
        %2191 = vmatprep.subr.bf16.mxu0 0
        %2192 = vmatpush1.bf16.msra.mxu0 0
        %2193 = vmatprep.subr.bf16.mxu0 0
        %2194 = vmatpush1.bf16.msra.mxu0 0
        %2195 = vmatprep.subr.bf16.mxu0 0
        %2196 = vmatpush1.bf16.msra.mxu0 0
        %2197 = vmatprep.subr.bf16.mxu0 0
        %2198 = vmatpush1.bf16.msra.mxu0 0
        %2199 = vmatprep.subr.bf16.mxu0 0
        %2200 = vmatpush1.bf16.msra.mxu0 0
        %2201 = vmatprep.mubr.bf16.mxu0 0
        %2202 = vmatmul.mubr.bf16.gmra.mrb[0].mxu0 %v2119
        %v2203 = vpop.f32.mrb[0].mxu0
        %v2204 = vadd.f32 0.0, %v2203
        %v2205 = vpop.f32.mrb[0].mxu0
        %v2206 = vpop.f32.mrb[0].mxu0
        %v2207 = vpop.f32.mrb[0].mxu0
        %2208 = vdwg.mxu0
        %v2209 = vadd.f32 %v2100, %v2204
        %v2210 = vld [vmem:[#allocation11] sm:$0xf]
        %v2211 = vld [vmem:[#allocation11 + $0x4] sm:$0xf]
        %v2212 = vld [vmem:[#allocation11 + $0x8] sm:$0xf]
        %v2213 = vld [vmem:[#allocation11 + $0xc] sm:$0xf]
        %v2214 = vld [vmem:[#allocation11 + $0x10] sm:$0xf]
        %v2215 = vld [vmem:[#allocation11 + $0x14] sm:$0xf]
        %v2216 = vld [vmem:[#allocation11 + $0x18] sm:$0xf]
        %v2217 = vld [vmem:[#allocation11 + $0x1c] sm:$0xf]
        %v2218 = vld [vmem:[#allocation11 + $0x20] sm:$0xf]
        %v2219 = vld [vmem:[#allocation11 + $0x24] sm:$0xf]
        %v2220 = vld [vmem:[#allocation11 + $0x28] sm:$0xf]
        %v2221 = vld [vmem:[#allocation11 + $0x2c] sm:$0xf]
        %v2222 = vld [vmem:[#allocation11 + $0x30] sm:$0xf]
        %v2223 = vld [vmem:[#allocation11 + $0x34] sm:$0xf]
        %v2224 = vld [vmem:[#allocation11 + $0x38] sm:$0xf]
        %v2225 = vld [vmem:[#allocation11 + $0x3c] sm:$0xf]
        %v2242 = vunpack.c.l.b16 %v2210
        %v2243 = vunpack.c.l.b16 %v2211
        %v2244 = vunpack.c.l.b16 %v2212
        %v2245 = vunpack.c.l.b16 %v2213
        %v2246 = vunpack.c.l.b16 %v2214
        %v2247 = vunpack.c.l.b16 %v2215
        %v2248 = vunpack.c.l.b16 %v2216
        %v2249 = vunpack.c.l.b16 %v2217
        %v2250 = vunpack.c.l.b16 %v2218
        %v2251 = vunpack.c.l.b16 %v2219
        %v2252 = vunpack.c.l.b16 %v2220
        %v2253 = vunpack.c.l.b16 %v2221
        %v2254 = vunpack.c.l.b16 %v2222
        %v2255 = vunpack.c.l.b16 %v2223
        %v2256 = vunpack.c.l.b16 %v2224
        %v2257 = vunpack.c.l.b16 %v2225
        %v2258 = vpack.c.b16 %v2243, %v2242
        %v2259 = vpack.c.b16 %v2245, %v2244
        %v2260 = vpack.c.b16 %v2247, %v2246
        %v2261 = vpack.c.b16 %v2249, %v2248
        %v2262 = vpack.c.b16 %v2251, %v2250
        %v2263 = vpack.c.b16 %v2253, %v2252
        %v2264 = vpack.c.b16 %v2255, %v2254
        %v2265 = vpack.c.b16 %v2257, %v2256
        %2274 = vmatprep.subr.bf16.mxu0 0
        %2275 = vmatpush1.bf16.msra.mxu0 %v2258
        %2276 = vmatprep.subr.bf16.mxu0 0
        %2277 = vmatpush1.bf16.msra.mxu0 %v2259
        %2278 = vmatprep.subr.bf16.mxu0 0
        %2279 = vmatpush1.bf16.msra.mxu0 %v2260
        %2280 = vmatprep.subr.bf16.mxu0 0
        %2281 = vmatpush1.bf16.msra.mxu0 %v2261
        %2282 = vmatprep.subr.bf16.mxu0 0
        %2283 = vmatpush1.bf16.msra.mxu0 %v2262
        %2284 = vmatprep.subr.bf16.mxu0 0
        %2285 = vmatpush1.bf16.msra.mxu0 %v2263
        %2286 = vmatprep.subr.bf16.mxu0 0
        %2287 = vmatpush1.bf16.msra.mxu0 %v2264
        %2288 = vmatprep.subr.bf16.mxu0 0
        %2289 = vmatpush1.bf16.msra.mxu0 %v2265
        %2290 = vmatprep.subr.bf16.mxu0 0
        %2291 = vmatpush1.bf16.msra.mxu0 0
        %2292 = vmatprep.subr.bf16.mxu0 0
        %2293 = vmatpush1.bf16.msra.mxu0 0
        %2294 = vmatprep.subr.bf16.mxu0 0
        %2295 = vmatpush1.bf16.msra.mxu0 0
        %2296 = vmatprep.subr.bf16.mxu0 0
        %2297 = vmatpush1.bf16.msra.mxu0 0
        %2298 = vmatprep.subr.bf16.mxu0 0
        %2299 = vmatpush1.bf16.msra.mxu0 0
        %2300 = vmatprep.subr.bf16.mxu0 0
        %2301 = vmatpush1.bf16.msra.mxu0 0
        %2302 = vmatprep.subr.bf16.mxu0 0
        %2303 = vmatpush1.bf16.msra.mxu0 0
        %2304 = vmatprep.subr.bf16.mxu0 0
        %2305 = vmatpush1.bf16.msra.mxu0 0
        %2306 = vmatprep.mubr.bf16.mxu0 0
        %2307 = vmatmul.mubr.bf16.gmra.mrb[0].mxu0 %v2119
        %v2308 = vpop.f32.mrb[0].mxu0
        %v2309 = vadd.f32 0.0, %v2308
        %v2310 = vpop.f32.mrb[0].mxu0
        %v2311 = vpop.f32.mrb[0].mxu0
        %v2312 = vpop.f32.mrb[0].mxu0
        %2313 = vdwg.mxu0
        %v2314 = vadd.f32 %v2209, %v2309
        %v2315 = vmax.f32 %v2314, 0.0
        %2316 = vadd.xlane.f32.xlu0 %v2315
        %v2317 = vpop.xlane.xlu0 %2316
        %v2318 = vrcp.pop 128.0
        %v2319 = vmul.f32 %v2317, %v2318
        %v2320 = vmul.f32 %v2315, %v2315
        %2321 = vadd.xlane.f32.xlu0 %v2320
        %v2322 = vpop.xlane.xlu0 %2321
        %v2323 = vmul.f32 %v2322, %v2318
        %v2324 = vsub.f32 %v2315, %v2319
        %v2325 = vmul.f32 %v2319, %v2319
        %v2326 = vsub.f32 %v2323, %v2325
        %v2327 = vadd.f32 %v2326, 1e-05
        %v2328 = vrsqrt.pop %v2327
        %v2329 = vmul.f32 %v2324, %v2328
        %v2330 = vld [vmem:[#allocation13] sm:$0x1]
        %v2332 = vlaneseq
        %v2333 = vshrl.u32 %v2332, 7
        %v2334 = vsub.s32 0, %v2333
        %v2335 = vrot.slane %v2330, %v2334
        %v2337 = vmul.f32 %v2329, %v2335
        %v2338 = vld [vmem:[#allocation14] sm:$0x1]
        %v2340 = vlaneseq
        %v2341 = vshrl.u32 %v2340, 7
        %v2342 = vsub.s32 0, %v2341
        %v2343 = vrot.slane %v2338, %v2342
        %v2345 = vadd.f32 %v2337, %v2343
        %v2346 = vld [vmem:[#allocation19] sm:$0x1]
        %v2347 = vld [vmem:[#allocation20] sm:$0x1]
        %v2348 = vld [vmem:[#allocation16] sm:$0xf]
        %v2349 = vld [vmem:[#allocation16 + $0x4] sm:$0xf]
        %v2350 = vld [vmem:[#allocation16 + $0x8] sm:$0xf]
        %v2351 = vld [vmem:[#allocation16 + $0xc] sm:$0xf]
        %v2352 = vld [vmem:[#allocation16 + $0x10] sm:$0xf]
        %v2353 = vld [vmem:[#allocation16 + $0x14] sm:$0xf]
        %v2354 = vld [vmem:[#allocation16 + $0x18] sm:$0xf]
        %v2355 = vld [vmem:[#allocation16 + $0x1c] sm:$0xf]
        %v2356 = vld [vmem:[#allocation16 + $0x20] sm:$0xf]
        %v2357 = vld [vmem:[#allocation16 + $0x24] sm:$0xf]
        %v2358 = vld [vmem:[#allocation16 + $0x28] sm:$0xf]
        %v2359 = vld [vmem:[#allocation16 + $0x2c] sm:$0xf]
        %v2360 = vld [vmem:[#allocation16 + $0x30] sm:$0xf]
        %v2361 = vld [vmem:[#allocation16 + $0x34] sm:$0xf]
        %v2362 = vld [vmem:[#allocation16 + $0x38] sm:$0xf]
        %v2363 = vld [vmem:[#allocation16 + $0x3c] sm:$0xf]
        %v2364 = vpack.c.bf16 %v2345, %v2345
        %v2381 = vunpack.c.l.b16 %v2348
        %v2382 = vunpack.c.l.b16 %v2349
        %v2383 = vunpack.c.l.b16 %v2350
        %v2384 = vunpack.c.l.b16 %v2351
        %v2385 = vunpack.c.l.b16 %v2352
        %v2386 = vunpack.c.l.b16 %v2353
        %v2387 = vunpack.c.l.b16 %v2354
        %v2388 = vunpack.c.l.b16 %v2355
        %v2389 = vunpack.c.l.b16 %v2356
        %v2390 = vunpack.c.l.b16 %v2357
        %v2391 = vunpack.c.l.b16 %v2358
        %v2392 = vunpack.c.l.b16 %v2359
        %v2393 = vunpack.c.l.b16 %v2360
        %v2394 = vunpack.c.l.b16 %v2361
        %v2395 = vunpack.c.l.b16 %v2362
        %v2396 = vunpack.c.l.b16 %v2363
        %v2397 = vpack.c.b16 %v2382, %v2381
        %v2398 = vpack.c.b16 %v2384, %v2383
        %v2399 = vpack.c.b16 %v2386, %v2385
        %v2400 = vpack.c.b16 %v2388, %v2387
        %v2401 = vpack.c.b16 %v2390, %v2389
        %v2402 = vpack.c.b16 %v2392, %v2391
        %v2403 = vpack.c.b16 %v2394, %v2393
        %v2404 = vpack.c.b16 %v2396, %v2395
        %2413 = vmatprep.subr.bf16.mxu0 0
        %2414 = vmatpush1.bf16.msra.mxu0 %v2397
        %2415 = vmatprep.subr.bf16.mxu0 0
        %2416 = vmatpush1.bf16.msra.mxu0 %v2398
        %2417 = vmatprep.subr.bf16.mxu0 0
        %2418 = vmatpush1.bf16.msra.mxu0 %v2399
        %2419 = vmatprep.subr.bf16.mxu0 0
        %2420 = vmatpush1.bf16.msra.mxu0 %v2400
        %2421 = vmatprep.subr.bf16.mxu0 0
        %2422 = vmatpush1.bf16.msra.mxu0 %v2401
        %2423 = vmatprep.subr.bf16.mxu0 0
        %2424 = vmatpush1.bf16.msra.mxu0 %v2402
        %2425 = vmatprep.subr.bf16.mxu0 0
        %2426 = vmatpush1.bf16.msra.mxu0 %v2403
        %2427 = vmatprep.subr.bf16.mxu0 0
        %2428 = vmatpush1.bf16.msra.mxu0 %v2404
        %2429 = vmatprep.subr.bf16.mxu0 0
        %2430 = vmatpush1.bf16.msra.mxu0 0
        %2431 = vmatprep.subr.bf16.mxu0 0
        %2432 = vmatpush1.bf16.msra.mxu0 0
        %2433 = vmatprep.subr.bf16.mxu0 0
        %2434 = vmatpush1.bf16.msra.mxu0 0
        %2435 = vmatprep.subr.bf16.mxu0 0
        %2436 = vmatpush1.bf16.msra.mxu0 0
        %2437 = vmatprep.subr.bf16.mxu0 0
        %2438 = vmatpush1.bf16.msra.mxu0 0
        %2439 = vmatprep.subr.bf16.mxu0 0
        %2440 = vmatpush1.bf16.msra.mxu0 0
        %2441 = vmatprep.subr.bf16.mxu0 0
        %2442 = vmatpush1.bf16.msra.mxu0 0
        %2443 = vmatprep.subr.bf16.mxu0 0
        %2444 = vmatpush1.bf16.msra.mxu0 0
        %2445 = vmatprep.mubr.bf16.mxu0 0
        %2446 = vmatmul.mubr.bf16.gmra.mrb[0].mxu0 %v2364
        %v2447 = vpop.f32.mrb[0].mxu0
        %v2448 = vadd.f32 0.0, %v2447
        %v2449 = vpop.f32.mrb[0].mxu0
        %v2450 = vpop.f32.mrb[0].mxu0
        %v2451 = vpop.f32.mrb[0].mxu0
        %2452 = vdwg.mxu0
        %v2454 = vlaneseq
        %v2455 = vshrl.u32 %v2454, 7
        %v2456 = vsub.s32 0, %v2455
        %v2457 = vrot.slane %v2346, %v2456
        %v2459 = vadd.f32 %v2457, %v2448
        %v2460 = vld [vmem:[#allocation17] sm:$0xf]
        %v2461 = vld [vmem:[#allocation17 + $0x4] sm:$0xf]
        %v2462 = vld [vmem:[#allocation17 + $0x8] sm:$0xf]
        %v2463 = vld [vmem:[#allocation17 + $0xc] sm:$0xf]
        %v2464 = vld [vmem:[#allocation17 + $0x10] sm:$0xf]
        %v2465 = vld [vmem:[#allocation17 + $0x14] sm:$0xf]
        %v2466 = vld [vmem:[#allocation17 + $0x18] sm:$0xf]
        %v2467 = vld [vmem:[#allocation17 + $0x1c] sm:$0xf]
        %v2468 = vld [vmem:[#allocation17 + $0x20] sm:$0xf]
        %v2469 = vld [vmem:[#allocation17 + $0x24] sm:$0xf]
        %v2470 = vld [vmem:[#allocation17 + $0x28] sm:$0xf]
        %v2471 = vld [vmem:[#allocation17 + $0x2c] sm:$0xf]
        %v2472 = vld [vmem:[#allocation17 + $0x30] sm:$0xf]
        %v2473 = vld [vmem:[#allocation17 + $0x34] sm:$0xf]
        %v2474 = vld [vmem:[#allocation17 + $0x38] sm:$0xf]
        %v2475 = vld [vmem:[#allocation17 + $0x3c] sm:$0xf]
        %v2492 = vunpack.c.l.b16 %v2460
        %v2493 = vunpack.c.l.b16 %v2461
        %v2494 = vunpack.c.l.b16 %v2462
        %v2495 = vunpack.c.l.b16 %v2463
        %v2496 = vunpack.c.l.b16 %v2464
        %v2497 = vunpack.c.l.b16 %v2465
        %v2498 = vunpack.c.l.b16 %v2466
        %v2499 = vunpack.c.l.b16 %v2467
        %v2500 = vunpack.c.l.b16 %v2468
        %v2501 = vunpack.c.l.b16 %v2469
        %v2502 = vunpack.c.l.b16 %v2470
        %v2503 = vunpack.c.l.b16 %v2471
        %v2504 = vunpack.c.l.b16 %v2472
        %v2505 = vunpack.c.l.b16 %v2473
        %v2506 = vunpack.c.l.b16 %v2474
        %v2507 = vunpack.c.l.b16 %v2475
        %v2508 = vpack.c.b16 %v2493, %v2492
        %v2509 = vpack.c.b16 %v2495, %v2494
        %v2510 = vpack.c.b16 %v2497, %v2496
        %v2511 = vpack.c.b16 %v2499, %v2498
        %v2512 = vpack.c.b16 %v2501, %v2500
        %v2513 = vpack.c.b16 %v2503, %v2502
        %v2514 = vpack.c.b16 %v2505, %v2504
        %v2515 = vpack.c.b16 %v2507, %v2506
        %2524 = vmatprep.subr.bf16.mxu0 0
        %2525 = vmatpush1.bf16.msra.mxu0 %v2508
        %2526 = vmatprep.subr.bf16.mxu0 0
        %2527 = vmatpush1.bf16.msra.mxu0 %v2509
        %2528 = vmatprep.subr.bf16.mxu0 0
        %2529 = vmatpush1.bf16.msra.mxu0 %v2510
        %2530 = vmatprep.subr.bf16.mxu0 0
        %2531 = vmatpush1.bf16.msra.mxu0 %v2511
        %2532 = vmatprep.subr.bf16.mxu0 0
        %2533 = vmatpush1.bf16.msra.mxu0 %v2512
        %2534 = vmatprep.subr.bf16.mxu0 0
        %2535 = vmatpush1.bf16.msra.mxu0 %v2513
        %2536 = vmatprep.subr.bf16.mxu0 0
        %2537 = vmatpush1.bf16.msra.mxu0 %v2514
        %2538 = vmatprep.subr.bf16.mxu0 0
        %2539 = vmatpush1.bf16.msra.mxu0 %v2515
        %2540 = vmatprep.subr.bf16.mxu0 0
        %2541 = vmatpush1.bf16.msra.mxu0 0
        %2542 = vmatprep.subr.bf16.mxu0 0
        %2543 = vmatpush1.bf16.msra.mxu0 0
        %2544 = vmatprep.subr.bf16.mxu0 0
        %2545 = vmatpush1.bf16.msra.mxu0 0
        %2546 = vmatprep.subr.bf16.mxu0 0
        %2547 = vmatpush1.bf16.msra.mxu0 0
        %2548 = vmatprep.subr.bf16.mxu0 0
        %2549 = vmatpush1.bf16.msra.mxu0 0
        %2550 = vmatprep.subr.bf16.mxu0 0
        %2551 = vmatpush1.bf16.msra.mxu0 0
        %2552 = vmatprep.subr.bf16.mxu0 0
        %2553 = vmatpush1.bf16.msra.mxu0 0
        %2554 = vmatprep.subr.bf16.mxu0 0
        %2555 = vmatpush1.bf16.msra.mxu0 0
        %2556 = vmatprep.mubr.bf16.mxu0 0
        %2557 = vmatmul.mubr.bf16.gmra.mrb[0].mxu0 %v2364
        %v2558 = vpop.f32.mrb[0].mxu0
        %v2559 = vadd.f32 0.0, %v2558
        %v2560 = vpop.f32.mrb[0].mxu0
        %v2561 = vpop.f32.mrb[0].mxu0
        %v2562 = vpop.f32.mrb[0].mxu0
        %2563 = vdwg.mxu0
        %v2565 = vlaneseq
        %v2566 = vshrl.u32 %v2565, 7
        %v2567 = vsub.s32 0, %v2566
        %v2568 = vrot.slane %v2347, %v2567
        %v2570 = vadd.f32 %v2568, %v2559
        %s2571 = scalar_lea.vmem [#allocation16], 64
        %v2572 = vld [vmem:[%s2571] sm:$0xf]
        %v2573 = vld [vmem:[%s2571 + $0x4] sm:$0xf]
        %v2574 = vld [vmem:[%s2571 + $0x8] sm:$0xf]
        %v2575 = vld [vmem:[%s2571 + $0xc] sm:$0xf]
        %v2576 = vld [vmem:[%s2571 + $0x10] sm:$0xf]
        %v2577 = vld [vmem:[%s2571 + $0x14] sm:$0xf]
        %v2578 = vld [vmem:[%s2571 + $0x18] sm:$0xf]
        %v2579 = vld [vmem:[%s2571 + $0x1c] sm:$0xf]
        %v2580 = vld [vmem:[%s2571 + $0x20] sm:$0xf]
        %v2581 = vld [vmem:[%s2571 + $0x24] sm:$0xf]
        %v2582 = vld [vmem:[%s2571 + $0x28] sm:$0xf]
        %v2583 = vld [vmem:[%s2571 + $0x2c] sm:$0xf]
        %v2584 = vld [vmem:[%s2571 + $0x30] sm:$0xf]
        %v2585 = vld [vmem:[%s2571 + $0x34] sm:$0xf]
        %v2586 = vld [vmem:[%s2571 + $0x38] sm:$0xf]
        %v2587 = vld [vmem:[%s2571 + $0x3c] sm:$0xf]
        %v2589 = vshrl.u32 %v2364, 16
        %v2591 = vshll.u32 %v2364, 16
        %v2593 = vrot.slane %v2591, 1
        %v2594 = vor.u32 %v2589, %v2593
        %v2612 = vunpack.c.l.b16 %v2572
        %v2613 = vunpack.c.l.b16 %v2573
        %v2614 = vunpack.c.l.b16 %v2574
        %v2615 = vunpack.c.l.b16 %v2575
        %v2616 = vunpack.c.l.b16 %v2576
        %v2617 = vunpack.c.l.b16 %v2577
        %v2618 = vunpack.c.l.b16 %v2578
        %v2619 = vunpack.c.l.b16 %v2579
        %v2620 = vunpack.c.l.b16 %v2580
        %v2621 = vunpack.c.l.b16 %v2581
        %v2622 = vunpack.c.l.b16 %v2582
        %v2623 = vunpack.c.l.b16 %v2583
        %v2624 = vunpack.c.l.b16 %v2584
        %v2625 = vunpack.c.l.b16 %v2585
        %v2626 = vunpack.c.l.b16 %v2586
        %v2627 = vunpack.c.l.b16 %v2587
        %v2628 = vpack.c.b16 %v2613, %v2612
        %v2629 = vpack.c.b16 %v2615, %v2614
        %v2630 = vpack.c.b16 %v2617, %v2616
        %v2631 = vpack.c.b16 %v2619, %v2618
        %v2632 = vpack.c.b16 %v2621, %v2620
        %v2633 = vpack.c.b16 %v2623, %v2622
        %v2634 = vpack.c.b16 %v2625, %v2624
        %v2635 = vpack.c.b16 %v2627, %v2626
        %2644 = vmatprep.subr.bf16.mxu0 0
        %2645 = vmatpush1.bf16.msra.mxu0 %v2628
        %2646 = vmatprep.subr.bf16.mxu0 0
        %2647 = vmatpush1.bf16.msra.mxu0 %v2629
        %2648 = vmatprep.subr.bf16.mxu0 0
        %2649 = vmatpush1.bf16.msra.mxu0 %v2630
        %2650 = vmatprep.subr.bf16.mxu0 0
        %2651 = vmatpush1.bf16.msra.mxu0 %v2631
        %2652 = vmatprep.subr.bf16.mxu0 0
        %2653 = vmatpush1.bf16.msra.mxu0 %v2632
        %2654 = vmatprep.subr.bf16.mxu0 0
        %2655 = vmatpush1.bf16.msra.mxu0 %v2633
        %2656 = vmatprep.subr.bf16.mxu0 0
        %2657 = vmatpush1.bf16.msra.mxu0 %v2634
        %2658 = vmatprep.subr.bf16.mxu0 0
        %2659 = vmatpush1.bf16.msra.mxu0 %v2635
        %2660 = vmatprep.subr.bf16.mxu0 0
        %2661 = vmatpush1.bf16.msra.mxu0 0
        %2662 = vmatprep.subr.bf16.mxu0 0
        %2663 = vmatpush1.bf16.msra.mxu0 0
        %2664 = vmatprep.subr.bf16.mxu0 0
        %2665 = vmatpush1.bf16.msra.mxu0 0
        %2666 = vmatprep.subr.bf16.mxu0 0
        %2667 = vmatpush1.bf16.msra.mxu0 0
        %2668 = vmatprep.subr.bf16.mxu0 0
        %2669 = vmatpush1.bf16.msra.mxu0 0
        %2670 = vmatprep.subr.bf16.mxu0 0
        %2671 = vmatpush1.bf16.msra.mxu0 0
        %2672 = vmatprep.subr.bf16.mxu0 0
        %2673 = vmatpush1.bf16.msra.mxu0 0
        %2674 = vmatprep.subr.bf16.mxu0 0
        %2675 = vmatpush1.bf16.msra.mxu0 0
        %2676 = vmatprep.mubr.bf16.mxu0 0
        %2677 = vmatmul.mubr.bf16.gmra.mrb[0].mxu0 %v2594
        %v2678 = vpop.f32.mrb[0].mxu0
        %v2679 = vadd.f32 0.0, %v2678
        %v2680 = vpop.f32.mrb[0].mxu0
        %v2681 = vpop.f32.mrb[0].mxu0
        %v2682 = vpop.f32.mrb[0].mxu0
        %2683 = vdwg.mxu0
        %v2684 = vadd.f32 %v2459, %v2679
        %s2685 = scalar_lea.vmem [#allocation17], 64
        %v2686 = vld [vmem:[%s2685] sm:$0xf]
        %v2687 = vld [vmem:[%s2685 + $0x4] sm:$0xf]
        %v2688 = vld [vmem:[%s2685 + $0x8] sm:$0xf]
        %v2689 = vld [vmem:[%s2685 + $0xc] sm:$0xf]
        %v2690 = vld [vmem:[%s2685 + $0x10] sm:$0xf]
        %v2691 = vld [vmem:[%s2685 + $0x14] sm:$0xf]
        %v2692 = vld [vmem:[%s2685 + $0x18] sm:$0xf]
        %v2693 = vld [vmem:[%s2685 + $0x1c] sm:$0xf]
        %v2694 = vld [vmem:[%s2685 + $0x20] sm:$0xf]
        %v2695 = vld [vmem:[%s2685 + $0x24] sm:$0xf]
        %v2696 = vld [vmem:[%s2685 + $0x28] sm:$0xf]
        %v2697 = vld [vmem:[%s2685 + $0x2c] sm:$0xf]
        %v2698 = vld [vmem:[%s2685 + $0x30] sm:$0xf]
        %v2699 = vld [vmem:[%s2685 + $0x34] sm:$0xf]
        %v2700 = vld [vmem:[%s2685 + $0x38] sm:$0xf]
        %v2701 = vld [vmem:[%s2685 + $0x3c] sm:$0xf]
        %v2718 = vunpack.c.l.b16 %v2686
        %v2719 = vunpack.c.l.b16 %v2687
        %v2720 = vunpack.c.l.b16 %v2688
        %v2721 = vunpack.c.l.b16 %v2689
        %v2722 = vunpack.c.l.b16 %v2690
        %v2723 = vunpack.c.l.b16 %v2691
        %v2724 = vunpack.c.l.b16 %v2692
        %v2725 = vunpack.c.l.b16 %v2693
        %v2726 = vunpack.c.l.b16 %v2694
        %v2727 = vunpack.c.l.b16 %v2695
        %v2728 = vunpack.c.l.b16 %v2696
        %v2729 = vunpack.c.l.b16 %v2697
        %v2730 = vunpack.c.l.b16 %v2698
        %v2731 = vunpack.c.l.b16 %v2699
        %v2732 = vunpack.c.l.b16 %v2700
        %v2733 = vunpack.c.l.b16 %v2701
        %v2734 = vpack.c.b16 %v2719, %v2718
        %v2735 = vpack.c.b16 %v2721, %v2720
        %v2736 = vpack.c.b16 %v2723, %v2722
        %v2737 = vpack.c.b16 %v2725, %v2724
        %v2738 = vpack.c.b16 %v2727, %v2726
        %v2739 = vpack.c.b16 %v2729, %v2728
        %v2740 = vpack.c.b16 %v2731, %v2730
        %v2741 = vpack.c.b16 %v2733, %v2732
        %2750 = vmatprep.subr.bf16.mxu0 0
        %2751 = vmatpush1.bf16.msra.mxu0 %v2734
        %2752 = vmatprep.subr.bf16.mxu0 0
        %2753 = vmatpush1.bf16.msra.mxu0 %v2735
        %2754 = vmatprep.subr.bf16.mxu0 0
        %2755 = vmatpush1.bf16.msra.mxu0 %v2736
        %2756 = vmatprep.subr.bf16.mxu0 0
        %2757 = vmatpush1.bf16.msra.mxu0 %v2737
        %2758 = vmatprep.subr.bf16.mxu0 0
        %2759 = vmatpush1.bf16.msra.mxu0 %v2738
        %2760 = vmatprep.subr.bf16.mxu0 0
        %2761 = vmatpush1.bf16.msra.mxu0 %v2739
        %2762 = vmatprep.subr.bf16.mxu0 0
        %2763 = vmatpush1.bf16.msra.mxu0 %v2740
        %2764 = vmatprep.subr.bf16.mxu0 0
        %2765 = vmatpush1.bf16.msra.mxu0 %v2741
        %2766 = vmatprep.subr.bf16.mxu0 0
        %2767 = vmatpush1.bf16.msra.mxu0 0
        %2768 = vmatprep.subr.bf16.mxu0 0
        %2769 = vmatpush1.bf16.msra.mxu0 0
        %2770 = vmatprep.subr.bf16.mxu0 0
        %2771 = vmatpush1.bf16.msra.mxu0 0
        %2772 = vmatprep.subr.bf16.mxu0 0
        %2773 = vmatpush1.bf16.msra.mxu0 0
        %2774 = vmatprep.subr.bf16.mxu0 0
        %2775 = vmatpush1.bf16.msra.mxu0 0
        %2776 = vmatprep.subr.bf16.mxu0 0
        %2777 = vmatpush1.bf16.msra.mxu0 0
        %2778 = vmatprep.subr.bf16.mxu0 0
        %2779 = vmatpush1.bf16.msra.mxu0 0
        %2780 = vmatprep.subr.bf16.mxu0 0
        %2781 = vmatpush1.bf16.msra.mxu0 0
        %2782 = vmatprep.mubr.bf16.mxu0 0
        %2783 = vmatmul.mubr.bf16.gmra.mrb[0].mxu0 %v2594
        %v2784 = vpop.f32.mrb[0].mxu0
        %v2785 = vadd.f32 0.0, %v2784
        %v2786 = vpop.f32.mrb[0].mxu0
        %v2787 = vpop.f32.mrb[0].mxu0
        %v2788 = vpop.f32.mrb[0].mxu0
        %2789 = vdwg.mxu0
        %v2790 = vadd.f32 %v2570, %v2785
        %s2791 = scalar_lea.vmem [#allocation16], 128
        %v2792 = vld [vmem:[%s2791] sm:$0xf]
        %v2793 = vld [vmem:[%s2791 + $0x4] sm:$0xf]
        %v2794 = vld [vmem:[%s2791 + $0x8] sm:$0xf]
        %v2795 = vld [vmem:[%s2791 + $0xc] sm:$0xf]
        %v2796 = vld [vmem:[%s2791 + $0x10] sm:$0xf]
        %v2797 = vld [vmem:[%s2791 + $0x14] sm:$0xf]
        %v2798 = vld [vmem:[%s2791 + $0x18] sm:$0xf]
        %v2799 = vld [vmem:[%s2791 + $0x1c] sm:$0xf]
        %v2800 = vld [vmem:[%s2791 + $0x20] sm:$0xf]
        %v2801 = vld [vmem:[%s2791 + $0x24] sm:$0xf]
        %v2802 = vld [vmem:[%s2791 + $0x28] sm:$0xf]
        %v2803 = vld [vmem:[%s2791 + $0x2c] sm:$0xf]
        %v2804 = vld [vmem:[%s2791 + $0x30] sm:$0xf]
        %v2805 = vld [vmem:[%s2791 + $0x34] sm:$0xf]
        %v2806 = vld [vmem:[%s2791 + $0x38] sm:$0xf]
        %v2807 = vld [vmem:[%s2791 + $0x3c] sm:$0xf]
        %v2809 = vrot.slane %v2364, 1
        %v2827 = vunpack.c.l.b16 %v2792
        %v2828 = vunpack.c.l.b16 %v2793
        %v2829 = vunpack.c.l.b16 %v2794
        %v2830 = vunpack.c.l.b16 %v2795
        %v2831 = vunpack.c.l.b16 %v2796
        %v2832 = vunpack.c.l.b16 %v2797
        %v2833 = vunpack.c.l.b16 %v2798
        %v2834 = vunpack.c.l.b16 %v2799
        %v2835 = vunpack.c.l.b16 %v2800
        %v2836 = vunpack.c.l.b16 %v2801
        %v2837 = vunpack.c.l.b16 %v2802
        %v2838 = vunpack.c.l.b16 %v2803
        %v2839 = vunpack.c.l.b16 %v2804
        %v2840 = vunpack.c.l.b16 %v2805
        %v2841 = vunpack.c.l.b16 %v2806
        %v2842 = vunpack.c.l.b16 %v2807
        %v2843 = vpack.c.b16 %v2828, %v2827
        %v2844 = vpack.c.b16 %v2830, %v2829
        %v2845 = vpack.c.b16 %v2832, %v2831
        %v2846 = vpack.c.b16 %v2834, %v2833
        %v2847 = vpack.c.b16 %v2836, %v2835
        %v2848 = vpack.c.b16 %v2838, %v2837
        %v2849 = vpack.c.b16 %v2840, %v2839
        %v2850 = vpack.c.b16 %v2842, %v2841
        %2859 = vmatprep.subr.bf16.mxu0 0
        %2860 = vmatpush1.bf16.msra.mxu0 %v2843
        %2861 = vmatprep.subr.bf16.mxu0 0
        %2862 = vmatpush1.bf16.msra.mxu0 %v2844
        %2863 = vmatprep.subr.bf16.mxu0 0
        %2864 = vmatpush1.bf16.msra.mxu0 %v2845
        %2865 = vmatprep.subr.bf16.mxu0 0
        %2866 = vmatpush1.bf16.msra.mxu0 %v2846
        %2867 = vmatprep.subr.bf16.mxu0 0
        %2868 = vmatpush1.bf16.msra.mxu0 %v2847
        %2869 = vmatprep.subr.bf16.mxu0 0
        %2870 = vmatpush1.bf16.msra.mxu0 %v2848
        %2871 = vmatprep.subr.bf16.mxu0 0
        %2872 = vmatpush1.bf16.msra.mxu0 %v2849
        %2873 = vmatprep.subr.bf16.mxu0 0
        %2874 = vmatpush1.bf16.msra.mxu0 %v2850
        %2875 = vmatprep.subr.bf16.mxu0 0
        %2876 = vmatpush1.bf16.msra.mxu0 0
        %2877 = vmatprep.subr.bf16.mxu0 0
        %2878 = vmatpush1.bf16.msra.mxu0 0
        %2879 = vmatprep.subr.bf16.mxu0 0
        %2880 = vmatpush1.bf16.msra.mxu0 0
        %2881 = vmatprep.subr.bf16.mxu0 0
        %2882 = vmatpush1.bf16.msra.mxu0 0
        %2883 = vmatprep.subr.bf16.mxu0 0
        %2884 = vmatpush1.bf16.msra.mxu0 0
        %2885 = vmatprep.subr.bf16.mxu0 0
        %2886 = vmatpush1.bf16.msra.mxu0 0
        %2887 = vmatprep.subr.bf16.mxu0 0
        %2888 = vmatpush1.bf16.msra.mxu0 0
        %2889 = vmatprep.subr.bf16.mxu0 0
        %2890 = vmatpush1.bf16.msra.mxu0 0
        %2891 = vmatprep.mubr.bf16.mxu0 0
        %2892 = vmatmul.mubr.bf16.gmra.mrb[0].mxu0 %v2809
        %v2893 = vpop.f32.mrb[0].mxu0
        %v2894 = vadd.f32 0.0, %v2893
        %v2895 = vpop.f32.mrb[0].mxu0
        %v2896 = vpop.f32.mrb[0].mxu0
        %v2897 = vpop.f32.mrb[0].mxu0
        %2898 = vdwg.mxu0
        %v2899 = vadd.f32 %v2684, %v2894
        %s2900 = scalar_lea.vmem [#allocation17], 128
        %v2901 = vld [vmem:[%s2900] sm:$0xf]
        %v2902 = vld [vmem:[%s2900 + $0x4] sm:$0xf]
        %v2903 = vld [vmem:[%s2900 + $0x8] sm:$0xf]
        %v2904 = vld [vmem:[%s2900 + $0xc] sm:$0xf]
        %v2905 = vld [vmem:[%s2900 + $0x10] sm:$0xf]
        %v2906 = vld [vmem:[%s2900 + $0x14] sm:$0xf]
        %v2907 = vld [vmem:[%s2900 + $0x18] sm:$0xf]
        %v2908 = vld [vmem:[%s2900 + $0x1c] sm:$0xf]
        %v2909 = vld [vmem:[%s2900 + $0x20] sm:$0xf]
        %v2910 = vld [vmem:[%s2900 + $0x24] sm:$0xf]
        %v2911 = vld [vmem:[%s2900 + $0x28] sm:$0xf]
        %v2912 = vld [vmem:[%s2900 + $0x2c] sm:$0xf]
        %v2913 = vld [vmem:[%s2900 + $0x30] sm:$0xf]
        %v2914 = vld [vmem:[%s2900 + $0x34] sm:$0xf]
        %v2915 = vld [vmem:[%s2900 + $0x38] sm:$0xf]
        %v2916 = vld [vmem:[%s2900 + $0x3c] sm:$0xf]
        %v2933 = vunpack.c.l.b16 %v2901
        %v2934 = vunpack.c.l.b16 %v2902
        %v2935 = vunpack.c.l.b16 %v2903
        %v2936 = vunpack.c.l.b16 %v2904
        %v2937 = vunpack.c.l.b16 %v2905
        %v2938 = vunpack.c.l.b16 %v2906
        %v2939 = vunpack.c.l.b16 %v2907
        %v2940 = vunpack.c.l.b16 %v2908
        %v2941 = vunpack.c.l.b16 %v2909
        %v2942 = vunpack.c.l.b16 %v2910
        %v2943 = vunpack.c.l.b16 %v2911
        %v2944 = vunpack.c.l.b16 %v2912
        %v2945 = vunpack.c.l.b16 %v2913
        %v2946 = vunpack.c.l.b16 %v2914
        %v2947 = vunpack.c.l.b16 %v2915
        %v2948 = vunpack.c.l.b16 %v2916
        %v2949 = vpack.c.b16 %v2934, %v2933
        %v2950 = vpack.c.b16 %v2936, %v2935
        %v2951 = vpack.c.b16 %v2938, %v2937
        %v2952 = vpack.c.b16 %v2940, %v2939
        %v2953 = vpack.c.b16 %v2942, %v2941
        %v2954 = vpack.c.b16 %v2944, %v2943
        %v2955 = vpack.c.b16 %v2946, %v2945
        %v2956 = vpack.c.b16 %v2948, %v2947
        %2965 = vmatprep.subr.bf16.mxu0 0
        %2966 = vmatpush1.bf16.msra.mxu0 %v2949
        %2967 = vmatprep.subr.bf16.mxu0 0
        %2968 = vmatpush1.bf16.msra.mxu0 %v2950
        %2969 = vmatprep.subr.bf16.mxu0 0
        %2970 = vmatpush1.bf16.msra.mxu0 %v2951
        %2971 = vmatprep.subr.bf16.mxu0 0
        %2972 = vmatpush1.bf16.msra.mxu0 %v2952
        %2973 = vmatprep.subr.bf16.mxu0 0
        %2974 = vmatpush1.bf16.msra.mxu0 %v2953
        %2975 = vmatprep.subr.bf16.mxu0 0
        %2976 = vmatpush1.bf16.msra.mxu0 %v2954
        %2977 = vmatprep.subr.bf16.mxu0 0
        %2978 = vmatpush1.bf16.msra.mxu0 %v2955
        %2979 = vmatprep.subr.bf16.mxu0 0
        %2980 = vmatpush1.bf16.msra.mxu0 %v2956
        %2981 = vmatprep.subr.bf16.mxu0 0
        %2982 = vmatpush1.bf16.msra.mxu0 0
        %2983 = vmatprep.subr.bf16.mxu0 0
        %2984 = vmatpush1.bf16.msra.mxu0 0
        %2985 = vmatprep.subr.bf16.mxu0 0
        %2986 = vmatpush1.bf16.msra.mxu0 0
        %2987 = vmatprep.subr.bf16.mxu0 0
        %2988 = vmatpush1.bf16.msra.mxu0 0
        %2989 = vmatprep.subr.bf16.mxu0 0
        %2990 = vmatpush1.bf16.msra.mxu0 0
        %2991 = vmatprep.subr.bf16.mxu0 0
        %2992 = vmatpush1.bf16.msra.mxu0 0
        %2993 = vmatprep.subr.bf16.mxu0 0
        %2994 = vmatpush1.bf16.msra.mxu0 0
        %2995 = vmatprep.subr.bf16.mxu0 0
        %2996 = vmatpush1.bf16.msra.mxu0 0
        %2997 = vmatprep.mubr.bf16.mxu0 0
        %2998 = vmatmul.mubr.bf16.gmra.mrb[0].mxu0 %v2809
        %v2999 = vpop.f32.mrb[0].mxu0
        %v3000 = vadd.f32 0.0, %v2999
        %v3001 = vpop.f32.mrb[0].mxu0
        %v3002 = vpop.f32.mrb[0].mxu0
        %v3003 = vpop.f32.mrb[0].mxu0
        %3004 = vdwg.mxu0
        %v3005 = vadd.f32 %v2790, %v3000
        %v3006 = vld [vmem:[#allocation22] sm:$0xf]
        %v3007 = vld [vmem:[#allocation22 + $0x4] sm:$0xf]
        %v3008 = vld [vmem:[#allocation22 + $0x8] sm:$0xf]
        %v3009 = vld [vmem:[#allocation22 + $0xc] sm:$0xf]
        %v3010 = vld [vmem:[#allocation22 + $0x10] sm:$0xf]
        %v3011 = vld [vmem:[#allocation22 + $0x14] sm:$0xf]
        %v3012 = vld [vmem:[#allocation22 + $0x18] sm:$0xf]
        %v3013 = vld [vmem:[#allocation22 + $0x1c] sm:$0xf]
        %v3014 = vld [vmem:[#allocation22 + $0x20] sm:$0xf]
        %v3015 = vld [vmem:[#allocation22 + $0x24] sm:$0xf]
        %v3016 = vld [vmem:[#allocation22 + $0x28] sm:$0xf]
        %v3017 = vld [vmem:[#allocation22 + $0x2c] sm:$0xf]
        %v3018 = vld [vmem:[#allocation22 + $0x30] sm:$0xf]
        %v3019 = vld [vmem:[#allocation22 + $0x34] sm:$0xf]
        %v3020 = vld [vmem:[#allocation22 + $0x38] sm:$0xf]
        %v3021 = vld [vmem:[#allocation22 + $0x3c] sm:$0xf]
        %v3038 = vunpack.c.l.b16 %v3006
        %v3039 = vunpack.c.l.b16 %v3007
        %v3040 = vunpack.c.l.b16 %v3008
        %v3041 = vunpack.c.l.b16 %v3009
        %v3042 = vunpack.c.l.b16 %v3010
        %v3043 = vunpack.c.l.b16 %v3011
        %v3044 = vunpack.c.l.b16 %v3012
        %v3045 = vunpack.c.l.b16 %v3013
        %v3046 = vunpack.c.l.b16 %v3014
        %v3047 = vunpack.c.l.b16 %v3015
        %v3048 = vunpack.c.l.b16 %v3016
        %v3049 = vunpack.c.l.b16 %v3017
        %v3050 = vunpack.c.l.b16 %v3018
        %v3051 = vunpack.c.l.b16 %v3019
        %v3052 = vunpack.c.l.b16 %v3020
        %v3053 = vunpack.c.l.b16 %v3021
        %v3054 = vpack.c.b16 %v3039, %v3038
        %v3055 = vpack.c.b16 %v3041, %v3040
        %v3056 = vpack.c.b16 %v3043, %v3042
        %v3057 = vpack.c.b16 %v3045, %v3044
        %v3058 = vpack.c.b16 %v3047, %v3046
        %v3059 = vpack.c.b16 %v3049, %v3048
        %v3060 = vpack.c.b16 %v3051, %v3050
        %v3061 = vpack.c.b16 %v3053, %v3052
        %3070 = vmatprep.subr.bf16.mxu0 0
        %3071 = vmatpush1.bf16.msra.mxu0 %v3054
        %3072 = vmatprep.subr.bf16.mxu0 0
        %3073 = vmatpush1.bf16.msra.mxu0 %v3055
        %3074 = vmatprep.subr.bf16.mxu0 0
        %3075 = vmatpush1.bf16.msra.mxu0 %v3056
        %3076 = vmatprep.subr.bf16.mxu0 0
        %3077 = vmatpush1.bf16.msra.mxu0 %v3057
        %3078 = vmatprep.subr.bf16.mxu0 0
        %3079 = vmatpush1.bf16.msra.mxu0 %v3058
        %3080 = vmatprep.subr.bf16.mxu0 0
        %3081 = vmatpush1.bf16.msra.mxu0 %v3059
        %3082 = vmatprep.subr.bf16.mxu0 0
        %3083 = vmatpush1.bf16.msra.mxu0 %v3060
        %3084 = vmatprep.subr.bf16.mxu0 0
        %3085 = vmatpush1.bf16.msra.mxu0 %v3061
        %3086 = vmatprep.subr.bf16.mxu0 0
        %3087 = vmatpush1.bf16.msra.mxu0 0
        %3088 = vmatprep.subr.bf16.mxu0 0
        %3089 = vmatpush1.bf16.msra.mxu0 0
        %3090 = vmatprep.subr.bf16.mxu0 0
        %3091 = vmatpush1.bf16.msra.mxu0 0
        %3092 = vmatprep.subr.bf16.mxu0 0
        %3093 = vmatpush1.bf16.msra.mxu0 0
        %3094 = vmatprep.subr.bf16.mxu0 0
        %3095 = vmatpush1.bf16.msra.mxu0 0
        %3096 = vmatprep.subr.bf16.mxu0 0
        %3097 = vmatpush1.bf16.msra.mxu0 0
        %3098 = vmatprep.subr.bf16.mxu0 0
        %3099 = vmatpush1.bf16.msra.mxu0 0
        %3100 = vmatprep.subr.bf16.mxu0 0
        %3101 = vmatpush1.bf16.msra.mxu0 0
        %3102 = vmatprep.mubr.bf16.mxu0 0
        %3103 = vmatmul.mubr.bf16.gmra.mrb[0].mxu0 %v2809
        %v3104 = vpop.f32.mrb[0].mxu0
        %v3105 = vadd.f32 0.0, %v3104
        %v3106 = vpop.f32.mrb[0].mxu0
        %v3107 = vpop.f32.mrb[0].mxu0
        %v3108 = vpop.f32.mrb[0].mxu0
        %3109 = vdwg.mxu0
        %v3110 = vadd.f32 %v2899, %v3105
        %v3111 = vxor.u32 %v3005, 2147483648
        %v3112 = vmul.f32 %v3111, 1.442695
        %v3113 = vpow.pop %v3112
        %v3114 = vadd.f32 %v3113, 1.0
        %v3115 = vrcp.pop %v3114
        %v3116 = vmul.f32 1.0, %v3115
        %v3117 = vmul.f32 %v3110, %v3116
        %v3118 = vld [vmem:[#allocation23] sm:$0xf]
        %v3119 = vld [vmem:[#allocation23 + $0x4] sm:$0xf]
        %v3120 = vld [vmem:[#allocation23 + $0x8] sm:$0xf]
        %v3121 = vld [vmem:[#allocation23 + $0xc] sm:$0xf]
        %v3122 = vld [vmem:[#allocation23 + $0x10] sm:$0xf]
        %v3123 = vld [vmem:[#allocation23 + $0x14] sm:$0xf]
        %v3124 = vld [vmem:[#allocation23 + $0x18] sm:$0xf]
        %v3125 = vld [vmem:[#allocation23 + $0x1c] sm:$0xf]
        %v3126 = vld [vmem:[#allocation23 + $0x20] sm:$0xf]
        %v3127 = vld [vmem:[#allocation23 + $0x24] sm:$0xf]
        %v3128 = vld [vmem:[#allocation23 + $0x28] sm:$0xf]
        %v3129 = vld [vmem:[#allocation23 + $0x2c] sm:$0xf]
        %v3130 = vld [vmem:[#allocation23 + $0x30] sm:$0xf]
        %v3131 = vld [vmem:[#allocation23 + $0x34] sm:$0xf]
        %v3132 = vld [vmem:[#allocation23 + $0x38] sm:$0xf]
        %v3133 = vld [vmem:[#allocation23 + $0x3c] sm:$0xf]
        %v3134 = vpack.c.bf16 %v3117, %v3117
        %v3135 = vld [vmem:[#allocation25] sm:$0x1]
        %v3137 = vlaneseq
        %v3138 = vshrl.u32 %v3137, 7
        %v3139 = vsub.s32 0, %v3138
        %v3140 = vrot.slane %v3135, %v3139
        %v3158 = vunpack.c.l.b16 %v3118
        %v3159 = vunpack.c.l.b16 %v3119
        %v3160 = vunpack.c.l.b16 %v3120
        %v3161 = vunpack.c.l.b16 %v3121
        %v3162 = vunpack.c.l.b16 %v3122
        %v3163 = vunpack.c.l.b16 %v3123
        %v3164 = vunpack.c.l.b16 %v3124
        %v3165 = vunpack.c.l.b16 %v3125
        %v3166 = vunpack.c.l.b16 %v3126
        %v3167 = vunpack.c.l.b16 %v3127
        %v3168 = vunpack.c.l.b16 %v3128
        %v3169 = vunpack.c.l.b16 %v3129
        %v3170 = vunpack.c.l.b16 %v3130
        %v3171 = vunpack.c.l.b16 %v3131
        %v3172 = vunpack.c.l.b16 %v3132
        %v3173 = vunpack.c.l.b16 %v3133
        %v3174 = vpack.c.b16 %v3159, %v3158
        %v3175 = vpack.c.b16 %v3161, %v3160
        %v3176 = vpack.c.b16 %v3163, %v3162
        %v3177 = vpack.c.b16 %v3165, %v3164
        %v3178 = vpack.c.b16 %v3167, %v3166
        %v3179 = vpack.c.b16 %v3169, %v3168
        %v3180 = vpack.c.b16 %v3171, %v3170
        %v3181 = vpack.c.b16 %v3173, %v3172
        %3190 = vmatprep.subr.bf16.mxu0 0
        %3191 = vmatpush1.bf16.msra.mxu0 %v3174
        %3192 = vmatprep.subr.bf16.mxu0 0
        %3193 = vmatpush1.bf16.msra.mxu0 %v3175
        %3194 = vmatprep.subr.bf16.mxu0 0
        %3195 = vmatpush1.bf16.msra.mxu0 %v3176
        %3196 = vmatprep.subr.bf16.mxu0 0
        %3197 = vmatpush1.bf16.msra.mxu0 %v3177
        %3198 = vmatprep.subr.bf16.mxu0 0
        %3199 = vmatpush1.bf16.msra.mxu0 %v3178
        %3200 = vmatprep.subr.bf16.mxu0 0
        %3201 = vmatpush1.bf16.msra.mxu0 %v3179
        %3202 = vmatprep.subr.bf16.mxu0 0
        %3203 = vmatpush1.bf16.msra.mxu0 %v3180
        %3204 = vmatprep.subr.bf16.mxu0 0
        %3205 = vmatpush1.bf16.msra.mxu0 %v3181
        %3206 = vmatprep.subr.bf16.mxu0 0
        %3207 = vmatpush1.bf16.msra.mxu0 0
        %3208 = vmatprep.subr.bf16.mxu0 0
        %3209 = vmatpush1.bf16.msra.mxu0 0
        %3210 = vmatprep.subr.bf16.mxu0 0
        %3211 = vmatpush1.bf16.msra.mxu0 0
        %3212 = vmatprep.subr.bf16.mxu0 0
        %3213 = vmatpush1.bf16.msra.mxu0 0
        %3214 = vmatprep.subr.bf16.mxu0 0
        %3215 = vmatpush1.bf16.msra.mxu0 0
        %3216 = vmatprep.subr.bf16.mxu0 0
        %3217 = vmatpush1.bf16.msra.mxu0 0
        %3218 = vmatprep.subr.bf16.mxu0 0
        %3219 = vmatpush1.bf16.msra.mxu0 0
        %3220 = vmatprep.subr.bf16.mxu0 0
        %3221 = vmatpush1.bf16.msra.mxu0 0
        %3222 = vmatprep.mubr.bf16.mxu0 0
        %3223 = vmatmul.mubr.bf16.gmra.mrb[0].mxu0 %v3134
        %v3224 = vpop.f32.mrb[0].mxu0
        %v3225 = vadd.f32 %v3140, %v3224
        %v3226 = vpop.f32.mrb[0].mxu0
        %v3227 = vpop.f32.mrb[0].mxu0
        %v3228 = vpop.f32.mrb[0].mxu0
        %3229 = vdwg.mxu0
        %v3230 = vadd.f32 %v3225, %v3117
        %v3231 = vmax.f32 %v3230, 0.0
        %v3232 = vld [vmem:[#allocation26] sm:$0x1]
        %v3233 = vld [vmem:[%s41] sm:$0xf]
        %v3234 = vld [vmem:[%s41 + $0x4] sm:$0xf]
        %v3235 = vld [vmem:[%s41 + $0x8] sm:$0xf]
        %v3236 = vld [vmem:[%s41 + $0xc] sm:$0xf]
        %v3237 = vld [vmem:[%s41 + $0x10] sm:$0xf]
        %v3238 = vld [vmem:[%s41 + $0x14] sm:$0xf]
        %v3239 = vld [vmem:[%s41 + $0x18] sm:$0xf]
        %v3240 = vld [vmem:[%s41 + $0x1c] sm:$0xf]
        %v3241 = vld [vmem:[%s41 + $0x20] sm:$0xf]
        %v3242 = vld [vmem:[%s41 + $0x24] sm:$0xf]
        %v3243 = vld [vmem:[%s41 + $0x28] sm:$0xf]
        %v3244 = vld [vmem:[%s41 + $0x2c] sm:$0xf]
        %v3245 = vld [vmem:[%s41 + $0x30] sm:$0xf]
        %v3246 = vld [vmem:[%s41 + $0x34] sm:$0xf]
        %v3247 = vld [vmem:[%s41 + $0x38] sm:$0xf]
        %v3248 = vld [vmem:[%s41 + $0x3c] sm:$0xf]
        %v3249 = vpack.c.bf16 %v3231, %v3231
        %v3266 = vunpack.c.l.b16 %v3233
        %v3267 = vunpack.c.l.b16 %v3234
        %v3268 = vunpack.c.l.b16 %v3235
        %v3269 = vunpack.c.l.b16 %v3236
        %v3270 = vunpack.c.l.b16 %v3237
        %v3271 = vunpack.c.l.b16 %v3238
        %v3272 = vunpack.c.l.b16 %v3239
        %v3273 = vunpack.c.l.b16 %v3240
        %v3274 = vunpack.c.l.b16 %v3241
        %v3275 = vunpack.c.l.b16 %v3242
        %v3276 = vunpack.c.l.b16 %v3243
        %v3277 = vunpack.c.l.b16 %v3244
        %v3278 = vunpack.c.l.b16 %v3245
        %v3279 = vunpack.c.l.b16 %v3246
        %v3280 = vunpack.c.l.b16 %v3247
        %v3281 = vunpack.c.l.b16 %v3248
        %v3282 = vpack.c.b16 %v3267, %v3266
        %v3283 = vpack.c.b16 %v3269, %v3268
        %v3284 = vpack.c.b16 %v3271, %v3270
        %v3285 = vpack.c.b16 %v3273, %v3272
        %v3286 = vpack.c.b16 %v3275, %v3274
        %v3287 = vpack.c.b16 %v3277, %v3276
        %v3288 = vpack.c.b16 %v3279, %v3278
        %v3289 = vpack.c.b16 %v3281, %v3280
        %3298 = vmatprep.subr.bf16.mxu0 0
        %3299 = vmatpush1.bf16.msra.mxu0 %v3282
        %3300 = vmatprep.subr.bf16.mxu0 0
        %3301 = vmatpush1.bf16.msra.mxu0 %v3283
        %3302 = vmatprep.subr.bf16.mxu0 0
        %3303 = vmatpush1.bf16.msra.mxu0 %v3284
        %3304 = vmatprep.subr.bf16.mxu0 0
        %3305 = vmatpush1.bf16.msra.mxu0 %v3285
        %3306 = vmatprep.subr.bf16.mxu0 0
        %3307 = vmatpush1.bf16.msra.mxu0 %v3286
        %3308 = vmatprep.subr.bf16.mxu0 0
        %3309 = vmatpush1.bf16.msra.mxu0 %v3287
        %3310 = vmatprep.subr.bf16.mxu0 0
        %3311 = vmatpush1.bf16.msra.mxu0 %v3288
        %3312 = vmatprep.subr.bf16.mxu0 0
        %3313 = vmatpush1.bf16.msra.mxu0 %v3289
        %3314 = vmatprep.subr.bf16.mxu0 0
        %3315 = vmatpush1.bf16.msra.mxu0 0
        %3316 = vmatprep.subr.bf16.mxu0 0
        %3317 = vmatpush1.bf16.msra.mxu0 0
        %3318 = vmatprep.subr.bf16.mxu0 0
        %3319 = vmatpush1.bf16.msra.mxu0 0
        %3320 = vmatprep.subr.bf16.mxu0 0
        %3321 = vmatpush1.bf16.msra.mxu0 0
        %3322 = vmatprep.subr.bf16.mxu0 0
        %3323 = vmatpush1.bf16.msra.mxu0 0
        %3324 = vmatprep.subr.bf16.mxu0 0
        %3325 = vmatpush1.bf16.msra.mxu0 0
        %3326 = vmatprep.subr.bf16.mxu0 0
        %3327 = vmatpush1.bf16.msra.mxu0 0
        %3328 = vmatprep.subr.bf16.mxu0 0
        %3329 = vmatpush1.bf16.msra.mxu0 0
        %3330 = vmatprep.mubr.bf16.mxu0 0
        %3331 = vmatmul.mubr.bf16.gmra.mrb[0].mxu0 %v3249
        %v3332 = vpop.f32.mrb[0].mxu0
        %v3333 = vadd.f32 0.0, %v3332
        %v3334 = vpop.f32.mrb[0].mxu0
        %v3335 = vpop.f32.mrb[0].mxu0
        %v3336 = vpop.f32.mrb[0].mxu0
        %3337 = vdwg.mxu0
        %v3339 = vlaneseq
        %v3340 = vshrl.u32 %v3339, 7
        %v3341 = vsub.s32 0, %v3340
        %v3342 = vrot.slane %v3232, %v3341
        %v3344 = vadd.f32 %v3342, %v3333
        %s3345 = scalar_lea.vmem %s41, 64
        %v3346 = vld [vmem:[%s3345] sm:$0xf]
        %v3347 = vld [vmem:[%s3345 + $0x4] sm:$0xf]
        %v3348 = vld [vmem:[%s3345 + $0x8] sm:$0xf]
        %v3349 = vld [vmem:[%s3345 + $0xc] sm:$0xf]
        %v3350 = vld [vmem:[%s3345 + $0x10] sm:$0xf]
        %v3351 = vld [vmem:[%s3345 + $0x14] sm:$0xf]
        %v3352 = vld [vmem:[%s3345 + $0x18] sm:$0xf]
        %v3353 = vld [vmem:[%s3345 + $0x1c] sm:$0xf]
        %v3354 = vld [vmem:[%s3345 + $0x20] sm:$0xf]
        %v3355 = vld [vmem:[%s3345 + $0x24] sm:$0xf]
        %v3356 = vld [vmem:[%s3345 + $0x28] sm:$0xf]
        %v3357 = vld [vmem:[%s3345 + $0x2c] sm:$0xf]
        %v3358 = vld [vmem:[%s3345 + $0x30] sm:$0xf]
        %v3359 = vld [vmem:[%s3345 + $0x34] sm:$0xf]
        %v3360 = vld [vmem:[%s3345 + $0x38] sm:$0xf]
        %v3361 = vld [vmem:[%s3345 + $0x3c] sm:$0xf]
        %v3363 = vshrl.u32 %v3249, 16
        %v3365 = vshll.u32 %v3249, 16
        %v3367 = vrot.slane %v3365, 1
        %v3368 = vor.u32 %v3363, %v3367
        %v3386 = vunpack.c.l.b16 %v3346
        %v3387 = vunpack.c.l.b16 %v3347
        %v3388 = vunpack.c.l.b16 %v3348
        %v3389 = vunpack.c.l.b16 %v3349
        %v3390 = vunpack.c.l.b16 %v3350
        %v3391 = vunpack.c.l.b16 %v3351
        %v3392 = vunpack.c.l.b16 %v3352
        %v3393 = vunpack.c.l.b16 %v3353
        %v3394 = vunpack.c.l.b16 %v3354
        %v3395 = vunpack.c.l.b16 %v3355
        %v3396 = vunpack.c.l.b16 %v3356
        %v3397 = vunpack.c.l.b16 %v3357
        %v3398 = vunpack.c.l.b16 %v3358
        %v3399 = vunpack.c.l.b16 %v3359
        %v3400 = vunpack.c.l.b16 %v3360
        %v3401 = vunpack.c.l.b16 %v3361
        %v3402 = vpack.c.b16 %v3387, %v3386
        %v3403 = vpack.c.b16 %v3389, %v3388
        %v3404 = vpack.c.b16 %v3391, %v3390
        %v3405 = vpack.c.b16 %v3393, %v3392
        %v3406 = vpack.c.b16 %v3395, %v3394
        %v3407 = vpack.c.b16 %v3397, %v3396
        %v3408 = vpack.c.b16 %v3399, %v3398
        %v3409 = vpack.c.b16 %v3401, %v3400
        %3418 = vmatprep.subr.bf16.mxu0 0
        %3419 = vmatpush1.bf16.msra.mxu0 %v3402
        %3420 = vmatprep.subr.bf16.mxu0 0
        %3421 = vmatpush1.bf16.msra.mxu0 %v3403
        %3422 = vmatprep.subr.bf16.mxu0 0
        %3423 = vmatpush1.bf16.msra.mxu0 %v3404
        %3424 = vmatprep.subr.bf16.mxu0 0
        %3425 = vmatpush1.bf16.msra.mxu0 %v3405
        %3426 = vmatprep.subr.bf16.mxu0 0
        %3427 = vmatpush1.bf16.msra.mxu0 %v3406
        %3428 = vmatprep.subr.bf16.mxu0 0
        %3429 = vmatpush1.bf16.msra.mxu0 %v3407
        %3430 = vmatprep.subr.bf16.mxu0 0
        %3431 = vmatpush1.bf16.msra.mxu0 %v3408
        %3432 = vmatprep.subr.bf16.mxu0 0
        %3433 = vmatpush1.bf16.msra.mxu0 %v3409
        %3434 = vmatprep.subr.bf16.mxu0 0
        %3435 = vmatpush1.bf16.msra.mxu0 0
        %3436 = vmatprep.subr.bf16.mxu0 0
        %3437 = vmatpush1.bf16.msra.mxu0 0
        %3438 = vmatprep.subr.bf16.mxu0 0
        %3439 = vmatpush1.bf16.msra.mxu0 0
        %3440 = vmatprep.subr.bf16.mxu0 0
        %3441 = vmatpush1.bf16.msra.mxu0 0
        %3442 = vmatprep.subr.bf16.mxu0 0
        %3443 = vmatpush1.bf16.msra.mxu0 0
        %3444 = vmatprep.subr.bf16.mxu0 0
        %3445 = vmatpush1.bf16.msra.mxu0 0
        %3446 = vmatprep.subr.bf16.mxu0 0
        %3447 = vmatpush1.bf16.msra.mxu0 0
        %3448 = vmatprep.subr.bf16.mxu0 0
        %3449 = vmatpush1.bf16.msra.mxu0 0
        %3450 = vmatprep.mubr.bf16.mxu0 0
        %3451 = vmatmul.mubr.bf16.gmra.mrb[0].mxu0 %v3368
        %v3452 = vpop.f32.mrb[0].mxu0
        %v3453 = vadd.f32 0.0, %v3452
        %v3454 = vpop.f32.mrb[0].mxu0
        %v3455 = vpop.f32.mrb[0].mxu0
        %v3456 = vpop.f32.mrb[0].mxu0
        %3457 = vdwg.mxu0
        %v3458 = vadd.f32 %v3344, %v3453
        %s3459 = scalar_lea.vmem %s41, 128
        %v3460 = vld [vmem:[%s3459] sm:$0xf]
        %v3461 = vld [vmem:[%s3459 + $0x4] sm:$0xf]
        %v3462 = vld [vmem:[%s3459 + $0x8] sm:$0xf]
        %v3463 = vld [vmem:[%s3459 + $0xc] sm:$0xf]
        %v3464 = vld [vmem:[%s3459 + $0x10] sm:$0xf]
        %v3465 = vld [vmem:[%s3459 + $0x14] sm:$0xf]
        %v3466 = vld [vmem:[%s3459 + $0x18] sm:$0xf]
        %v3467 = vld [vmem:[%s3459 + $0x1c] sm:$0xf]
        %v3468 = vld [vmem:[%s3459 + $0x20] sm:$0xf]
        %v3469 = vld [vmem:[%s3459 + $0x24] sm:$0xf]
        %v3470 = vld [vmem:[%s3459 + $0x28] sm:$0xf]
        %v3471 = vld [vmem:[%s3459 + $0x2c] sm:$0xf]
        %v3472 = vld [vmem:[%s3459 + $0x30] sm:$0xf]
        %v3473 = vld [vmem:[%s3459 + $0x34] sm:$0xf]
        %v3474 = vld [vmem:[%s3459 + $0x38] sm:$0xf]
        %v3475 = vld [vmem:[%s3459 + $0x3c] sm:$0xf]
        %v3477 = vrot.slane %v3249, 1
        %v3495 = vunpack.c.l.b16 %v3460
        %v3496 = vunpack.c.l.b16 %v3461
        %v3497 = vunpack.c.l.b16 %v3462
        %v3498 = vunpack.c.l.b16 %v3463
        %v3499 = vunpack.c.l.b16 %v3464
        %v3500 = vunpack.c.l.b16 %v3465
        %v3501 = vunpack.c.l.b16 %v3466
        %v3502 = vunpack.c.l.b16 %v3467
        %v3503 = vunpack.c.l.b16 %v3468
        %v3504 = vunpack.c.l.b16 %v3469
        %v3505 = vunpack.c.l.b16 %v3470
        %v3506 = vunpack.c.l.b16 %v3471
        %v3507 = vunpack.c.l.b16 %v3472
        %v3508 = vunpack.c.l.b16 %v3473
        %v3509 = vunpack.c.l.b16 %v3474
        %v3510 = vunpack.c.l.b16 %v3475
        %v3511 = vpack.c.b16 %v3496, %v3495
        %v3512 = vpack.c.b16 %v3498, %v3497
        %v3513 = vpack.c.b16 %v3500, %v3499
        %v3514 = vpack.c.b16 %v3502, %v3501
        %v3515 = vpack.c.b16 %v3504, %v3503
        %v3516 = vpack.c.b16 %v3506, %v3505
        %v3517 = vpack.c.b16 %v3508, %v3507
        %v3518 = vpack.c.b16 %v3510, %v3509
        %3527 = vmatprep.subr.bf16.mxu0 0
        %3528 = vmatpush1.bf16.msra.mxu0 %v3511
        %3529 = vmatprep.subr.bf16.mxu0 0
        %3530 = vmatpush1.bf16.msra.mxu0 %v3512
        %3531 = vmatprep.subr.bf16.mxu0 0
        %3532 = vmatpush1.bf16.msra.mxu0 %v3513
        %3533 = vmatprep.subr.bf16.mxu0 0
        %3534 = vmatpush1.bf16.msra.mxu0 %v3514
        %3535 = vmatprep.subr.bf16.mxu0 0
        %3536 = vmatpush1.bf16.msra.mxu0 %v3515
        %3537 = vmatprep.subr.bf16.mxu0 0
        %3538 = vmatpush1.bf16.msra.mxu0 %v3516
        %3539 = vmatprep.subr.bf16.mxu0 0
        %3540 = vmatpush1.bf16.msra.mxu0 %v3517
        %3541 = vmatprep.subr.bf16.mxu0 0
        %3542 = vmatpush1.bf16.msra.mxu0 %v3518
        %3543 = vmatprep.subr.bf16.mxu0 0
        %3544 = vmatpush1.bf16.msra.mxu0 0
        %3545 = vmatprep.subr.bf16.mxu0 0
        %3546 = vmatpush1.bf16.msra.mxu0 0
        %3547 = vmatprep.subr.bf16.mxu0 0
        %3548 = vmatpush1.bf16.msra.mxu0 0
        %3549 = vmatprep.subr.bf16.mxu0 0
        %3550 = vmatpush1.bf16.msra.mxu0 0
        %3551 = vmatprep.subr.bf16.mxu0 0
        %3552 = vmatpush1.bf16.msra.mxu0 0
        %3553 = vmatprep.subr.bf16.mxu0 0
        %3554 = vmatpush1.bf16.msra.mxu0 0
        %3555 = vmatprep.subr.bf16.mxu0 0
        %3556 = vmatpush1.bf16.msra.mxu0 0
        %3557 = vmatprep.subr.bf16.mxu0 0
        %3558 = vmatpush1.bf16.msra.mxu0 0
        %3559 = vmatprep.mubr.bf16.mxu0 0
        %3560 = vmatmul.mubr.bf16.gmra.mrb[0].mxu0 %v3477
        %v3561 = vpop.f32.mrb[0].mxu0
        %v3562 = vadd.f32 0.0, %v3561
        %v3563 = vpop.f32.mrb[0].mxu0
        %v3564 = vpop.f32.mrb[0].mxu0
        %v3565 = vpop.f32.mrb[0].mxu0
        %3566 = vdwg.mxu0
        %v3567 = vadd.f32 %v3458, %v3562
        %v3568 = vld [vmem:[#allocation28] sm:$0xf]
        %v3569 = vld [vmem:[#allocation28 + $0x4] sm:$0xf]
        %v3570 = vld [vmem:[#allocation28 + $0x8] sm:$0xf]
        %v3571 = vld [vmem:[#allocation28 + $0xc] sm:$0xf]
        %v3572 = vld [vmem:[#allocation28 + $0x10] sm:$0xf]
        %v3573 = vld [vmem:[#allocation28 + $0x14] sm:$0xf]
        %v3574 = vld [vmem:[#allocation28 + $0x18] sm:$0xf]
        %v3575 = vld [vmem:[#allocation28 + $0x1c] sm:$0xf]
        %v3576 = vld [vmem:[#allocation28 + $0x20] sm:$0xf]
        %v3577 = vld [vmem:[#allocation28 + $0x24] sm:$0xf]
        %v3578 = vld [vmem:[#allocation28 + $0x28] sm:$0xf]
        %v3579 = vld [vmem:[#allocation28 + $0x2c] sm:$0xf]
        %v3580 = vld [vmem:[#allocation28 + $0x30] sm:$0xf]
        %v3581 = vld [vmem:[#allocation28 + $0x34] sm:$0xf]
        %v3582 = vld [vmem:[#allocation28 + $0x38] sm:$0xf]
        %v3583 = vld [vmem:[#allocation28 + $0x3c] sm:$0xf]
        %v3600 = vunpack.c.l.b16 %v3568
        %v3601 = vunpack.c.l.b16 %v3569
        %v3602 = vunpack.c.l.b16 %v3570
        %v3603 = vunpack.c.l.b16 %v3571
        %v3604 = vunpack.c.l.b16 %v3572
        %v3605 = vunpack.c.l.b16 %v3573
        %v3606 = vunpack.c.l.b16 %v3574
        %v3607 = vunpack.c.l.b16 %v3575
        %v3608 = vunpack.c.l.b16 %v3576
        %v3609 = vunpack.c.l.b16 %v3577
        %v3610 = vunpack.c.l.b16 %v3578
        %v3611 = vunpack.c.l.b16 %v3579
        %v3612 = vunpack.c.l.b16 %v3580
        %v3613 = vunpack.c.l.b16 %v3581
        %v3614 = vunpack.c.l.b16 %v3582
        %v3615 = vunpack.c.l.b16 %v3583
        %v3616 = vpack.c.b16 %v3601, %v3600
        %v3617 = vpack.c.b16 %v3603, %v3602
        %v3618 = vpack.c.b16 %v3605, %v3604
        %v3619 = vpack.c.b16 %v3607, %v3606
        %v3620 = vpack.c.b16 %v3609, %v3608
        %v3621 = vpack.c.b16 %v3611, %v3610
        %v3622 = vpack.c.b16 %v3613, %v3612
        %v3623 = vpack.c.b16 %v3615, %v3614
        %3632 = vmatprep.subr.bf16.mxu0 0
        %3633 = vmatpush1.bf16.msra.mxu0 %v3616
        %3634 = vmatprep.subr.bf16.mxu0 0
        %3635 = vmatpush1.bf16.msra.mxu0 %v3617
        %3636 = vmatprep.subr.bf16.mxu0 0
        %3637 = vmatpush1.bf16.msra.mxu0 %v3618
        %3638 = vmatprep.subr.bf16.mxu0 0
        %3639 = vmatpush1.bf16.msra.mxu0 %v3619
        %3640 = vmatprep.subr.bf16.mxu0 0
        %3641 = vmatpush1.bf16.msra.mxu0 %v3620
        %3642 = vmatprep.subr.bf16.mxu0 0
        %3643 = vmatpush1.bf16.msra.mxu0 %v3621
        %3644 = vmatprep.subr.bf16.mxu0 0
        %3645 = vmatpush1.bf16.msra.mxu0 %v3622
        %3646 = vmatprep.subr.bf16.mxu0 0
        %3647 = vmatpush1.bf16.msra.mxu0 %v3623
        %3648 = vmatprep.subr.bf16.mxu0 0
        %3649 = vmatpush1.bf16.msra.mxu0 0
        %3650 = vmatprep.subr.bf16.mxu0 0
        %3651 = vmatpush1.bf16.msra.mxu0 0
        %3652 = vmatprep.subr.bf16.mxu0 0
        %3653 = vmatpush1.bf16.msra.mxu0 0
        %3654 = vmatprep.subr.bf16.mxu0 0
        %3655 = vmatpush1.bf16.msra.mxu0 0
        %3656 = vmatprep.subr.bf16.mxu0 0
        %3657 = vmatpush1.bf16.msra.mxu0 0
        %3658 = vmatprep.subr.bf16.mxu0 0
        %3659 = vmatpush1.bf16.msra.mxu0 0
        %3660 = vmatprep.subr.bf16.mxu0 0
        %3661 = vmatpush1.bf16.msra.mxu0 0
        %3662 = vmatprep.subr.bf16.mxu0 0
        %3663 = vmatpush1.bf16.msra.mxu0 0
        %3664 = vmatprep.mubr.bf16.mxu0 0
        %3665 = vmatmul.mubr.bf16.gmra.mrb[0].mxu0 %v3477
        %v3666 = vpop.f32.mrb[0].mxu0
        %v3667 = vadd.f32 0.0, %v3666
        %v3668 = vpop.f32.mrb[0].mxu0
        %v3669 = vpop.f32.mrb[0].mxu0
        %v3670 = vpop.f32.mrb[0].mxu0
        %3671 = vdwg.mxu0
        %v3672 = vadd.f32 %v3567, %v3667
        %v3673 = vmax.f32 %v3672, 0.0
        %vm3674 = vcmask 1043456
        %v3675 = vsel %vm3674, %v3673, 0.0
        %3676 = vadd.xlane.f32.xlu0 %v3675
        %v3677 = vpop.xlane.xlu0 %3676
        %v3678 = vmul.f32 %v3677, %v2318
        %v3679 = vmul.f32 %v3673, %v3673
        %v3680 = vsel %vm3674, %v3679, 0.0
        %3681 = vadd.xlane.f32.xlu0 %v3680
        %v3682 = vpop.xlane.xlu0 %3681
        %v3683 = vmul.f32 %v3682, %v2318
        %v3684 = vsub.f32 %v3673, %v3678
        %v3685 = vmul.f32 %v3678, %v3678
        %v3686 = vsub.f32 %v3683, %v3685
        %v3687 = vadd.f32 %v3686, 1e-05
        %v3688 = vrsqrt.pop %v3687
        %v3689 = vmul.f32 %v3684, %v3688
        %v3690 = vld [vmem:[%s47] sm:$0x1]
        %v3692 = vlaneseq
        %v3693 = vshrl.u32 %v3692, 7
        %v3694 = vsub.s32 0, %v3693
        %v3695 = vrot.slane %v3690, %v3694
        %v3697 = vmul.f32 %v3689, %v3695
        %v3698 = vld [vmem:[%s49] sm:$0x1]
        %v3700 = vlaneseq
        %v3701 = vshrl.u32 %v3700, 7
        %v3702 = vsub.s32 0, %v3701
        %v3703 = vrot.slane %v3698, %v3702
        %v3705 = vadd.f32 %v3697, %v3703
        %v3706 = vld [vmem:[%s55] sm:$0x1]
        %v3707 = vld [vmem:[%s57] sm:$0x1]
        %v3708 = vld [vmem:[#allocation29] sm:$0xf]
        %v3709 = vld [vmem:[#allocation29 + $0x4] sm:$0xf]
        %v3710 = vld [vmem:[#allocation29 + $0x8] sm:$0xf]
        %v3711 = vld [vmem:[#allocation29 + $0xc] sm:$0xf]
        %v3712 = vld [vmem:[#allocation29 + $0x10] sm:$0xf]
        %v3713 = vld [vmem:[#allocation29 + $0x14] sm:$0xf]
        %v3714 = vld [vmem:[#allocation29 + $0x18] sm:$0xf]
        %v3715 = vld [vmem:[#allocation29 + $0x1c] sm:$0xf]
        %v3716 = vld [vmem:[#allocation29 + $0x20] sm:$0xf]
        %v3717 = vld [vmem:[#allocation29 + $0x24] sm:$0xf]
        %v3718 = vld [vmem:[#allocation29 + $0x28] sm:$0xf]
        %v3719 = vld [vmem:[#allocation29 + $0x2c] sm:$0xf]
        %v3720 = vld [vmem:[#allocation29 + $0x30] sm:$0xf]
        %v3721 = vld [vmem:[#allocation29 + $0x34] sm:$0xf]
        %v3722 = vld [vmem:[#allocation29 + $0x38] sm:$0xf]
        %v3723 = vld [vmem:[#allocation29 + $0x3c] sm:$0xf]
        %v3724 = vpack.c.bf16 %v3705, %v3705
        %v3741 = vunpack.c.l.b16 %v3708
        %v3742 = vunpack.c.l.b16 %v3709
        %v3743 = vunpack.c.l.b16 %v3710
        %v3744 = vunpack.c.l.b16 %v3711
        %v3745 = vunpack.c.l.b16 %v3712
        %v3746 = vunpack.c.l.b16 %v3713
        %v3747 = vunpack.c.l.b16 %v3714
        %v3748 = vunpack.c.l.b16 %v3715
        %v3749 = vunpack.c.l.b16 %v3716
        %v3750 = vunpack.c.l.b16 %v3717
        %v3751 = vunpack.c.l.b16 %v3718
        %v3752 = vunpack.c.l.b16 %v3719
        %v3753 = vunpack.c.l.b16 %v3720
        %v3754 = vunpack.c.l.b16 %v3721
        %v3755 = vunpack.c.l.b16 %v3722
        %v3756 = vunpack.c.l.b16 %v3723
        %v3757 = vpack.c.b16 %v3742, %v3741
        %v3758 = vpack.c.b16 %v3744, %v3743
        %v3759 = vpack.c.b16 %v3746, %v3745
        %v3760 = vpack.c.b16 %v3748, %v3747
        %v3761 = vpack.c.b16 %v3750, %v3749
        %v3762 = vpack.c.b16 %v3752, %v3751
        %v3763 = vpack.c.b16 %v3754, %v3753
        %v3764 = vpack.c.b16 %v3756, %v3755
        %3773 = vmatprep.subr.bf16.mxu0 0
        %3774 = vmatpush1.bf16.msra.mxu0 %v3757
        %3775 = vmatprep.subr.bf16.mxu0 0
        %3776 = vmatpush1.bf16.msra.mxu0 %v3758
        %3777 = vmatprep.subr.bf16.mxu0 0
        %3778 = vmatpush1.bf16.msra.mxu0 %v3759
        %3779 = vmatprep.subr.bf16.mxu0 0
        %3780 = vmatpush1.bf16.msra.mxu0 %v3760
        %3781 = vmatprep.subr.bf16.mxu0 0
        %3782 = vmatpush1.bf16.msra.mxu0 %v3761
        %3783 = vmatprep.subr.bf16.mxu0 0
        %3784 = vmatpush1.bf16.msra.mxu0 %v3762
        %3785 = vmatprep.subr.bf16.mxu0 0
        %3786 = vmatpush1.bf16.msra.mxu0 %v3763
        %3787 = vmatprep.subr.bf16.mxu0 0
        %3788 = vmatpush1.bf16.msra.mxu0 %v3764
        %3789 = vmatprep.subr.bf16.mxu0 0
        %3790 = vmatpush1.bf16.msra.mxu0 0
        %3791 = vmatprep.subr.bf16.mxu0 0
        %3792 = vmatpush1.bf16.msra.mxu0 0
        %3793 = vmatprep.subr.bf16.mxu0 0
        %3794 = vmatpush1.bf16.msra.mxu0 0
        %3795 = vmatprep.subr.bf16.mxu0 0
        %3796 = vmatpush1.bf16.msra.mxu0 0
        %3797 = vmatprep.subr.bf16.mxu0 0
        %3798 = vmatpush1.bf16.msra.mxu0 0
        %3799 = vmatprep.subr.bf16.mxu0 0
        %3800 = vmatpush1.bf16.msra.mxu0 0
        %3801 = vmatprep.subr.bf16.mxu0 0
        %3802 = vmatpush1.bf16.msra.mxu0 0
        %3803 = vmatprep.subr.bf16.mxu0 0
        %3804 = vmatpush1.bf16.msra.mxu0 0
        %3805 = vmatprep.mubr.bf16.mxu0 0
        %3806 = vmatmul.mubr.bf16.gmra.mrb[0].mxu0 %v3724
        %v3807 = vpop.f32.mrb[0].mxu0
        %v3808 = vadd.f32 0.0, %v3807
        %v3809 = vpop.f32.mrb[0].mxu0
        %v3810 = vpop.f32.mrb[0].mxu0
        %v3811 = vpop.f32.mrb[0].mxu0
        %3812 = vdwg.mxu0
        %v3813 = vadd.f32 %v3706, %v3808
        %v3814 = vld [vmem:[#allocation31] sm:$0xf]
        %v3815 = vld [vmem:[#allocation31 + $0x4] sm:$0xf]
        %v3816 = vld [vmem:[#allocation31 + $0x8] sm:$0xf]
        %v3817 = vld [vmem:[#allocation31 + $0xc] sm:$0xf]
        %v3818 = vld [vmem:[#allocation31 + $0x10] sm:$0xf]
        %v3819 = vld [vmem:[#allocation31 + $0x14] sm:$0xf]
        %v3820 = vld [vmem:[#allocation31 + $0x18] sm:$0xf]
        %v3821 = vld [vmem:[#allocation31 + $0x1c] sm:$0xf]
        %v3822 = vld [vmem:[#allocation31 + $0x20] sm:$0xf]
        %v3823 = vld [vmem:[#allocation31 + $0x24] sm:$0xf]
        %v3824 = vld [vmem:[#allocation31 + $0x28] sm:$0xf]
        %v3825 = vld [vmem:[#allocation31 + $0x2c] sm:$0xf]
        %v3826 = vld [vmem:[#allocation31 + $0x30] sm:$0xf]
        %v3827 = vld [vmem:[#allocation31 + $0x34] sm:$0xf]
        %v3828 = vld [vmem:[#allocation31 + $0x38] sm:$0xf]
        %v3829 = vld [vmem:[#allocation31 + $0x3c] sm:$0xf]
        %v3846 = vunpack.c.l.b16 %v3814
        %v3847 = vunpack.c.l.b16 %v3815
        %v3848 = vunpack.c.l.b16 %v3816
        %v3849 = vunpack.c.l.b16 %v3817
        %v3850 = vunpack.c.l.b16 %v3818
        %v3851 = vunpack.c.l.b16 %v3819
        %v3852 = vunpack.c.l.b16 %v3820
        %v3853 = vunpack.c.l.b16 %v3821
        %v3854 = vunpack.c.l.b16 %v3822
        %v3855 = vunpack.c.l.b16 %v3823
        %v3856 = vunpack.c.l.b16 %v3824
        %v3857 = vunpack.c.l.b16 %v3825
        %v3858 = vunpack.c.l.b16 %v3826
        %v3859 = vunpack.c.l.b16 %v3827
        %v3860 = vunpack.c.l.b16 %v3828
        %v3861 = vunpack.c.l.b16 %v3829
        %v3862 = vpack.c.b16 %v3847, %v3846
        %v3863 = vpack.c.b16 %v3849, %v3848
        %v3864 = vpack.c.b16 %v3851, %v3850
        %v3865 = vpack.c.b16 %v3853, %v3852
        %v3866 = vpack.c.b16 %v3855, %v3854
        %v3867 = vpack.c.b16 %v3857, %v3856
        %v3868 = vpack.c.b16 %v3859, %v3858
        %v3869 = vpack.c.b16 %v3861, %v3860
        %3878 = vmatprep.subr.bf16.mxu0 0
        %3879 = vmatpush1.bf16.msra.mxu0 %v3862
        %3880 = vmatprep.subr.bf16.mxu0 0
        %3881 = vmatpush1.bf16.msra.mxu0 %v3863
        %3882 = vmatprep.subr.bf16.mxu0 0
        %3883 = vmatpush1.bf16.msra.mxu0 %v3864
        %3884 = vmatprep.subr.bf16.mxu0 0
        %3885 = vmatpush1.bf16.msra.mxu0 %v3865
        %3886 = vmatprep.subr.bf16.mxu0 0
        %3887 = vmatpush1.bf16.msra.mxu0 %v3866
        %3888 = vmatprep.subr.bf16.mxu0 0
        %3889 = vmatpush1.bf16.msra.mxu0 %v3867
        %3890 = vmatprep.subr.bf16.mxu0 0
        %3891 = vmatpush1.bf16.msra.mxu0 %v3868
        %3892 = vmatprep.subr.bf16.mxu0 0
        %3893 = vmatpush1.bf16.msra.mxu0 %v3869
        %3894 = vmatprep.subr.bf16.mxu0 0
        %3895 = vmatpush1.bf16.msra.mxu0 0
        %3896 = vmatprep.subr.bf16.mxu0 0
        %3897 = vmatpush1.bf16.msra.mxu0 0
        %3898 = vmatprep.subr.bf16.mxu0 0
        %3899 = vmatpush1.bf16.msra.mxu0 0
        %3900 = vmatprep.subr.bf16.mxu0 0
        %3901 = vmatpush1.bf16.msra.mxu0 0
        %3902 = vmatprep.subr.bf16.mxu0 0
        %3903 = vmatpush1.bf16.msra.mxu0 0
        %3904 = vmatprep.subr.bf16.mxu0 0
        %3905 = vmatpush1.bf16.msra.mxu0 0
        %3906 = vmatprep.subr.bf16.mxu0 0
        %3907 = vmatpush1.bf16.msra.mxu0 0
        %3908 = vmatprep.subr.bf16.mxu0 0
        %3909 = vmatpush1.bf16.msra.mxu0 0
        %3910 = vmatprep.mubr.bf16.mxu0 0
        %3911 = vmatmul.mubr.bf16.gmra.mrb[0].mxu0 %v3724
        %v3912 = vpop.f32.mrb[0].mxu0
        %v3913 = vadd.f32 0.0, %v3912
        %v3914 = vpop.f32.mrb[0].mxu0
        %v3915 = vpop.f32.mrb[0].mxu0
        %v3916 = vpop.f32.mrb[0].mxu0
        %3917 = vdwg.mxu0
        %v3918 = vadd.f32 %v3707, %v3913
        %s3919 = scalar_lea.vmem [#allocation29], 64
        %v3920 = vld [vmem:[%s3919] sm:$0xf]
        %v3921 = vld [vmem:[%s3919 + $0x4] sm:$0xf]
        %v3922 = vld [vmem:[%s3919 + $0x8] sm:$0xf]
        %v3923 = vld [vmem:[%s3919 + $0xc] sm:$0xf]
        %v3924 = vld [vmem:[%s3919 + $0x10] sm:$0xf]
        %v3925 = vld [vmem:[%s3919 + $0x14] sm:$0xf]
        %v3926 = vld [vmem:[%s3919 + $0x18] sm:$0xf]
        %v3927 = vld [vmem:[%s3919 + $0x1c] sm:$0xf]
        %v3928 = vld [vmem:[%s3919 + $0x20] sm:$0xf]
        %v3929 = vld [vmem:[%s3919 + $0x24] sm:$0xf]
        %v3930 = vld [vmem:[%s3919 + $0x28] sm:$0xf]
        %v3931 = vld [vmem:[%s3919 + $0x2c] sm:$0xf]
        %v3932 = vld [vmem:[%s3919 + $0x30] sm:$0xf]
        %v3933 = vld [vmem:[%s3919 + $0x34] sm:$0xf]
        %v3934 = vld [vmem:[%s3919 + $0x38] sm:$0xf]
        %v3935 = vld [vmem:[%s3919 + $0x3c] sm:$0xf]
        %v3937 = vshrl.u32 %v3724, 16
        %v3956 = vunpack.c.l.b16 %v3920
        %v3957 = vunpack.c.l.b16 %v3921
        %v3958 = vunpack.c.l.b16 %v3922
        %v3959 = vunpack.c.l.b16 %v3923
        %v3960 = vunpack.c.l.b16 %v3924
        %v3961 = vunpack.c.l.b16 %v3925
        %v3962 = vunpack.c.l.b16 %v3926
        %v3963 = vunpack.c.l.b16 %v3927
        %v3964 = vunpack.c.l.b16 %v3928
        %v3965 = vunpack.c.l.b16 %v3929
        %v3966 = vunpack.c.l.b16 %v3930
        %v3967 = vunpack.c.l.b16 %v3931
        %v3968 = vunpack.c.l.b16 %v3932
        %v3969 = vunpack.c.l.b16 %v3933
        %v3970 = vunpack.c.l.b16 %v3934
        %v3971 = vunpack.c.l.b16 %v3935
        %v3972 = vpack.c.b16 %v3957, %v3956
        %v3973 = vpack.c.b16 %v3959, %v3958
        %v3974 = vpack.c.b16 %v3961, %v3960
        %v3975 = vpack.c.b16 %v3963, %v3962
        %v3976 = vpack.c.b16 %v3965, %v3964
        %v3977 = vpack.c.b16 %v3967, %v3966
        %v3978 = vpack.c.b16 %v3969, %v3968
        %v3979 = vpack.c.b16 %v3971, %v3970
        %3988 = vmatprep.subr.bf16.mxu0 0
        %3989 = vmatpush1.bf16.msra.mxu0 %v3972
        %3990 = vmatprep.subr.bf16.mxu0 0
        %3991 = vmatpush1.bf16.msra.mxu0 %v3973
        %3992 = vmatprep.subr.bf16.mxu0 0
        %3993 = vmatpush1.bf16.msra.mxu0 %v3974
        %3994 = vmatprep.subr.bf16.mxu0 0
        %3995 = vmatpush1.bf16.msra.mxu0 %v3975
        %3996 = vmatprep.subr.bf16.mxu0 0
        %3997 = vmatpush1.bf16.msra.mxu0 %v3976
        %3998 = vmatprep.subr.bf16.mxu0 0
        %3999 = vmatpush1.bf16.msra.mxu0 %v3977
        %4000 = vmatprep.subr.bf16.mxu0 0
        %4001 = vmatpush1.bf16.msra.mxu0 %v3978
        %4002 = vmatprep.subr.bf16.mxu0 0
        %4003 = vmatpush1.bf16.msra.mxu0 %v3979
        %4004 = vmatprep.subr.bf16.mxu0 0
        %4005 = vmatpush1.bf16.msra.mxu0 0
        %4006 = vmatprep.subr.bf16.mxu0 0
        %4007 = vmatpush1.bf16.msra.mxu0 0
        %4008 = vmatprep.subr.bf16.mxu0 0
        %4009 = vmatpush1.bf16.msra.mxu0 0
        %4010 = vmatprep.subr.bf16.mxu0 0
        %4011 = vmatpush1.bf16.msra.mxu0 0
        %4012 = vmatprep.subr.bf16.mxu0 0
        %4013 = vmatpush1.bf16.msra.mxu0 0
        %4014 = vmatprep.subr.bf16.mxu0 0
        %4015 = vmatpush1.bf16.msra.mxu0 0
        %4016 = vmatprep.subr.bf16.mxu0 0
        %4017 = vmatpush1.bf16.msra.mxu0 0
        %4018 = vmatprep.subr.bf16.mxu0 0
        %4019 = vmatpush1.bf16.msra.mxu0 0
        %4020 = vmatprep.mubr.bf16.mxu0 0
        %4021 = vmatmul.mubr.bf16.gmra.mrb[0].mxu0 %v3937
        %v4022 = vpop.f32.mrb[0].mxu0
        %v4023 = vadd.f32 0.0, %v4022
        %v4024 = vpop.f32.mrb[0].mxu0
        %v4025 = vpop.f32.mrb[0].mxu0
        %v4026 = vpop.f32.mrb[0].mxu0
        %4027 = vdwg.mxu0
        %v4028 = vadd.f32 %v3813, %v4023
        %s4029 = scalar_lea.vmem [#allocation31], 64
        %v4030 = vld [vmem:[%s4029] sm:$0xf]
        %v4031 = vld [vmem:[%s4029 + $0x4] sm:$0xf]
        %v4032 = vld [vmem:[%s4029 + $0x8] sm:$0xf]
        %v4033 = vld [vmem:[%s4029 + $0xc] sm:$0xf]
        %v4034 = vld [vmem:[%s4029 + $0x10] sm:$0xf]
        %v4035 = vld [vmem:[%s4029 + $0x14] sm:$0xf]
        %v4036 = vld [vmem:[%s4029 + $0x18] sm:$0xf]
        %v4037 = vld [vmem:[%s4029 + $0x1c] sm:$0xf]
        %v4038 = vld [vmem:[%s4029 + $0x20] sm:$0xf]
        %v4039 = vld [vmem:[%s4029 + $0x24] sm:$0xf]
        %v4040 = vld [vmem:[%s4029 + $0x28] sm:$0xf]
        %v4041 = vld [vmem:[%s4029 + $0x2c] sm:$0xf]
        %v4042 = vld [vmem:[%s4029 + $0x30] sm:$0xf]
        %v4043 = vld [vmem:[%s4029 + $0x34] sm:$0xf]
        %v4044 = vld [vmem:[%s4029 + $0x38] sm:$0xf]
        %v4045 = vld [vmem:[%s4029 + $0x3c] sm:$0xf]
        %v4062 = vunpack.c.l.b16 %v4030
        %v4063 = vunpack.c.l.b16 %v4031
        %v4064 = vunpack.c.l.b16 %v4032
        %v4065 = vunpack.c.l.b16 %v4033
        %v4066 = vunpack.c.l.b16 %v4034
        %v4067 = vunpack.c.l.b16 %v4035
        %v4068 = vunpack.c.l.b16 %v4036
        %v4069 = vunpack.c.l.b16 %v4037
        %v4070 = vunpack.c.l.b16 %v4038
        %v4071 = vunpack.c.l.b16 %v4039
        %v4072 = vunpack.c.l.b16 %v4040
        %v4073 = vunpack.c.l.b16 %v4041
        %v4074 = vunpack.c.l.b16 %v4042
        %v4075 = vunpack.c.l.b16 %v4043
        %v4076 = vunpack.c.l.b16 %v4044
        %v4077 = vunpack.c.l.b16 %v4045
        %v4078 = vpack.c.b16 %v4063, %v4062
        %v4079 = vpack.c.b16 %v4065, %v4064
        %v4080 = vpack.c.b16 %v4067, %v4066
        %v4081 = vpack.c.b16 %v4069, %v4068
        %v4082 = vpack.c.b16 %v4071, %v4070
        %v4083 = vpack.c.b16 %v4073, %v4072
        %v4084 = vpack.c.b16 %v4075, %v4074
        %v4085 = vpack.c.b16 %v4077, %v4076
        %4094 = vmatprep.subr.bf16.mxu0 0
        %4095 = vmatpush1.bf16.msra.mxu0 %v4078
        %4096 = vmatprep.subr.bf16.mxu0 0
        %4097 = vmatpush1.bf16.msra.mxu0 %v4079
        %4098 = vmatprep.subr.bf16.mxu0 0
        %4099 = vmatpush1.bf16.msra.mxu0 %v4080
        %4100 = vmatprep.subr.bf16.mxu0 0
        %4101 = vmatpush1.bf16.msra.mxu0 %v4081
        %4102 = vmatprep.subr.bf16.mxu0 0
        %4103 = vmatpush1.bf16.msra.mxu0 %v4082
        %4104 = vmatprep.subr.bf16.mxu0 0
        %4105 = vmatpush1.bf16.msra.mxu0 %v4083
        %4106 = vmatprep.subr.bf16.mxu0 0
        %4107 = vmatpush1.bf16.msra.mxu0 %v4084
        %4108 = vmatprep.subr.bf16.mxu0 0
        %4109 = vmatpush1.bf16.msra.mxu0 %v4085
        %4110 = vmatprep.subr.bf16.mxu0 0
        %4111 = vmatpush1.bf16.msra.mxu0 0
        %4112 = vmatprep.subr.bf16.mxu0 0
        %4113 = vmatpush1.bf16.msra.mxu0 0
        %4114 = vmatprep.subr.bf16.mxu0 0
        %4115 = vmatpush1.bf16.msra.mxu0 0
        %4116 = vmatprep.subr.bf16.mxu0 0
        %4117 = vmatpush1.bf16.msra.mxu0 0
        %4118 = vmatprep.subr.bf16.mxu0 0
        %4119 = vmatpush1.bf16.msra.mxu0 0
        %4120 = vmatprep.subr.bf16.mxu0 0
        %4121 = vmatpush1.bf16.msra.mxu0 0
        %4122 = vmatprep.subr.bf16.mxu0 0
        %4123 = vmatpush1.bf16.msra.mxu0 0
        %4124 = vmatprep.subr.bf16.mxu0 0
        %4125 = vmatpush1.bf16.msra.mxu0 0
        %4126 = vmatprep.mubr.bf16.mxu0 0
        %4127 = vmatmul.mubr.bf16.gmra.mrb[0].mxu0 %v3937
        %v4128 = vpop.f32.mrb[0].mxu0
        %v4129 = vadd.f32 0.0, %v4128
        %v4130 = vpop.f32.mrb[0].mxu0
        %v4131 = vpop.f32.mrb[0].mxu0
        %v4132 = vpop.f32.mrb[0].mxu0
        %4133 = vdwg.mxu0
        %v4134 = vadd.f32 %v3918, %v4129
        %s4135 = scalar_lea.vmem [#allocation29], 128
        %v4136 = vld [vmem:[%s4135] sm:$0xf]
        %v4137 = vld [vmem:[%s4135 + $0x4] sm:$0xf]
        %v4138 = vld [vmem:[%s4135 + $0x8] sm:$0xf]
        %v4139 = vld [vmem:[%s4135 + $0xc] sm:$0xf]
        %v4140 = vld [vmem:[%s4135 + $0x10] sm:$0xf]
        %v4141 = vld [vmem:[%s4135 + $0x14] sm:$0xf]
        %v4142 = vld [vmem:[%s4135 + $0x18] sm:$0xf]
        %v4143 = vld [vmem:[%s4135 + $0x1c] sm:$0xf]
        %v4144 = vld [vmem:[%s4135 + $0x20] sm:$0xf]
        %v4145 = vld [vmem:[%s4135 + $0x24] sm:$0xf]
        %v4146 = vld [vmem:[%s4135 + $0x28] sm:$0xf]
        %v4147 = vld [vmem:[%s4135 + $0x2c] sm:$0xf]
        %v4148 = vld [vmem:[%s4135 + $0x30] sm:$0xf]
        %v4149 = vld [vmem:[%s4135 + $0x34] sm:$0xf]
        %v4150 = vld [vmem:[%s4135 + $0x38] sm:$0xf]
        %v4151 = vld [vmem:[%s4135 + $0x3c] sm:$0xf]
        %v4153 = vrot.slane %v3724, 1
        %v4171 = vunpack.c.l.b16 %v4136
        %v4172 = vunpack.c.l.b16 %v4137
        %v4173 = vunpack.c.l.b16 %v4138
        %v4174 = vunpack.c.l.b16 %v4139
        %v4175 = vunpack.c.l.b16 %v4140
        %v4176 = vunpack.c.l.b16 %v4141
        %v4177 = vunpack.c.l.b16 %v4142
        %v4178 = vunpack.c.l.b16 %v4143
        %v4179 = vunpack.c.l.b16 %v4144
        %v4180 = vunpack.c.l.b16 %v4145
        %v4181 = vunpack.c.l.b16 %v4146
        %v4182 = vunpack.c.l.b16 %v4147
        %v4183 = vunpack.c.l.b16 %v4148
        %v4184 = vunpack.c.l.b16 %v4149
        %v4185 = vunpack.c.l.b16 %v4150
        %v4186 = vunpack.c.l.b16 %v4151
        %v4187 = vpack.c.b16 %v4172, %v4171
        %v4188 = vpack.c.b16 %v4174, %v4173
        %v4189 = vpack.c.b16 %v4176, %v4175
        %v4190 = vpack.c.b16 %v4178, %v4177
        %v4191 = vpack.c.b16 %v4180, %v4179
        %v4192 = vpack.c.b16 %v4182, %v4181
        %v4193 = vpack.c.b16 %v4184, %v4183
        %v4194 = vpack.c.b16 %v4186, %v4185
        %4203 = vmatprep.subr.bf16.mxu0 0
        %4204 = vmatpush1.bf16.msra.mxu0 %v4187
        %4205 = vmatprep.subr.bf16.mxu0 0
        %4206 = vmatpush1.bf16.msra.mxu0 %v4188
        %4207 = vmatprep.subr.bf16.mxu0 0
        %4208 = vmatpush1.bf16.msra.mxu0 %v4189
        %4209 = vmatprep.subr.bf16.mxu0 0
        %4210 = vmatpush1.bf16.msra.mxu0 %v4190
        %4211 = vmatprep.subr.bf16.mxu0 0
        %4212 = vmatpush1.bf16.msra.mxu0 %v4191
        %4213 = vmatprep.subr.bf16.mxu0 0
        %4214 = vmatpush1.bf16.msra.mxu0 %v4192
        %4215 = vmatprep.subr.bf16.mxu0 0
        %4216 = vmatpush1.bf16.msra.mxu0 %v4193
        %4217 = vmatprep.subr.bf16.mxu0 0
        %4218 = vmatpush1.bf16.msra.mxu0 %v4194
        %4219 = vmatprep.subr.bf16.mxu0 0
        %4220 = vmatpush1.bf16.msra.mxu0 0
        %4221 = vmatprep.subr.bf16.mxu0 0
        %4222 = vmatpush1.bf16.msra.mxu0 0
        %4223 = vmatprep.subr.bf16.mxu0 0
        %4224 = vmatpush1.bf16.msra.mxu0 0
        %4225 = vmatprep.subr.bf16.mxu0 0
        %4226 = vmatpush1.bf16.msra.mxu0 0
        %4227 = vmatprep.subr.bf16.mxu0 0
        %4228 = vmatpush1.bf16.msra.mxu0 0
        %4229 = vmatprep.subr.bf16.mxu0 0
        %4230 = vmatpush1.bf16.msra.mxu0 0
        %4231 = vmatprep.subr.bf16.mxu0 0
        %4232 = vmatpush1.bf16.msra.mxu0 0
        %4233 = vmatprep.subr.bf16.mxu0 0
        %4234 = vmatpush1.bf16.msra.mxu0 0
        %4235 = vmatprep.mubr.bf16.mxu0 0
        %4236 = vmatmul.mubr.bf16.gmra.mrb[0].mxu0 %v4153
        %v4237 = vpop.f32.mrb[0].mxu0
        %v4238 = vadd.f32 0.0, %v4237
        %v4239 = vpop.f32.mrb[0].mxu0
        %v4240 = vpop.f32.mrb[0].mxu0
        %v4241 = vpop.f32.mrb[0].mxu0
        %4242 = vdwg.mxu0
        %v4243 = vadd.f32 %v4028, %v4238
        %s4244 = scalar_lea.vmem [#allocation31], 128
        %v4245 = vld [vmem:[%s4244] sm:$0xf]
        %v4246 = vld [vmem:[%s4244 + $0x4] sm:$0xf]
        %v4247 = vld [vmem:[%s4244 + $0x8] sm:$0xf]
        %v4248 = vld [vmem:[%s4244 + $0xc] sm:$0xf]
        %v4249 = vld [vmem:[%s4244 + $0x10] sm:$0xf]
        %v4250 = vld [vmem:[%s4244 + $0x14] sm:$0xf]
        %v4251 = vld [vmem:[%s4244 + $0x18] sm:$0xf]
        %v4252 = vld [vmem:[%s4244 + $0x1c] sm:$0xf]
        %v4253 = vld [vmem:[%s4244 + $0x20] sm:$0xf]
        %v4254 = vld [vmem:[%s4244 + $0x24] sm:$0xf]
        %v4255 = vld [vmem:[%s4244 + $0x28] sm:$0xf]
        %v4256 = vld [vmem:[%s4244 + $0x2c] sm:$0xf]
        %v4257 = vld [vmem:[%s4244 + $0x30] sm:$0xf]
        %v4258 = vld [vmem:[%s4244 + $0x34] sm:$0xf]
        %v4259 = vld [vmem:[%s4244 + $0x38] sm:$0xf]
        %v4260 = vld [vmem:[%s4244 + $0x3c] sm:$0xf]
        %v4277 = vunpack.c.l.b16 %v4245
        %v4278 = vunpack.c.l.b16 %v4246
        %v4279 = vunpack.c.l.b16 %v4247
        %v4280 = vunpack.c.l.b16 %v4248
        %v4281 = vunpack.c.l.b16 %v4249
        %v4282 = vunpack.c.l.b16 %v4250
        %v4283 = vunpack.c.l.b16 %v4251
        %v4284 = vunpack.c.l.b16 %v4252
        %v4285 = vunpack.c.l.b16 %v4253
        %v4286 = vunpack.c.l.b16 %v4254
        %v4287 = vunpack.c.l.b16 %v4255
        %v4288 = vunpack.c.l.b16 %v4256
        %v4289 = vunpack.c.l.b16 %v4257
        %v4290 = vunpack.c.l.b16 %v4258
        %v4291 = vunpack.c.l.b16 %v4259
        %v4292 = vunpack.c.l.b16 %v4260
        %v4293 = vpack.c.b16 %v4278, %v4277
        %v4294 = vpack.c.b16 %v4280, %v4279
        %v4295 = vpack.c.b16 %v4282, %v4281
        %v4296 = vpack.c.b16 %v4284, %v4283
        %v4297 = vpack.c.b16 %v4286, %v4285
        %v4298 = vpack.c.b16 %v4288, %v4287
        %v4299 = vpack.c.b16 %v4290, %v4289
        %v4300 = vpack.c.b16 %v4292, %v4291
        %4309 = vmatprep.subr.bf16.mxu0 0
        %4310 = vmatpush1.bf16.msra.mxu0 %v4293
        %4311 = vmatprep.subr.bf16.mxu0 0
        %4312 = vmatpush1.bf16.msra.mxu0 %v4294
        %4313 = vmatprep.subr.bf16.mxu0 0
        %4314 = vmatpush1.bf16.msra.mxu0 %v4295
        %4315 = vmatprep.subr.bf16.mxu0 0
        %4316 = vmatpush1.bf16.msra.mxu0 %v4296
        %4317 = vmatprep.subr.bf16.mxu0 0
        %4318 = vmatpush1.bf16.msra.mxu0 %v4297
        %4319 = vmatprep.subr.bf16.mxu0 0
        %4320 = vmatpush1.bf16.msra.mxu0 %v4298
        %4321 = vmatprep.subr.bf16.mxu0 0
        %4322 = vmatpush1.bf16.msra.mxu0 %v4299
        %4323 = vmatprep.subr.bf16.mxu0 0
        %4324 = vmatpush1.bf16.msra.mxu0 %v4300
        %4325 = vmatprep.subr.bf16.mxu0 0
        %4326 = vmatpush1.bf16.msra.mxu0 0
        %4327 = vmatprep.subr.bf16.mxu0 0
        %4328 = vmatpush1.bf16.msra.mxu0 0
        %4329 = vmatprep.subr.bf16.mxu0 0
        %4330 = vmatpush1.bf16.msra.mxu0 0
        %4331 = vmatprep.subr.bf16.mxu0 0
        %4332 = vmatpush1.bf16.msra.mxu0 0
        %4333 = vmatprep.subr.bf16.mxu0 0
        %4334 = vmatpush1.bf16.msra.mxu0 0
        %4335 = vmatprep.subr.bf16.mxu0 0
        %4336 = vmatpush1.bf16.msra.mxu0 0
        %4337 = vmatprep.subr.bf16.mxu0 0
        %4338 = vmatpush1.bf16.msra.mxu0 0
        %4339 = vmatprep.subr.bf16.mxu0 0
        %4340 = vmatpush1.bf16.msra.mxu0 0
        %4341 = vmatprep.mubr.bf16.mxu0 0
        %4342 = vmatmul.mubr.bf16.gmra.mrb[0].mxu0 %v4153
        %v4343 = vpop.f32.mrb[0].mxu0
        %v4344 = vadd.f32 0.0, %v4343
        %v4345 = vpop.f32.mrb[0].mxu0
        %v4346 = vpop.f32.mrb[0].mxu0
        %v4347 = vpop.f32.mrb[0].mxu0
        %4348 = vdwg.mxu0
        %v4349 = vadd.f32 %v4134, %v4344
        %s4350 = scalar_lea.vmem [#allocation29], 192
        %v4351 = vld [vmem:[%s4350] sm:$0xf]
        %v4352 = vld [vmem:[%s4350 + $0x4] sm:$0xf]
        %v4353 = vld [vmem:[%s4350 + $0x8] sm:$0xf]
        %v4354 = vld [vmem:[%s4350 + $0xc] sm:$0xf]
        %v4355 = vld [vmem:[%s4350 + $0x10] sm:$0xf]
        %v4356 = vld [vmem:[%s4350 + $0x14] sm:$0xf]
        %v4357 = vld [vmem:[%s4350 + $0x18] sm:$0xf]
        %v4358 = vld [vmem:[%s4350 + $0x1c] sm:$0xf]
        %v4359 = vld [vmem:[%s4350 + $0x20] sm:$0xf]
        %v4360 = vld [vmem:[%s4350 + $0x24] sm:$0xf]
        %v4361 = vld [vmem:[%s4350 + $0x28] sm:$0xf]
        %v4362 = vld [vmem:[%s4350 + $0x2c] sm:$0xf]
        %v4363 = vld [vmem:[%s4350 + $0x30] sm:$0xf]
        %v4364 = vld [vmem:[%s4350 + $0x34] sm:$0xf]
        %v4365 = vld [vmem:[%s4350 + $0x38] sm:$0xf]
        %v4366 = vld [vmem:[%s4350 + $0x3c] sm:$0xf]
        %v4367 = vrot.slane %v3937, 1
        %v4385 = vunpack.c.l.b16 %v4351
        %v4386 = vunpack.c.l.b16 %v4352
        %v4387 = vunpack.c.l.b16 %v4353
        %v4388 = vunpack.c.l.b16 %v4354
        %v4389 = vunpack.c.l.b16 %v4355
        %v4390 = vunpack.c.l.b16 %v4356
        %v4391 = vunpack.c.l.b16 %v4357
        %v4392 = vunpack.c.l.b16 %v4358
        %v4393 = vunpack.c.l.b16 %v4359
        %v4394 = vunpack.c.l.b16 %v4360
        %v4395 = vunpack.c.l.b16 %v4361
        %v4396 = vunpack.c.l.b16 %v4362
        %v4397 = vunpack.c.l.b16 %v4363
        %v4398 = vunpack.c.l.b16 %v4364
        %v4399 = vunpack.c.l.b16 %v4365
        %v4400 = vunpack.c.l.b16 %v4366
        %v4401 = vpack.c.b16 %v4386, %v4385
        %v4402 = vpack.c.b16 %v4388, %v4387
        %v4403 = vpack.c.b16 %v4390, %v4389
        %v4404 = vpack.c.b16 %v4392, %v4391
        %v4405 = vpack.c.b16 %v4394, %v4393
        %v4406 = vpack.c.b16 %v4396, %v4395
        %v4407 = vpack.c.b16 %v4398, %v4397
        %v4408 = vpack.c.b16 %v4400, %v4399
        %4417 = vmatprep.subr.bf16.mxu0 0
        %4418 = vmatpush1.bf16.msra.mxu0 %v4401
        %4419 = vmatprep.subr.bf16.mxu0 0
        %4420 = vmatpush1.bf16.msra.mxu0 %v4402
        %4421 = vmatprep.subr.bf16.mxu0 0
        %4422 = vmatpush1.bf16.msra.mxu0 %v4403
        %4423 = vmatprep.subr.bf16.mxu0 0
        %4424 = vmatpush1.bf16.msra.mxu0 %v4404
        %4425 = vmatprep.subr.bf16.mxu0 0
        %4426 = vmatpush1.bf16.msra.mxu0 %v4405
        %4427 = vmatprep.subr.bf16.mxu0 0
        %4428 = vmatpush1.bf16.msra.mxu0 %v4406
        %4429 = vmatprep.subr.bf16.mxu0 0
        %4430 = vmatpush1.bf16.msra.mxu0 %v4407
        %4431 = vmatprep.subr.bf16.mxu0 0
        %4432 = vmatpush1.bf16.msra.mxu0 %v4408
        %4433 = vmatprep.subr.bf16.mxu0 0
        %4434 = vmatpush1.bf16.msra.mxu0 0
        %4435 = vmatprep.subr.bf16.mxu0 0
        %4436 = vmatpush1.bf16.msra.mxu0 0
        %4437 = vmatprep.subr.bf16.mxu0 0
        %4438 = vmatpush1.bf16.msra.mxu0 0
        %4439 = vmatprep.subr.bf16.mxu0 0
        %4440 = vmatpush1.bf16.msra.mxu0 0
        %4441 = vmatprep.subr.bf16.mxu0 0
        %4442 = vmatpush1.bf16.msra.mxu0 0
        %4443 = vmatprep.subr.bf16.mxu0 0
        %4444 = vmatpush1.bf16.msra.mxu0 0
        %4445 = vmatprep.subr.bf16.mxu0 0
        %4446 = vmatpush1.bf16.msra.mxu0 0
        %4447 = vmatprep.subr.bf16.mxu0 0
        %4448 = vmatpush1.bf16.msra.mxu0 0
        %4449 = vmatprep.mubr.bf16.mxu0 0
        %4450 = vmatmul.mubr.bf16.gmra.mrb[0].mxu0 %v4367
        %v4451 = vpop.f32.mrb[0].mxu0
        %v4452 = vadd.f32 0.0, %v4451
        %v4453 = vpop.f32.mrb[0].mxu0
        %v4454 = vpop.f32.mrb[0].mxu0
        %v4455 = vpop.f32.mrb[0].mxu0
        %4456 = vdwg.mxu0
        %v4457 = vadd.f32 %v4243, %v4452
        %s4458 = scalar_lea.vmem [#allocation31], 192
        %v4459 = vld [vmem:[%s4458] sm:$0xf]
        %v4460 = vld [vmem:[%s4458 + $0x4] sm:$0xf]
        %v4461 = vld [vmem:[%s4458 + $0x8] sm:$0xf]
        %v4462 = vld [vmem:[%s4458 + $0xc] sm:$0xf]
        %v4463 = vld [vmem:[%s4458 + $0x10] sm:$0xf]
        %v4464 = vld [vmem:[%s4458 + $0x14] sm:$0xf]
        %v4465 = vld [vmem:[%s4458 + $0x18] sm:$0xf]
        %v4466 = vld [vmem:[%s4458 + $0x1c] sm:$0xf]
        %v4467 = vld [vmem:[%s4458 + $0x20] sm:$0xf]
        %v4468 = vld [vmem:[%s4458 + $0x24] sm:$0xf]
        %v4469 = vld [vmem:[%s4458 + $0x28] sm:$0xf]
        %v4470 = vld [vmem:[%s4458 + $0x2c] sm:$0xf]
        %v4471 = vld [vmem:[%s4458 + $0x30] sm:$0xf]
        %v4472 = vld [vmem:[%s4458 + $0x34] sm:$0xf]
        %v4473 = vld [vmem:[%s4458 + $0x38] sm:$0xf]
        %v4474 = vld [vmem:[%s4458 + $0x3c] sm:$0xf]
        %v4491 = vunpack.c.l.b16 %v4459
        %v4492 = vunpack.c.l.b16 %v4460
        %v4493 = vunpack.c.l.b16 %v4461
        %v4494 = vunpack.c.l.b16 %v4462
        %v4495 = vunpack.c.l.b16 %v4463
        %v4496 = vunpack.c.l.b16 %v4464
        %v4497 = vunpack.c.l.b16 %v4465
        %v4498 = vunpack.c.l.b16 %v4466
        %v4499 = vunpack.c.l.b16 %v4467
        %v4500 = vunpack.c.l.b16 %v4468
        %v4501 = vunpack.c.l.b16 %v4469
        %v4502 = vunpack.c.l.b16 %v4470
        %v4503 = vunpack.c.l.b16 %v4471
        %v4504 = vunpack.c.l.b16 %v4472
        %v4505 = vunpack.c.l.b16 %v4473
        %v4506 = vunpack.c.l.b16 %v4474
        %v4507 = vpack.c.b16 %v4492, %v4491
        %v4508 = vpack.c.b16 %v4494, %v4493
        %v4509 = vpack.c.b16 %v4496, %v4495
        %v4510 = vpack.c.b16 %v4498, %v4497
        %v4511 = vpack.c.b16 %v4500, %v4499
        %v4512 = vpack.c.b16 %v4502, %v4501
        %v4513 = vpack.c.b16 %v4504, %v4503
        %v4514 = vpack.c.b16 %v4506, %v4505
        %4523 = vmatprep.subr.bf16.mxu0 0
        %4524 = vmatpush1.bf16.msra.mxu0 %v4507
        %4525 = vmatprep.subr.bf16.mxu0 0
        %4526 = vmatpush1.bf16.msra.mxu0 %v4508
        %4527 = vmatprep.subr.bf16.mxu0 0
        %4528 = vmatpush1.bf16.msra.mxu0 %v4509
        %4529 = vmatprep.subr.bf16.mxu0 0
        %4530 = vmatpush1.bf16.msra.mxu0 %v4510
        %4531 = vmatprep.subr.bf16.mxu0 0
        %4532 = vmatpush1.bf16.msra.mxu0 %v4511
        %4533 = vmatprep.subr.bf16.mxu0 0
        %4534 = vmatpush1.bf16.msra.mxu0 %v4512
        %4535 = vmatprep.subr.bf16.mxu0 0
        %4536 = vmatpush1.bf16.msra.mxu0 %v4513
        %4537 = vmatprep.subr.bf16.mxu0 0
        %4538 = vmatpush1.bf16.msra.mxu0 %v4514
        %4539 = vmatprep.subr.bf16.mxu0 0
        %4540 = vmatpush1.bf16.msra.mxu0 0
        %4541 = vmatprep.subr.bf16.mxu0 0
        %4542 = vmatpush1.bf16.msra.mxu0 0
        %4543 = vmatprep.subr.bf16.mxu0 0
        %4544 = vmatpush1.bf16.msra.mxu0 0
        %4545 = vmatprep.subr.bf16.mxu0 0
        %4546 = vmatpush1.bf16.msra.mxu0 0
        %4547 = vmatprep.subr.bf16.mxu0 0
        %4548 = vmatpush1.bf16.msra.mxu0 0
        %4549 = vmatprep.subr.bf16.mxu0 0
        %4550 = vmatpush1.bf16.msra.mxu0 0
        %4551 = vmatprep.subr.bf16.mxu0 0
        %4552 = vmatpush1.bf16.msra.mxu0 0
        %4553 = vmatprep.subr.bf16.mxu0 0
        %4554 = vmatpush1.bf16.msra.mxu0 0
        %4555 = vmatprep.mubr.bf16.mxu0 0
        %4556 = vmatmul.mubr.bf16.gmra.mrb[0].mxu0 %v4367
        %v4557 = vpop.f32.mrb[0].mxu0
        %v4558 = vadd.f32 0.0, %v4557
        %v4559 = vpop.f32.mrb[0].mxu0
        %v4560 = vpop.f32.mrb[0].mxu0
        %v4561 = vpop.f32.mrb[0].mxu0
        %4562 = vdwg.mxu0
        %v4563 = vadd.f32 %v4349, %v4558
        %v4566 = vunpack.c.l.s4 1966171168
        %v4567 = vunpack.c.0.s8 %v4566
        %v4568 = vlaneseq
        %v4569 = vshrl.u32 %v4568, 7
        %v4570 = vsub.s32 %v4567, %v4569
        %v4571 = vrot.slane %v3705, %v4570
        %v4572 = vcombine.high %v4571, %v4571
        %v4574 = vunpack.c.l.s4 1966171168
        %v4575 = vunpack.c.0.s8 %v4574
        %v4576 = vlaneseq
        %v4577 = vshrl.u32 %v4576, 7
        %v4578 = vsub.s32 %v4575, %v4577
        %v4579 = vrot.slane %v4572, %v4578
        %v4580 = vcombine.high %v4579, %v4579
        %v4582 = vadd.f32 %v4457, %v4580
        %v4583 = vxor.u32 %v4563, 2147483648
        %v4584 = vmul.f32 %v4583, 1.442695
        %v4585 = vpow.pop %v4584
        %v4586 = vadd.f32 %v4585, 1.0
        %v4587 = vrcp.pop %v4586
        %v4588 = vmul.f32 1.0, %v4587
        %v4589 = vmul.f32 %v4582, %v4588
        %vm4590 = vcmask 1040384
        %v4591 = vsel %vm4590, %v4589, 0.0
        %4592 = vadd.xlane.f32.xlu0 %v4591
        %v4593 = vpop.xlane.xlu0 %4592
        %v4594 = vmul.f32 %v4593, %v2318
        %v4595 = vmul.f32 %v4589, %v4589
        %v4596 = vsel %vm4590, %v4595, 0.0
        %4597 = vadd.xlane.f32.xlu0 %v4596
        %v4598 = vpop.xlane.xlu0 %4597
        %v4599 = vmul.f32 %v4598, %v2318
        %v4600 = vsub.f32 %v4589, %v4594
        %v4601 = vmul.f32 %v4594, %v4594
        %v4602 = vsub.f32 %v4599, %v4601
        %v4603 = vadd.f32 %v4602, 1e-05
        %v4604 = vrsqrt.pop %v4603
        %v4605 = vmul.f32 %v4600, %v4604
        %v4606 = vld [vmem:[%s59] sm:$0x1]
        %v4607 = vmul.f32 %v4605, %v4606
        %v4608 = vld [vmem:[%s61] sm:$0x1]
        %v4609 = vadd.f32 %v4607, %v4608
        %v4610 = vld [vmem:[#allocation32] sm:$0xf]
        %v4611 = vld [vmem:[#allocation32 + $0x4] sm:$0xf]
        %v4612 = vld [vmem:[#allocation32 + $0x8] sm:$0xf]
        %v4613 = vld [vmem:[#allocation32 + $0xc] sm:$0xf]
        %v4614 = vld [vmem:[#allocation32 + $0x10] sm:$0xf]
        %v4615 = vld [vmem:[#allocation32 + $0x14] sm:$0xf]
        %v4616 = vld [vmem:[#allocation32 + $0x18] sm:$0xf]
        %v4617 = vld [vmem:[#allocation32 + $0x1c] sm:$0xf]
        %v4618 = vld [vmem:[#allocation32 + $0x20] sm:$0xf]
        %v4619 = vld [vmem:[#allocation32 + $0x24] sm:$0xf]
        %v4620 = vld [vmem:[#allocation32 + $0x28] sm:$0xf]
        %v4621 = vld [vmem:[#allocation32 + $0x2c] sm:$0xf]
        %v4622 = vld [vmem:[#allocation32 + $0x30] sm:$0xf]
        %v4623 = vld [vmem:[#allocation32 + $0x34] sm:$0xf]
        %v4624 = vld [vmem:[#allocation32 + $0x38] sm:$0xf]
        %v4625 = vld [vmem:[#allocation32 + $0x3c] sm:$0xf]
        %v4626 = vpack.c.bf16 %v4609, %v4609
        %v4627 = vld [vmem:[%s65] sm:$0x1]
        %v4644 = vunpack.c.l.b16 %v4610
        %v4645 = vunpack.c.l.b16 %v4611
        %v4646 = vunpack.c.l.b16 %v4612
        %v4647 = vunpack.c.l.b16 %v4613
        %v4648 = vunpack.c.l.b16 %v4614
        %v4649 = vunpack.c.l.b16 %v4615
        %v4650 = vunpack.c.l.b16 %v4616
        %v4651 = vunpack.c.l.b16 %v4617
        %v4652 = vunpack.c.l.b16 %v4618
        %v4653 = vunpack.c.l.b16 %v4619
        %v4654 = vunpack.c.l.b16 %v4620
        %v4655 = vunpack.c.l.b16 %v4621
        %v4656 = vunpack.c.l.b16 %v4622
        %v4657 = vunpack.c.l.b16 %v4623
        %v4658 = vunpack.c.l.b16 %v4624
        %v4659 = vunpack.c.l.b16 %v4625
        %v4660 = vpack.c.b16 %v4645, %v4644
        %v4661 = vpack.c.b16 %v4647, %v4646
        %v4662 = vpack.c.b16 %v4649, %v4648
        %v4663 = vpack.c.b16 %v4651, %v4650
        %v4664 = vpack.c.b16 %v4653, %v4652
        %v4665 = vpack.c.b16 %v4655, %v4654
        %v4666 = vpack.c.b16 %v4657, %v4656
        %v4667 = vpack.c.b16 %v4659, %v4658
        %4676 = vmatprep.subr.bf16.mxu0 0
        %4677 = vmatpush1.bf16.msra.mxu0 %v4660
        %4678 = vmatprep.subr.bf16.mxu0 0
        %4679 = vmatpush1.bf16.msra.mxu0 %v4661
        %4680 = vmatprep.subr.bf16.mxu0 0
        %4681 = vmatpush1.bf16.msra.mxu0 %v4662
        %4682 = vmatprep.subr.bf16.mxu0 0
        %4683 = vmatpush1.bf16.msra.mxu0 %v4663
        %4684 = vmatprep.subr.bf16.mxu0 0
        %4685 = vmatpush1.bf16.msra.mxu0 %v4664
        %4686 = vmatprep.subr.bf16.mxu0 0
        %4687 = vmatpush1.bf16.msra.mxu0 %v4665
        %4688 = vmatprep.subr.bf16.mxu0 0
        %4689 = vmatpush1.bf16.msra.mxu0 %v4666
        %4690 = vmatprep.subr.bf16.mxu0 0
        %4691 = vmatpush1.bf16.msra.mxu0 %v4667
        %4692 = vmatprep.subr.bf16.mxu0 0
        %4693 = vmatpush1.bf16.msra.mxu0 0
        %4694 = vmatprep.subr.bf16.mxu0 0
        %4695 = vmatpush1.bf16.msra.mxu0 0
        %4696 = vmatprep.subr.bf16.mxu0 0
        %4697 = vmatpush1.bf16.msra.mxu0 0
        %4698 = vmatprep.subr.bf16.mxu0 0
        %4699 = vmatpush1.bf16.msra.mxu0 0
        %4700 = vmatprep.subr.bf16.mxu0 0
        %4701 = vmatpush1.bf16.msra.mxu0 0
        %4702 = vmatprep.subr.bf16.mxu0 0
        %4703 = vmatpush1.bf16.msra.mxu0 0
        %4704 = vmatprep.subr.bf16.mxu0 0
        %4705 = vmatpush1.bf16.msra.mxu0 0
        %4706 = vmatprep.subr.bf16.mxu0 0
        %4707 = vmatpush1.bf16.msra.mxu0 0
        %4708 = vmatprep.mubr.bf16.mxu0 0
        %4709 = vmatmul.mubr.bf16.gmra.mrb[0].mxu0 %v4626
        %v4710 = vpop.f32.mrb[0].mxu0
        %v4711 = vadd.f32 %v4627, %v4710
        %v4712 = vpop.f32.mrb[0].mxu0
        %v4713 = vpop.f32.mrb[0].mxu0
        %v4714 = vpop.f32.mrb[0].mxu0
        %4715 = vdwg.mxu0
        %v4716 = vadd.f32 %v4711, %v4609
        %v4717 = vxor.u32 %v4716, 2147483648
        %v4718 = vmul.f32 %v4717, 1.442695
        %v4719 = vpow.pop %v4718
        %v4720 = vadd.f32 %v4719, 1.0
        %v4721 = vrcp.pop %v4720
        %v4722 = vmul.f32 1.0, %v4721
        %v4723 = vld [vmem:[%s67] sm:$0xf]
        %v4724 = vld [vmem:[%s67 + $0x4] sm:$0xf]
        %v4725 = vld [vmem:[%s67 + $0x8] sm:$0xf]
        %v4726 = vld [vmem:[%s67 + $0xc] sm:$0xf]
        %v4727 = vld [vmem:[%s67 + $0x10] sm:$0xf]
        %v4728 = vld [vmem:[%s67 + $0x14] sm:$0xf]
        %v4729 = vld [vmem:[%s67 + $0x18] sm:$0xf]
        %v4730 = vld [vmem:[%s67 + $0x1c] sm:$0xf]
        %v4731 = vld [vmem:[%s67 + $0x20] sm:$0xf]
        %v4732 = vld [vmem:[%s67 + $0x24] sm:$0xf]
        %v4733 = vld [vmem:[%s67 + $0x28] sm:$0xf]
        %v4734 = vld [vmem:[%s67 + $0x2c] sm:$0xf]
        %v4735 = vld [vmem:[%s67 + $0x30] sm:$0xf]
        %v4736 = vld [vmem:[%s67 + $0x34] sm:$0xf]
        %v4737 = vld [vmem:[%s67 + $0x38] sm:$0xf]
        %v4738 = vld [vmem:[%s67 + $0x3c] sm:$0xf]
        %v4739 = vpack.c.bf16 %v4722, %v4722
        %v4740 = vld [vmem:[%s69] sm:$0x1]
        %v4757 = vunpack.c.l.b16 %v4723
        %v4758 = vunpack.c.l.b16 %v4724
        %v4759 = vunpack.c.l.b16 %v4725
        %v4760 = vunpack.c.l.b16 %v4726
        %v4761 = vunpack.c.l.b16 %v4727
        %v4762 = vunpack.c.l.b16 %v4728
        %v4763 = vunpack.c.l.b16 %v4729
        %v4764 = vunpack.c.l.b16 %v4730
        %v4765 = vunpack.c.l.b16 %v4731
        %v4766 = vunpack.c.l.b16 %v4732
        %v4767 = vunpack.c.l.b16 %v4733
        %v4768 = vunpack.c.l.b16 %v4734
        %v4769 = vunpack.c.l.b16 %v4735
        %v4770 = vunpack.c.l.b16 %v4736
        %v4771 = vunpack.c.l.b16 %v4737
        %v4772 = vunpack.c.l.b16 %v4738
        %v4773 = vpack.c.b16 %v4758, %v4757
        %v4774 = vpack.c.b16 %v4760, %v4759
        %v4775 = vpack.c.b16 %v4762, %v4761
        %v4776 = vpack.c.b16 %v4764, %v4763
        %v4777 = vpack.c.b16 %v4766, %v4765
        %v4778 = vpack.c.b16 %v4768, %v4767
        %v4779 = vpack.c.b16 %v4770, %v4769
        %v4780 = vpack.c.b16 %v4772, %v4771
        %4789 = vmatprep.subr.bf16.mxu0 0
        %4790 = vmatpush1.bf16.msra.mxu0 %v4773
        %4791 = vmatprep.subr.bf16.mxu0 0
        %4792 = vmatpush1.bf16.msra.mxu0 %v4774
        %4793 = vmatprep.subr.bf16.mxu0 0
        %4794 = vmatpush1.bf16.msra.mxu0 %v4775
        %4795 = vmatprep.subr.bf16.mxu0 0
        %4796 = vmatpush1.bf16.msra.mxu0 %v4776
        %4797 = vmatprep.subr.bf16.mxu0 0
        %4798 = vmatpush1.bf16.msra.mxu0 %v4777
        %4799 = vmatprep.subr.bf16.mxu0 0
        %4800 = vmatpush1.bf16.msra.mxu0 %v4778
        %4801 = vmatprep.subr.bf16.mxu0 0
        %4802 = vmatpush1.bf16.msra.mxu0 %v4779
        %4803 = vmatprep.subr.bf16.mxu0 0
        %4804 = vmatpush1.bf16.msra.mxu0 %v4780
        %4805 = vmatprep.subr.bf16.mxu0 0
        %4806 = vmatpush1.bf16.msra.mxu0 0
        %4807 = vmatprep.subr.bf16.mxu0 0
        %4808 = vmatpush1.bf16.msra.mxu0 0
        %4809 = vmatprep.subr.bf16.mxu0 0
        %4810 = vmatpush1.bf16.msra.mxu0 0
        %4811 = vmatprep.subr.bf16.mxu0 0
        %4812 = vmatpush1.bf16.msra.mxu0 0
        %4813 = vmatprep.subr.bf16.mxu0 0
        %4814 = vmatpush1.bf16.msra.mxu0 0
        %4815 = vmatprep.subr.bf16.mxu0 0
        %4816 = vmatpush1.bf16.msra.mxu0 0
        %4817 = vmatprep.subr.bf16.mxu0 0
        %4818 = vmatpush1.bf16.msra.mxu0 0
        %4819 = vmatprep.subr.bf16.mxu0 0
        %4820 = vmatpush1.bf16.msra.mxu0 0
        %4821 = vmatprep.mubr.bf16.mxu0 0
        %4822 = vmatmul.mubr.bf16.gmra.mrb[0].mxu0 %v4739
        %v4823 = vpop.f32.mrb[0].mxu0
        %v4824 = vadd.f32 %v4740, %v4823
        %v4825 = vpop.f32.mrb[0].mxu0
        %v4826 = vpop.f32.mrb[0].mxu0
        %v4827 = vpop.f32.mrb[0].mxu0
        %4828 = vdwg.mxu0
        %vm4829 = vcmask 122880
        %4830 = vst.msk [vmem:[%s1339] sm:$0x1] %vm4829, %v4824
        %s4831 = sand.u32 %s844, 1
        %s4832 = scalar_lea.sflag [#allocation4], %s4831
        %s4833 = sand.u32 %s844, 1
        %s4834 = scalar_lea.vmem [#allocation34], %s4833
        // Predicated region
        $region241: #{tpu_custom_call.1} parent=159 // pred_check
          %p4835 = pneg %p854
        $region242: #{tpu_custom_call.1} parent=159 // pred_check_branch
          %4837 = sbr.rel (%p4835) target = $region244
        $region243: #{tpu_custom_call.1} parent=159 // pred_region
          %s4839 = ssub.s32 16, 16
          %4840 = vsyncadd %s4832, %s4839
          %s4841 = smul.addr %s96, 16
          %s4842 = scalar_lea.hbm %s71, %s4841
          %s4844 = sshll.u32 %s4834, 4
          %s4845 = int_to_ptr.vmem [resolvable:$true] %s4844
          %4847 = dma.vmem_to_hbm [thread:$0]  %s4845, 16, %s4842, %s4832
        $region244: #{tpu_custom_call.1} parent=159 // pred_fallthru
          _
      $region160: #{tpu_custom_call.1} parent=5 // pred_fallthru
        _
      %p4848 = scmp.le.s32.totalorder 2, %s91
      // Predicated region
      $region245: #{tpu_custom_call.1} parent=5 // pred_check
        %p4849 = pneg %p4848
      $region246: #{tpu_custom_call.1} parent=5 // pred_check_branch
        %4851 = sbr.rel (%p4849) target = $region248
      $region247: #{tpu_custom_call.1} parent=5 // pred_region
        %s4852 = ssub.s32 %s91, 2
        // Predicated region
        $region249: #{tpu_custom_call.1} parent=247 // pred_check
          %p4853 = pneg %p860
        $region250: #{tpu_custom_call.1} parent=247 // pred_check_branch
          %4855 = sbr.rel (%p4853) target = $region252
        $region251: #{tpu_custom_call.1} parent=247 // pred_region
          %s4856 = sand.u32 %s845, 1
          %s4857 = scalar_lea.sflag [#allocation4], %s4856
          %s4858 = sand.u32 %s845, 1
          %s4859 = scalar_lea.vmem [#allocation34], %s4858
          %4860 = dma.done %s4857, 16
        $region252: #{tpu_custom_call.1} parent=247 // pred_fallthru
          _
      $region248: #{tpu_custom_call.1} parent=5 // pred_fallthru
        _
    $region6: #{tpu_custom_call.1} parent=1 // loop_footer
      %s95 = sadd.s32 1, %s91
    $region7: #{tpu_custom_call.1} parent=1 // loop_footer_branch
      %90 = sbr.rel target = $region3
    $region8: #{tpu_custom_call.1} parent=1 // loop_exit
      _
    %4861 = vsyncpa [#allocation3], 1
    %s4862 = scalar_lea.sflag [#allocation3], 1
    %4863 = vsyncpa %s4862, 1
    %4864 = vsyncpa [#allocation6], 1
    %4865 = vsyncpa [#allocation9], 1
    %4866 = vsyncpa [#allocation12], 1
    %4867 = vsyncpa [#allocation15], 1
    %4868 = vsyncpa [#allocation18], 1
    %4869 = vsyncpa [#allocation21], 1
    %4870 = vsyncpa [#allocation24], 1
    %4871 = vsyncpa [#allocation27], 1
    %4872 = vsyncpa [#allocation30], 1
    %4873 = vsyncpa [#allocation33], 1
    %4874 = vsyncpa [#allocation4], 1
    %s4875 = scalar_lea.sflag [#allocation4], 1
    %4876 = vsyncpa %s4875, 1

</llo_original>
